<compile_context>
chip_gen: v6e
topology: v6e:2x2x1
jax: 0.10.0
libtpu: 0.0.40
codegen_flags: <defaults>
</compile_context>

<pallas_src>
import functools

import jax
import jax.numpy as jnp
from jax.experimental import pallas as pl
from jax.experimental.pallas import tpu as pltpu

# --- scaled-down ViT hyper-parameters (structure of vit_small, small sizes) ---
PATCH = 14          # patch_size=14 (as in the module)
IN_CHANS = 3
EMBED = 32          # embed dim (384 in real vit_small)
HEADS = 2           # num heads (6 in real vit_small)
DEPTH = 2           # transformer depth (12 in real vit_small)
MLP_HID = 4 * EMBED # mlp_ratio = 4  (= 128, already lane-aligned)
EPS = 1e-6          # LayerNorm eps used by DINOv2

IMG_H = IMG_W = 28                                   # small input; multiples of 14
NUM_PATCHES = (IMG_H // PATCH) * (IMG_W // PATCH)    # 4
SEQ = 1 + NUM_PATCHES                                # cls token + patches

# --- padded (kernel-internal) dims: lane axis is a multiple of 128 ----------
DP = 128                                 # padded embed dim / MLP hidden
HD = EMBED // HEADS                      # per-head dim (16)
Q_OFF = 0                                # packed QKV lane layout:
V_OFF = HEADS * HD                       #   [Q h0|Q h1|V h0|V h1|K h0|K h1|0..]
K_OFF = 2 * HEADS * HD                   # K at lane 64 => roll by 64 aligns K to Q
K_REAL = IN_CHANS * PATCH * PATCH        # 588
KP = 640                                 # padded im2col K (>= K_REAL + P + 1)
assert KP >= K_REAL + NUM_PATCHES + 1
assert MLP_HID == DP
assert K_OFF == DP // 2                  # makes the roll convention-independent

# per-layer rows of the consolidated vector table
(V_LN1G, V_LN1B, V_BQKV, V_BPROJ, V_LS1,
 V_LN2G, V_LN2B, V_FC1B, V_FC2B, V_LS2) = range(10)
VROWS_PER_LAYER = 10


# ----------------------------------------------------------------------------
# Fused Pallas kernel: full forward_features for all N frames in one shot
# ----------------------------------------------------------------------------
def _fused_vit_kernel(patches_ref, pw_ref, w_ref, vec_ref, pre_ref, norm_ref,
                      *, n_elems, n_patch, depth, heads):
    dp = pre_ref.shape[-1]
    ns_pad = pre_ref.shape[0]
    np_rows = n_elems * n_patch
    hd = EMBED // heads

    lane = jax.lax.broadcasted_iota(jnp.int32, (1, dp), 1)
    emb_mask = (lane < EMBED).astype(jnp.float32)
    q_mask = [((lane >= Q_OFF + h * hd) & (lane < Q_OFF + (h + 1) * hd)
               ).astype(jnp.float32) for h in range(heads)]
    v_mask = [((lane >= V_OFF + h * hd) & (lane < V_OFF + (h + 1) * hd)
               ).astype(jnp.float32) for h in range(heads)]
    inv_d = jnp.float32(1.0 / EMBED)

    def vrow(i):                                   # one [1, 128] row of the table
        return vec_ref[pl.ds(i, 1), :]

    def layernorm(v, g, b):
        mu = jnp.sum(v, axis=-1, keepdims=True) * inv_d       # padded cols are 0
        d = (v - mu) * emb_mask
        var = jnp.sum(d * d, axis=-1, keepdims=True) * inv_d
        return d * jax.lax.rsqrt(var + EPS) * g + b           # g, b zero-padded

    # block-diagonal additive attention mask built from index arithmetic
    # (patch rows frame-major first, cls rows next, dummy pad rows last).
    ri = jax.lax.broadcasted_iota(jnp.int32, (ns_pad, ns_pad), 0)
    ci = jax.lax.broadcasted_iota(jnp.int32, (ns_pad, ns_pad), 1)
    same = None
    for f in range(n_elems):
        in_r = ((ri >= f * n_patch) & (ri < (f + 1) * n_patch)) | (ri == np_rows + f)
        in_c = ((ci >= f * n_patch) & (ci < (f + 1) * n_patch)) | (ci == np_rows + f)
        m = in_r & in_c
        same = m if same is None else (same | m)
    amask = jnp.where(same, jnp.float32(0.0), jnp.float32(-1e9))

    # PatchEmbed as ONE matmul: conv bias, patch pos-embed and the cls+pos[0]
    # rows are all folded into indicator columns of the im2col input, and the
    # dummy pad rows are all-zero -> x is fully assembled here.
    x = jnp.dot(patches_ref[...], pw_ref[...], preferred_element_type=jnp.float32)

    # --- transformer blocks (static unroll: depth=2, heads=2) ---------------
    for l in range(depth):
        base = VROWS_PER_LAYER * l
        xn = layernorm(x, vrow(base + V_LN1G), vrow(base + V_LN1B))

        # fused QKV: one matmul, lanes [Q h0|Q h1|V h0|V h1|K h0|K h1|zeros]
        qkv = jnp.dot(xn, w_ref[4 * l + 0],
                      preferred_element_type=jnp.float32) + vrow(base + V_BQKV)
        # rotate the K block onto the Q lanes (64-lane roll of a 128-lane axis)
        k_ali = pltpu.roll(qkv, shift=dp - K_OFF, axis=1)

        ctx = None
        for h in range(heads):
            s = jax.lax.dot_general(qkv * q_mask[h], k_ali,
                                    (((1,), (1,)), ((), ())),
                                    preferred_element_type=jnp.float32) + amask
            s = s - jnp.max(s, axis=-1, keepdims=True)
            e = jnp.exp(s)
            p = e * pl.reciprocal(jnp.sum(e, axis=-1, keepdims=True), approx=True)
            c = jnp.dot(p, qkv * v_mask[h], preferred_element_type=jnp.float32)
            ctx = c if ctx is None else ctx + c     # heads live in disjoint lanes
        # single packed projection matmul over both heads' ctx lane slots
        attn = jnp.dot(ctx, w_ref[4 * l + 1], preferred_element_type=jnp.float32)
        x = x + vrow(base + V_LS1) * (attn + vrow(base + V_BPROJ))

        xn2 = layernorm(x, vrow(base + V_LN2G), vrow(base + V_LN2B))
        hmid = jnp.dot(xn2, w_ref[4 * l + 2],
                       preferred_element_type=jnp.float32) + vrow(base + V_FC1B)
        hmid = 0.5 * hmid * (1.0 + jax.lax.erf(hmid * jnp.float32(0.7071067811865476)))
        mlp = jnp.dot(hmid, w_ref[4 * l + 3],
                      preferred_element_type=jnp.float32) + vrow(base + V_FC2B)
        x = x + vrow(base + V_LS2) * mlp

    gbase = VROWS_PER_LAYER * depth
    pre_ref[...] = x                                            # x_prenorm
    norm_ref[...] = layernorm(x, vrow(gbase), vrow(gbase + 1))  # final LayerNorm


# ----------------------------------------------------------------------------
# Parameters (deterministic synthetic init, PyTorch-style shapes)
# ----------------------------------------------------------------------------
def init_params(key):
    def nrm(k, shape, scale=0.02):
        return scale * jax.random.normal(k, shape, dtype=jnp.float32)

    keys = jax.random.split(key, 4 + DEPTH)
    params = {
        "patch_w": nrm(keys[0], (EMBED, IN_CHANS, PATCH, PATCH)),   # Conv2d weight
        "patch_b": nrm(keys[1], (EMBED,)),                          # Conv2d bias
        "cls_token": nrm(keys[2], (1, 1, EMBED)),
        "pos_embed": nrm(keys[3], (1, SEQ, EMBED)),
        "norm_w": jnp.ones((EMBED,), jnp.float32),
        "norm_b": jnp.zeros((EMBED,), jnp.float32),
        "blocks": [],
    }
    for d in range(DEPTH):
        bk = jax.random.split(keys[4 + d], 8)
        params["blocks"].append({
            "norm1_w": jnp.ones((EMBED,), jnp.float32),
            "norm1_b": jnp.zeros((EMBED,), jnp.float32),
            "qkv_w": nrm(bk[0], (3 * EMBED, EMBED)),     # nn.Linear [out, in]
            "qkv_b": nrm(bk[1], (3 * EMBED,)),
            "proj_w": nrm(bk[2], (EMBED, EMBED)),
            "proj_b": nrm(bk[3], (EMBED,)),
            "ls1_gamma": jnp.ones((EMBED,), jnp.float32),  # LayerScale gamma
            "norm2_w": jnp.ones((EMBED,), jnp.float32),
            "norm2_b": jnp.zeros((EMBED,), jnp.float32),
            "fc1_w": nrm(bk[4], (MLP_HID, EMBED)),
            "fc1_b": nrm(bk[5], (MLP_HID,)),
            "fc2_w": nrm(bk[6], (EMBED, MLP_HID)),
            "fc2_b": nrm(bk[7], (EMBED,)),
            "ls2_gamma": jnp.ones((EMBED,), jnp.float32),
        })
    return params


def prepare_kernel_params(params):
    """One-time weight prep: transpose, lane-pack per head, scale-fold,
    zero-pad, and consolidate into 3 kernel operands (plus the activations)."""
    D, hd = EMBED, EMBED // HEADS
    scale = float(hd) ** -0.5
    blocks = params["blocks"]

    def pad2(a, rows, cols):
        return jnp.pad(a, ((0, rows - a.shape[0]), (0, cols - a.shape[1])))

    def row(v):
        return jnp.pad(v, (0, DP - v.shape[0]))

    # patch-embed weight; conv bias + per-position pos-embed go in indicator
    # columns K_REAL..K_REAL+P-1, the cls_token+pos[0] row in column K_REAL+P.
    pw = params["patch_w"].reshape(D, K_REAL).T                    # [588, 32]
    pos = params["pos_embed"][0]                                   # [SEQ, 32]
    aug = jnp.stack([params["patch_b"] + pos[1 + p] for p in range(NUM_PATCHES)]
                    + [params["cls_token"][0, 0] + pos[0]])        # [P+1, 32]
    pw_aug = pad2(jnp.concatenate([pw, aug], axis=0), KP, DP)      # [640, 128]

    col_off = {0: Q_OFF, 1: K_OFF, 2: V_OFF}   # qkv_w row-block -> packed lane offset
    w_slab, vec_rows = [], []
    for bp in blocks:
        wqkv = jnp.zeros((DP, DP), jnp.float32)
        bqkv = jnp.zeros((DP,), jnp.float32)
        for kind in range(3):                  # 0=Q (scale folded), 1=K, 2=V
            for h in range(HEADS):
                w = bp["qkv_w"][kind * D + h * hd: kind * D + (h + 1) * hd, :].T
                b = bp["qkv_b"][kind * D + h * hd: kind * D + (h + 1) * hd]
                if kind == 0:
                    w, b = w * scale, b * scale
                c0 = col_off[kind] + h * hd
                wqkv = wqkv.at[:D, c0:c0 + hd].set(w)
                bqkv = bqkv.at[c0:c0 + hd].set(b)
        wproj = jnp.zeros((DP, DP), jnp.float32)
        for h in range(HEADS):
            wproj = wproj.at[V_OFF + h * hd: V_OFF + (h + 1) * hd, :D].set(
                bp["proj_w"][:, h * hd:(h + 1) * hd].T)
        w_slab += [wqkv, wproj,
                   pad2(bp["fc1_w"].T, DP, DP),
                   pad2(bp["fc2_w"].T, DP, DP)]
        vec_rows += [row(bp["norm1_w"]), row(bp["norm1_b"]), bqkv,
                     row(bp["proj_b"]), row(bp["ls1_gamma"]),
                     row(bp["norm2_w"]), row(bp["norm2_b"]),
                     row(bp["fc1_b"]), row(bp["fc2_b"]), row(bp["ls2_gamma"])]
    vec_rows += [row(params["norm_w"]), row(params["norm_b"])]
    nv_pad = ((len(vec_rows) + 7) // 8) * 8
    vecs = jnp.zeros((nv_pad, DP), jnp.float32).at[:len(vec_rows)].set(
        jnp.stack(vec_rows))

    return {"pw_aug": pw_aug,                   # [KP, DP]
            "w_slab": jnp.stack(w_slab),        # [4*DEPTH, DP, DP]
            "vecs": vecs}                       # [nv_pad, DP]


# ----------------------------------------------------------------------------
# DINOv2.forward  ==  model.forward_features(x)
# ----------------------------------------------------------------------------
def dinov2_forward(x, kp):
    # DINOv2.forward: flatten video input (B, T, C, H, W) -> (B*T, C, H, W)
    if x.ndim == 5:
        B, T, C, H, W = x.shape
        x = x.reshape(B * T, C, H, W)
    N, C, H, W = x.shape
    Hp, Wp = H // PATCH, W // PATCH
    P = Hp * Wp
    # TODO(synk): bicubic pos-embed interpolation for mismatched grids not
    # implemented; the assert keeps such inputs from silently using wrong pos.
    assert P == NUM_PATCHES and C == IN_CHANS
    np_rows = N * P
    ns = np_rows + N
    ns_pad = ((ns + 7) // 8) * 8          # sublane-aligned rows -> unmasked stores

    # im2col + indicator columns (bias / pos-embed / cls folded into pw_aug)
    patches = x.reshape(N, C, Hp, PATCH, Wp, PATCH)
    patches = patches.transpose(0, 2, 4, 1, 3, 5).reshape(np_rows, K_REAL)
    ind = jnp.tile(jnp.eye(P, dtype=jnp.float32), (N, 1))            # [N*P, P]
    patch_rows = jnp.concatenate(
        [patches, ind, jnp.zeros((np_rows, KP - K_REAL - P), jnp.float32)], axis=1)
    cls_rows = jnp.zeros((N, KP), jnp.float32).at[:, K_REAL + P].set(1.0)
    pad_rows = jnp.zeros((ns_pad - ns, KP), jnp.float32)
    patches_aug = jnp.concatenate([patch_rows, cls_rows, pad_rows], axis=0)

    vmem = pl.BlockSpec(memory_space=pltpu.MemorySpace.VMEM)
    kernel = functools.partial(_fused_vit_kernel, n_elems=N, n_patch=P,
                               depth=DEPTH, heads=HEADS)
    out_pre, out_norm = pl.pallas_call(
        kernel,
        out_shape=(jax.ShapeDtypeStruct((ns_pad, DP), jnp.float32),
                   jax.ShapeDtypeStruct((ns_pad, DP), jnp.float32)),
        in_specs=[vmem, vmem, vmem, vmem],
        out_specs=(vmem, vmem),
    )(patches_aug, kp["pw_aug"], kp["w_slab"], kp["vecs"])

    # un-permute (patches-first / cls-last), drop pad rows and lane padding
    D = EMBED
    patch_pre = out_pre[:np_rows, :D].reshape(N, P, D)
    cls_pre = out_pre[np_rows:ns, :D]
    x_prenorm = jnp.concatenate([cls_pre[:, None, :], patch_pre], axis=1)
    patch_n = out_norm[:np_rows, :D].reshape(N, P, D)
    cls_n = out_norm[np_rows:ns, :D]

    # forward_features return dict (num_register_tokens = 0)
    return {
        "x_norm_clstoken": cls_n,
        "x_norm_patchtokens": patch_n,
        "x_prenorm": x_prenorm,
        "masks": None,
    }


# ----------------------------------------------------------------------------
# Pure-JAX reference (no Pallas) — used only to tolerance-check the kernel
# ----------------------------------------------------------------------------
def dinov2_forward_ref(x, params):
    PREC = jax.lax.Precision.HIGHEST
    if x.ndim == 5:
        B, T, C, H, W = x.shape
        x = x.reshape(B * T, C, H, W)
    N = x.shape[0]
    Hp, Wp = x.shape[2] // PATCH, x.shape[3] // PATCH
    P = Hp * Wp
    S = 1 + P
    patches = x.reshape(N, IN_CHANS, Hp, PATCH, Wp, PATCH)
    patches = patches.transpose(0, 2, 4, 1, 3, 5).reshape(N, P, K_REAL)
    tok = jnp.matmul(patches, params["patch_w"].reshape(EMBED, K_REAL).T,
                     precision=PREC) + params["patch_b"]
    cls = jnp.broadcast_to(params["cls_token"], (N, 1, EMBED))
    xs = jnp.concatenate([cls, tok], axis=1) + params["pos_embed"]

    def ln(v, g, b):
        mu = jnp.mean(v, axis=-1, keepdims=True)
        var = jnp.mean((v - mu) ** 2, axis=-1, keepdims=True)
        return (v - mu) * jax.lax.rsqrt(var + EPS) * g + b

    hd = EMBED // HEADS
    scale = hd ** -0.5
    for bp in params["blocks"]:
        y = ln(xs, bp["norm1_w"], bp["norm1_b"])
        qkv = jnp.matmul(y, bp["qkv_w"].T, precision=PREC) + bp["qkv_b"]
        q, k, v = jnp.split(qkv, 3, axis=-1)
        q = q.reshape(N, S, HEADS, hd).transpose(0, 2, 1, 3) * scale
        k = k.reshape(N, S, HEADS, hd).transpose(0, 2, 1, 3)
        v = v.reshape(N, S, HEADS, hd).transpose(0, 2, 1, 3)
        s = jnp.einsum("nhqd,nhkd->nhqk", q, k, precision=PREC)
        p = jax.nn.softmax(s, axis=-1)
        ctx = jnp.einsum("nhqk,nhkd->nhqd", p, v, precision=PREC)
        ctx = ctx.transpose(0, 2, 1, 3).reshape(N, S, EMBED)
        attn = jnp.matmul(ctx, bp["proj_w"].T, precision=PREC) + bp["proj_b"]
        xs = xs + bp["ls1_gamma"] * attn
        y2 = ln(xs, bp["norm2_w"], bp["norm2_b"])
        h1 = jnp.matmul(y2, bp["fc1_w"].T, precision=PREC) + bp["fc1_b"]
        h1 = 0.5 * h1 * (1.0 + jax.lax.erf(h1 * 0.7071067811865476))
        mlp = jnp.matmul(h1, bp["fc2_w"].T, precision=PREC) + bp["fc2_b"]
        xs = xs + bp["ls2_gamma"] * mlp
    xn = ln(xs, params["norm_w"], params["norm_b"])
    return {"x_norm_clstoken": xn[:, 0], "x_norm_patchtokens": xn[:, 1:],
            "x_prenorm": xs, "masks": None}


if __name__ == "__main__":
    key = jax.random.PRNGKey(0)
    kx, kparam = jax.random.split(key)
    # video-shaped input (B, T, C, H, W) to exercise the 5-D flatten path
    x = jax.random.normal(kx, (2, 2, IN_CHANS, IMG_H, IMG_W), dtype=jnp.float32)
    params = init_params(kparam)
    kernel_params = prepare_kernel_params(params)   # one-time weight prep

    fwd = jax.jit(dinov2_forward)
    feats = fwd(x, kernel_params)
    feats = jax.tree_util.tree_map(jax.block_until_ready, feats)

    assert feats["x_norm_clstoken"].shape == (4, EMBED)
    assert feats["x_norm_patchtokens"].shape == (4, NUM_PATCHES, EMBED)
    assert feats["x_prenorm"].shape == (4, SEQ, EMBED)

    # tolerance check against the pure-JAX reference (approx softmax recip and
    # MXU accumulation order allow small deviations; structural bugs are O(1))
    ref = jax.jit(dinov2_forward_ref)(x, params)
    ref = jax.tree_util.tree_map(jax.block_until_ready, ref)
    for name in ("x_norm_clstoken", "x_norm_patchtokens", "x_prenorm"):
        err = float(jnp.max(jnp.abs(feats[name] - ref[name])))
        assert err < 5e-2, (name, err)

    print("KERNEL_OK")
</pallas_src>

<mosaic_0001>
module attributes {stable_mosaic.version = 11 : i64} {
  func.func @_fused_vit_kernel(%arg0: memref<24x640xf32, #tpu.memory_space<vmem>>, %arg1: memref<640x128xf32, #tpu.memory_space<vmem>>, %arg2: memref<8x128x128xf32, #tpu.memory_space<vmem>>, %arg3: memref<24x128xf32, #tpu.memory_space<vmem>>, %arg4: memref<24x128xf32, #tpu.memory_space<vmem>>, %arg5: memref<24x128xf32, #tpu.memory_space<vmem>>) attributes {dimension_semantics = [], scalar_prefetch = 0 : i64, scratch_operands = 0 : i64, tpu.core_type = #tpu.core_type<tc>} {
    %0 = tpu.iota {dimensions = array<i32: 1>} : vector<1x128xi32>
    %c32_i32 = arith.constant 32 : i32
    %1 = vector.broadcast %c32_i32 : i32 to vector<1x128xi32>
    %2 = arith.cmpi slt, %0, %1 : vector<1x128xi32>
    %3 = arith.extui %2 : vector<1x128xi1> to vector<1x128xi32>
    %4 = arith.sitofp %3 : vector<1x128xi32> to vector<1x128xf32>
    %c0_i32 = arith.constant 0 : i32
    %5 = vector.broadcast %c0_i32 : i32 to vector<1x128xi32>
    %6 = arith.cmpi sge, %0, %5 : vector<1x128xi32>
    %c16_i32 = arith.constant 16 : i32
    %7 = vector.broadcast %c16_i32 : i32 to vector<1x128xi32>
    %8 = arith.cmpi slt, %0, %7 : vector<1x128xi32>
    %9 = arith.andi %6, %8 : vector<1x128xi1>
    %10 = arith.extui %9 : vector<1x128xi1> to vector<1x128xi32>
    %11 = arith.sitofp %10 : vector<1x128xi32> to vector<1x128xf32>
    %c16_i32_0 = arith.constant 16 : i32
    %12 = vector.broadcast %c16_i32_0 : i32 to vector<1x128xi32>
    %13 = arith.cmpi sge, %0, %12 : vector<1x128xi32>
    %c32_i32_1 = arith.constant 32 : i32
    %14 = vector.broadcast %c32_i32_1 : i32 to vector<1x128xi32>
    %15 = arith.cmpi slt, %0, %14 : vector<1x128xi32>
    %16 = arith.andi %13, %15 : vector<1x128xi1>
    %17 = arith.extui %16 : vector<1x128xi1> to vector<1x128xi32>
    %18 = arith.sitofp %17 : vector<1x128xi32> to vector<1x128xf32>
    %c32_i32_2 = arith.constant 32 : i32
    %19 = vector.broadcast %c32_i32_2 : i32 to vector<1x128xi32>
    %20 = arith.cmpi sge, %0, %19 : vector<1x128xi32>
    %c48_i32 = arith.constant 48 : i32
    %21 = vector.broadcast %c48_i32 : i32 to vector<1x128xi32>
    %22 = arith.cmpi slt, %0, %21 : vector<1x128xi32>
    %23 = arith.andi %20, %22 : vector<1x128xi1>
    %24 = arith.extui %23 : vector<1x128xi1> to vector<1x128xi32>
    %25 = arith.sitofp %24 : vector<1x128xi32> to vector<1x128xf32>
    %c48_i32_3 = arith.constant 48 : i32
    %26 = vector.broadcast %c48_i32_3 : i32 to vector<1x128xi32>
    %27 = arith.cmpi sge, %0, %26 : vector<1x128xi32>
    %c64_i32 = arith.constant 64 : i32
    %28 = vector.broadcast %c64_i32 : i32 to vector<1x128xi32>
    %29 = arith.cmpi slt, %0, %28 : vector<1x128xi32>
    %30 = arith.andi %27, %29 : vector<1x128xi1>
    %31 = arith.extui %30 : vector<1x128xi1> to vector<1x128xi32>
    %32 = arith.sitofp %31 : vector<1x128xi32> to vector<1x128xf32>
    %33 = tpu.iota {dimensions = array<i32: 0>} : vector<24x24xi32>
    %34 = tpu.iota {dimensions = array<i32: 1>} : vector<24x24xi32>
    %c0_i32_4 = arith.constant 0 : i32
    %35 = vector.broadcast %c0_i32_4 : i32 to vector<24x24xi32>
    %36 = arith.cmpi sge, %33, %35 : vector<24x24xi32>
    %c4_i32 = arith.constant 4 : i32
    %37 = vector.broadcast %c4_i32 : i32 to vector<24x24xi32>
    %38 = arith.cmpi slt, %33, %37 : vector<24x24xi32>
    %39 = arith.andi %36, %38 : vector<24x24xi1>
    %c16_i32_5 = arith.constant 16 : i32
    %40 = vector.broadcast %c16_i32_5 : i32 to vector<24x24xi32>
    %41 = arith.cmpi eq, %33, %40 : vector<24x24xi32>
    %42 = arith.ori %39, %41 : vector<24x24xi1>
    %c0_i32_6 = arith.constant 0 : i32
    %43 = vector.broadcast %c0_i32_6 : i32 to vector<24x24xi32>
    %44 = arith.cmpi sge, %34, %43 : vector<24x24xi32>
    %c4_i32_7 = arith.constant 4 : i32
    %45 = vector.broadcast %c4_i32_7 : i32 to vector<24x24xi32>
    %46 = arith.cmpi slt, %34, %45 : vector<24x24xi32>
    %47 = arith.andi %44, %46 : vector<24x24xi1>
    %c16_i32_8 = arith.constant 16 : i32
    %48 = vector.broadcast %c16_i32_8 : i32 to vector<24x24xi32>
    %49 = arith.cmpi eq, %34, %48 : vector<24x24xi32>
    %50 = arith.ori %47, %49 : vector<24x24xi1>
    %51 = arith.andi %42, %50 : vector<24x24xi1>
    %c4_i32_9 = arith.constant 4 : i32
    %52 = vector.broadcast %c4_i32_9 : i32 to vector<24x24xi32>
    %53 = arith.cmpi sge, %33, %52 : vector<24x24xi32>
    %c8_i32 = arith.constant 8 : i32
    %54 = vector.broadcast %c8_i32 : i32 to vector<24x24xi32>
    %55 = arith.cmpi slt, %33, %54 : vector<24x24xi32>
    %56 = arith.andi %53, %55 : vector<24x24xi1>
    %c17_i32 = arith.constant 17 : i32
    %57 = vector.broadcast %c17_i32 : i32 to vector<24x24xi32>
    %58 = arith.cmpi eq, %33, %57 : vector<24x24xi32>
    %59 = arith.ori %56, %58 : vector<24x24xi1>
    %c4_i32_10 = arith.constant 4 : i32
    %60 = vector.broadcast %c4_i32_10 : i32 to vector<24x24xi32>
    %61 = arith.cmpi sge, %34, %60 : vector<24x24xi32>
    %c8_i32_11 = arith.constant 8 : i32
    %62 = vector.broadcast %c8_i32_11 : i32 to vector<24x24xi32>
    %63 = arith.cmpi slt, %34, %62 : vector<24x24xi32>
    %64 = arith.andi %61, %63 : vector<24x24xi1>
    %c17_i32_12 = arith.constant 17 : i32
    %65 = vector.broadcast %c17_i32_12 : i32 to vector<24x24xi32>
    %66 = arith.cmpi eq, %34, %65 : vector<24x24xi32>
    %67 = arith.ori %64, %66 : vector<24x24xi1>
    %68 = arith.andi %59, %67 : vector<24x24xi1>
    %69 = arith.ori %51, %68 : vector<24x24xi1>
    %c8_i32_13 = arith.constant 8 : i32
    %70 = vector.broadcast %c8_i32_13 : i32 to vector<24x24xi32>
    %71 = arith.cmpi sge, %33, %70 : vector<24x24xi32>
    %c12_i32 = arith.constant 12 : i32
    %72 = vector.broadcast %c12_i32 : i32 to vector<24x24xi32>
    %73 = arith.cmpi slt, %33, %72 : vector<24x24xi32>
    %74 = arith.andi %71, %73 : vector<24x24xi1>
    %c18_i32 = arith.constant 18 : i32
    %75 = vector.broadcast %c18_i32 : i32 to vector<24x24xi32>
    %76 = arith.cmpi eq, %33, %75 : vector<24x24xi32>
    %77 = arith.ori %74, %76 : vector<24x24xi1>
    %c8_i32_14 = arith.constant 8 : i32
    %78 = vector.broadcast %c8_i32_14 : i32 to vector<24x24xi32>
    %79 = arith.cmpi sge, %34, %78 : vector<24x24xi32>
    %c12_i32_15 = arith.constant 12 : i32
    %80 = vector.broadcast %c12_i32_15 : i32 to vector<24x24xi32>
    %81 = arith.cmpi slt, %34, %80 : vector<24x24xi32>
    %82 = arith.andi %79, %81 : vector<24x24xi1>
    %c18_i32_16 = arith.constant 18 : i32
    %83 = vector.broadcast %c18_i32_16 : i32 to vector<24x24xi32>
    %84 = arith.cmpi eq, %34, %83 : vector<24x24xi32>
    %85 = arith.ori %82, %84 : vector<24x24xi1>
    %86 = arith.andi %77, %85 : vector<24x24xi1>
    %87 = arith.ori %69, %86 : vector<24x24xi1>
    %c12_i32_17 = arith.constant 12 : i32
    %88 = vector.broadcast %c12_i32_17 : i32 to vector<24x24xi32>
    %89 = arith.cmpi sge, %33, %88 : vector<24x24xi32>
    %c16_i32_18 = arith.constant 16 : i32
    %90 = vector.broadcast %c16_i32_18 : i32 to vector<24x24xi32>
    %91 = arith.cmpi slt, %33, %90 : vector<24x24xi32>
    %92 = arith.andi %89, %91 : vector<24x24xi1>
    %c19_i32 = arith.constant 19 : i32
    %93 = vector.broadcast %c19_i32 : i32 to vector<24x24xi32>
    %94 = arith.cmpi eq, %33, %93 : vector<24x24xi32>
    %95 = arith.ori %92, %94 : vector<24x24xi1>
    %c12_i32_19 = arith.constant 12 : i32
    %96 = vector.broadcast %c12_i32_19 : i32 to vector<24x24xi32>
    %97 = arith.cmpi sge, %34, %96 : vector<24x24xi32>
    %c16_i32_20 = arith.constant 16 : i32
    %98 = vector.broadcast %c16_i32_20 : i32 to vector<24x24xi32>
    %99 = arith.cmpi slt, %34, %98 : vector<24x24xi32>
    %100 = arith.andi %97, %99 : vector<24x24xi1>
    %c19_i32_21 = arith.constant 19 : i32
    %101 = vector.broadcast %c19_i32_21 : i32 to vector<24x24xi32>
    %102 = arith.cmpi eq, %34, %101 : vector<24x24xi32>
    %103 = arith.ori %100, %102 : vector<24x24xi1>
    %104 = arith.andi %95, %103 : vector<24x24xi1>
    %105 = arith.ori %87, %104 : vector<24x24xi1>
    %cst = arith.constant 0.000000e+00 : f32
    %cst_22 = arith.constant -1.000000e+09 : f32
    %106 = vector.broadcast %cst : f32 to vector<24x24xf32>
    %107 = vector.broadcast %cst_22 : f32 to vector<24x24xf32>
    %108 = arith.select %105, %106, %107 : vector<24x24xi1>, vector<24x24xf32>
    %c0 = arith.constant 0 : index
    %c0_23 = arith.constant 0 : index
    %109 = vector.load %arg0[%c0, %c0_23] : memref<24x640xf32, #tpu.memory_space<vmem>>, vector<24x640xf32>
    %c0_24 = arith.constant 0 : index
    %c0_25 = arith.constant 0 : index
    %110 = vector.load %arg1[%c0_24, %c0_25] : memref<640x128xf32, #tpu.memory_space<vmem>>, vector<640x128xf32>
    %cst_26 = arith.constant dense<0.000000e+00> : vector<24x128xf32>
    %111 = tpu.matmul %109, %110, %cst_26 {dimension_numbers = #tpu.dot_dimension_numbers<[1], [0], [0], [1], [0, 0, 1, 1], [], []>} : vector<24x640xf32>, vector<640x128xf32>, vector<24x128xf32> -> vector<24x128xf32>
    %c0_27 = arith.constant 0 : index
    %c0_28 = arith.constant 0 : index
    %112 = vector.load %arg3[%c0_27, %c0_28] : memref<24x128xf32, #tpu.memory_space<vmem>>, vector<1x128xf32>
    %c1 = arith.constant 1 : index
    %c0_29 = arith.constant 0 : index
    %113 = vector.load %arg3[%c1, %c0_29] : memref<24x128xf32, #tpu.memory_space<vmem>>, vector<1x128xf32>
    %cst_30 = arith.constant dense<0.000000e+00> : vector<24xf32>
    %114 = vector.multi_reduction <add>, %111, %cst_30 [1] : vector<24x128xf32> to vector<24xf32>
    %115 = vector.shape_cast %114 : vector<24xf32> to vector<24x1xf32>
    %cst_31 = arith.constant 3.125000e-02 : f32
    %116 = vector.broadcast %cst_31 : f32 to vector<24x1xf32>
    %117 = arith.mulf %115, %116 : vector<24x1xf32>
    %118 = vector.broadcast %117 : vector<24x1xf32> to vector<24x128xf32>
    %119 = arith.subf %111, %118 : vector<24x128xf32>
    %120 = vector.broadcast %4 : vector<1x128xf32> to vector<24x128xf32>
    %121 = arith.mulf %119, %120 : vector<24x128xf32>
    %122 = arith.mulf %121, %121 : vector<24x128xf32>
    %cst_32 = arith.constant dense<0.000000e+00> : vector<24xf32>
    %123 = vector.multi_reduction <add>, %122, %cst_32 [1] : vector<24x128xf32> to vector<24xf32>
    %124 = vector.shape_cast %123 : vector<24xf32> to vector<24x1xf32>
    %cst_33 = arith.constant 3.125000e-02 : f32
    %125 = vector.broadcast %cst_33 : f32 to vector<24x1xf32>
    %126 = arith.mulf %124, %125 : vector<24x1xf32>
    %cst_34 = arith.constant 9.99999997E-7 : f32
    %127 = vector.broadcast %cst_34 : f32 to vector<24x1xf32>
    %128 = arith.addf %126, %127 : vector<24x1xf32>
    %129 = math.rsqrt %128 : vector<24x1xf32>
    %130 = vector.broadcast %129 : vector<24x1xf32> to vector<24x128xf32>
    %131 = arith.mulf %121, %130 : vector<24x128xf32>
    %132 = vector.broadcast %112 : vector<1x128xf32> to vector<24x128xf32>
    %133 = arith.mulf %131, %132 : vector<24x128xf32>
    %134 = vector.broadcast %113 : vector<1x128xf32> to vector<24x128xf32>
    %135 = arith.addf %133, %134 : vector<24x128xf32>
    %c0_35 = arith.constant 0 : index
    %c0_36 = arith.constant 0 : index
    %c0_37 = arith.constant 0 : index
    %136 = vector.load %arg2[%c0_35, %c0_36, %c0_37] : memref<8x128x128xf32, #tpu.memory_space<vmem>>, vector<1x128x128xf32>
    %137 = vector.shape_cast %136 : vector<1x128x128xf32> to vector<128x128xf32>
    %cst_38 = arith.constant dense<0.000000e+00> : vector<24x128xf32>
    %138 = tpu.matmul %135, %137, %cst_38 {dimension_numbers = #tpu.dot_dimension_numbers<[1], [0], [0], [1], [0, 0, 1, 1], [], []>} : vector<24x128xf32>, vector<128x128xf32>, vector<24x128xf32> -> vector<24x128xf32>
    %c2 = arith.constant 2 : index
    %c0_39 = arith.constant 0 : index
    %139 = vector.load %arg3[%c2, %c0_39] : memref<24x128xf32, #tpu.memory_space<vmem>>, vector<1x128xf32>
    %140 = vector.broadcast %139 : vector<1x128xf32> to vector<24x128xf32>
    %141 = arith.addf %138, %140 : vector<24x128xf32>
    %c64_i32_40 = arith.constant 64 : i32
    %142 = tpu.dynamic_rotate %141 by %c64_i32_40 dim 1 : vector<24x128xf32>, i32 -> vector<24x128xf32>
    %143 = vector.broadcast %11 : vector<1x128xf32> to vector<24x128xf32>
    %144 = arith.mulf %141, %143 : vector<24x128xf32>
    %cst_41 = arith.constant dense<0.000000e+00> : vector<24x24xf32>
    %145 = tpu.matmul %144, %142, %cst_41 {dimension_numbers = #tpu.dot_dimension_numbers<[1], [1], [0], [0], [0, 0, 1, 0], [], []>} : vector<24x128xf32>, vector<24x128xf32>, vector<24x24xf32> -> vector<24x24xf32>
    %146 = arith.addf %145, %108 : vector<24x24xf32>
    %cst_42 = arith.constant dense<0xFF800000> : vector<24xf32>
    %147 = vector.multi_reduction <maximumf>, %146, %cst_42 [1] : vector<24x24xf32> to vector<24xf32>
    %148 = vector.shape_cast %147 : vector<24xf32> to vector<24x1xf32>
    %149 = vector.broadcast %148 : vector<24x1xf32> to vector<24x24xf32>
    %150 = arith.subf %146, %149 : vector<24x24xf32>
    %151 = math.exp %150 : vector<24x24xf32>
    %cst_43 = arith.constant dense<0.000000e+00> : vector<24xf32>
    %152 = vector.multi_reduction <add>, %151, %cst_43 [1] : vector<24x24xf32> to vector<24xf32>
    %153 = vector.shape_cast %152 : vector<24xf32> to vector<24x1xf32>
    %154 = tpu.reciprocal %153 {approx = true} : vector<24x1xf32> -> vector<24x1xf32>
    %155 = vector.broadcast %154 : vector<24x1xf32> to vector<24x24xf32>
    %156 = arith.mulf %151, %155 : vector<24x24xf32>
    %157 = vector.broadcast %25 : vector<1x128xf32> to vector<24x128xf32>
    %158 = arith.mulf %141, %157 : vector<24x128xf32>
    %cst_44 = arith.constant dense<0.000000e+00> : vector<24x128xf32>
    %159 = tpu.matmul %156, %158, %cst_44 {dimension_numbers = #tpu.dot_dimension_numbers<[1], [0], [0], [1], [0, 0, 1, 1], [], []>} : vector<24x24xf32>, vector<24x128xf32>, vector<24x128xf32> -> vector<24x128xf32>
    %160 = vector.broadcast %18 : vector<1x128xf32> to vector<24x128xf32>
    %161 = arith.mulf %141, %160 : vector<24x128xf32>
    %cst_45 = arith.constant dense<0.000000e+00> : vector<24x24xf32>
    %162 = tpu.matmul %161, %142, %cst_45 {dimension_numbers = #tpu.dot_dimension_numbers<[1], [1], [0], [0], [0, 0, 1, 0], [], []>} : vector<24x128xf32>, vector<24x128xf32>, vector<24x24xf32> -> vector<24x24xf32>
    %163 = arith.addf %162, %108 : vector<24x24xf32>
    %cst_46 = arith.constant dense<0xFF800000> : vector<24xf32>
    %164 = vector.multi_reduction <maximumf>, %163, %cst_46 [1] : vector<24x24xf32> to vector<24xf32>
    %165 = vector.shape_cast %164 : vector<24xf32> to vector<24x1xf32>
    %166 = vector.broadcast %165 : vector<24x1xf32> to vector<24x24xf32>
    %167 = arith.subf %163, %166 : vector<24x24xf32>
    %168 = math.exp %167 : vector<24x24xf32>
    %cst_47 = arith.constant dense<0.000000e+00> : vector<24xf32>
    %169 = vector.multi_reduction <add>, %168, %cst_47 [1] : vector<24x24xf32> to vector<24xf32>
    %170 = vector.shape_cast %169 : vector<24xf32> to vector<24x1xf32>
    %171 = tpu.reciprocal %170 {approx = true} : vector<24x1xf32> -> vector<24x1xf32>
    %172 = vector.broadcast %171 : vector<24x1xf32> to vector<24x24xf32>
    %173 = arith.mulf %168, %172 : vector<24x24xf32>
    %174 = vector.broadcast %32 : vector<1x128xf32> to vector<24x128xf32>
    %175 = arith.mulf %141, %174 : vector<24x128xf32>
    %cst_48 = arith.constant dense<0.000000e+00> : vector<24x128xf32>
    %176 = tpu.matmul %173, %175, %cst_48 {dimension_numbers = #tpu.dot_dimension_numbers<[1], [0], [0], [1], [0, 0, 1, 1], [], []>} : vector<24x24xf32>, vector<24x128xf32>, vector<24x128xf32> -> vector<24x128xf32>
    %177 = arith.addf %159, %176 : vector<24x128xf32>
    %c1_49 = arith.constant 1 : index
    %c0_50 = arith.constant 0 : index
    %c0_51 = arith.constant 0 : index
    %178 = vector.load %arg2[%c1_49, %c0_50, %c0_51] : memref<8x128x128xf32, #tpu.memory_space<vmem>>, vector<1x128x128xf32>
    %179 = vector.shape_cast %178 : vector<1x128x128xf32> to vector<128x128xf32>
    %cst_52 = arith.constant dense<0.000000e+00> : vector<24x128xf32>
    %180 = tpu.matmul %177, %179, %cst_52 {dimension_numbers = #tpu.dot_dimension_numbers<[1], [0], [0], [1], [0, 0, 1, 1], [], []>} : vector<24x128xf32>, vector<128x128xf32>, vector<24x128xf32> -> vector<24x128xf32>
    %c4 = arith.constant 4 : index
    %c0_53 = arith.constant 0 : index
    %181 = vector.load %arg3[%c4, %c0_53] : memref<24x128xf32, #tpu.memory_space<vmem>>, vector<1x128xf32>
    %c3 = arith.constant 3 : index
    %c0_54 = arith.constant 0 : index
    %182 = vector.load %arg3[%c3, %c0_54] : memref<24x128xf32, #tpu.memory_space<vmem>>, vector<1x128xf32>
    %183 = vector.broadcast %182 : vector<1x128xf32> to vector<24x128xf32>
    %184 = arith.addf %180, %183 : vector<24x128xf32>
    %185 = vector.broadcast %181 : vector<1x128xf32> to vector<24x128xf32>
    %186 = arith.mulf %185, %184 : vector<24x128xf32>
    %187 = arith.addf %111, %186 : vector<24x128xf32>
    %c5 = arith.constant 5 : index
    %c0_55 = arith.constant 0 : index
    %188 = vector.load %arg3[%c5, %c0_55] : memref<24x128xf32, #tpu.memory_space<vmem>>, vector<1x128xf32>
    %c6 = arith.constant 6 : index
    %c0_56 = arith.constant 0 : index
    %189 = vector.load %arg3[%c6, %c0_56] : memref<24x128xf32, #tpu.memory_space<vmem>>, vector<1x128xf32>
    %cst_57 = arith.constant dense<0.000000e+00> : vector<24xf32>
    %190 = vector.multi_reduction <add>, %187, %cst_57 [1] : vector<24x128xf32> to vector<24xf32>
    %191 = vector.shape_cast %190 : vector<24xf32> to vector<24x1xf32>
    %cst_58 = arith.constant 3.125000e-02 : f32
    %192 = vector.broadcast %cst_58 : f32 to vector<24x1xf32>
    %193 = arith.mulf %191, %192 : vector<24x1xf32>
    %194 = vector.broadcast %193 : vector<24x1xf32> to vector<24x128xf32>
    %195 = arith.subf %187, %194 : vector<24x128xf32>
    %196 = vector.broadcast %4 : vector<1x128xf32> to vector<24x128xf32>
    %197 = arith.mulf %195, %196 : vector<24x128xf32>
    %198 = arith.mulf %197, %197 : vector<24x128xf32>
    %cst_59 = arith.constant dense<0.000000e+00> : vector<24xf32>
    %199 = vector.multi_reduction <add>, %198, %cst_59 [1] : vector<24x128xf32> to vector<24xf32>
    %200 = vector.shape_cast %199 : vector<24xf32> to vector<24x1xf32>
    %cst_60 = arith.constant 3.125000e-02 : f32
    %201 = vector.broadcast %cst_60 : f32 to vector<24x1xf32>
    %202 = arith.mulf %200, %201 : vector<24x1xf32>
    %cst_61 = arith.constant 9.99999997E-7 : f32
    %203 = vector.broadcast %cst_61 : f32 to vector<24x1xf32>
    %204 = arith.addf %202, %203 : vector<24x1xf32>
    %205 = math.rsqrt %204 : vector<24x1xf32>
    %206 = vector.broadcast %205 : vector<24x1xf32> to vector<24x128xf32>
    %207 = arith.mulf %197, %206 : vector<24x128xf32>
    %208 = vector.broadcast %188 : vector<1x128xf32> to vector<24x128xf32>
    %209 = arith.mulf %207, %208 : vector<24x128xf32>
    %210 = vector.broadcast %189 : vector<1x128xf32> to vector<24x128xf32>
    %211 = arith.addf %209, %210 : vector<24x128xf32>
    %c2_62 = arith.constant 2 : index
    %c0_63 = arith.constant 0 : index
    %c0_64 = arith.constant 0 : index
    %212 = vector.load %arg2[%c2_62, %c0_63, %c0_64] : memref<8x128x128xf32, #tpu.memory_space<vmem>>, vector<1x128x128xf32>
    %213 = vector.shape_cast %212 : vector<1x128x128xf32> to vector<128x128xf32>
    %cst_65 = arith.constant dense<0.000000e+00> : vector<24x128xf32>
    %214 = tpu.matmul %211, %213, %cst_65 {dimension_numbers = #tpu.dot_dimension_numbers<[1], [0], [0], [1], [0, 0, 1, 1], [], []>} : vector<24x128xf32>, vector<128x128xf32>, vector<24x128xf32> -> vector<24x128xf32>
    %c7 = arith.constant 7 : index
    %c0_66 = arith.constant 0 : index
    %215 = vector.load %arg3[%c7, %c0_66] : memref<24x128xf32, #tpu.memory_space<vmem>>, vector<1x128xf32>
    %216 = vector.broadcast %215 : vector<1x128xf32> to vector<24x128xf32>
    %217 = arith.addf %214, %216 : vector<24x128xf32>
    %cst_67 = arith.constant 5.000000e-01 : f32
    %218 = vector.broadcast %cst_67 : f32 to vector<24x128xf32>
    %219 = arith.mulf %218, %217 : vector<24x128xf32>
    %cst_68 = arith.constant 0.707106769 : f32
    %220 = vector.broadcast %cst_68 : f32 to vector<24x128xf32>
    %221 = arith.mulf %217, %220 : vector<24x128xf32>
    %222 = math.erf %221 : vector<24x128xf32>
    %cst_69 = arith.constant 1.000000e+00 : f32
    %223 = vector.broadcast %cst_69 : f32 to vector<24x128xf32>
    %224 = arith.addf %223, %222 : vector<24x128xf32>
    %225 = arith.mulf %219, %224 : vector<24x128xf32>
    %c3_70 = arith.constant 3 : index
    %c0_71 = arith.constant 0 : index
    %c0_72 = arith.constant 0 : index
    %226 = vector.load %arg2[%c3_70, %c0_71, %c0_72] : memref<8x128x128xf32, #tpu.memory_space<vmem>>, vector<1x128x128xf32>
    %227 = vector.shape_cast %226 : vector<1x128x128xf32> to vector<128x128xf32>
    %cst_73 = arith.constant dense<0.000000e+00> : vector<24x128xf32>
    %228 = tpu.matmul %225, %227, %cst_73 {dimension_numbers = #tpu.dot_dimension_numbers<[1], [0], [0], [1], [0, 0, 1, 1], [], []>} : vector<24x128xf32>, vector<128x128xf32>, vector<24x128xf32> -> vector<24x128xf32>
    %c8 = arith.constant 8 : index
    %c0_74 = arith.constant 0 : index
    %229 = vector.load %arg3[%c8, %c0_74] : memref<24x128xf32, #tpu.memory_space<vmem>>, vector<1x128xf32>
    %230 = vector.broadcast %229 : vector<1x128xf32> to vector<24x128xf32>
    %231 = arith.addf %228, %230 : vector<24x128xf32>
    %c9 = arith.constant 9 : index
    %c0_75 = arith.constant 0 : index
    %232 = vector.load %arg3[%c9, %c0_75] : memref<24x128xf32, #tpu.memory_space<vmem>>, vector<1x128xf32>
    %233 = vector.broadcast %232 : vector<1x128xf32> to vector<24x128xf32>
    %234 = arith.mulf %233, %231 : vector<24x128xf32>
    %235 = arith.addf %187, %234 : vector<24x128xf32>
    %c10 = arith.constant 10 : index
    %c0_76 = arith.constant 0 : index
    %236 = vector.load %arg3[%c10, %c0_76] : memref<24x128xf32, #tpu.memory_space<vmem>>, vector<1x128xf32>
    %c11 = arith.constant 11 : index
    %c0_77 = arith.constant 0 : index
    %237 = vector.load %arg3[%c11, %c0_77] : memref<24x128xf32, #tpu.memory_space<vmem>>, vector<1x128xf32>
    %cst_78 = arith.constant dense<0.000000e+00> : vector<24xf32>
    %238 = vector.multi_reduction <add>, %235, %cst_78 [1] : vector<24x128xf32> to vector<24xf32>
    %239 = vector.shape_cast %238 : vector<24xf32> to vector<24x1xf32>
    %cst_79 = arith.constant 3.125000e-02 : f32
    %240 = vector.broadcast %cst_79 : f32 to vector<24x1xf32>
    %241 = arith.mulf %239, %240 : vector<24x1xf32>
    %242 = vector.broadcast %241 : vector<24x1xf32> to vector<24x128xf32>
    %243 = arith.subf %235, %242 : vector<24x128xf32>
    %244 = vector.broadcast %4 : vector<1x128xf32> to vector<24x128xf32>
    %245 = arith.mulf %243, %244 : vector<24x128xf32>
    %246 = arith.mulf %245, %245 : vector<24x128xf32>
    %cst_80 = arith.constant dense<0.000000e+00> : vector<24xf32>
    %247 = vector.multi_reduction <add>, %246, %cst_80 [1] : vector<24x128xf32> to vector<24xf32>
    %248 = vector.shape_cast %247 : vector<24xf32> to vector<24x1xf32>
    %cst_81 = arith.constant 3.125000e-02 : f32
    %249 = vector.broadcast %cst_81 : f32 to vector<24x1xf32>
    %250 = arith.mulf %248, %249 : vector<24x1xf32>
    %cst_82 = arith.constant 9.99999997E-7 : f32
    %251 = vector.broadcast %cst_82 : f32 to vector<24x1xf32>
    %252 = arith.addf %250, %251 : vector<24x1xf32>
    %253 = math.rsqrt %252 : vector<24x1xf32>
    %254 = vector.broadcast %253 : vector<24x1xf32> to vector<24x128xf32>
    %255 = arith.mulf %245, %254 : vector<24x128xf32>
    %256 = vector.broadcast %236 : vector<1x128xf32> to vector<24x128xf32>
    %257 = arith.mulf %255, %256 : vector<24x128xf32>
    %258 = vector.broadcast %237 : vector<1x128xf32> to vector<24x128xf32>
    %259 = arith.addf %257, %258 : vector<24x128xf32>
    %c4_83 = arith.constant 4 : index
    %c0_84 = arith.constant 0 : index
    %c0_85 = arith.constant 0 : index
    %260 = vector.load %arg2[%c4_83, %c0_84, %c0_85] : memref<8x128x128xf32, #tpu.memory_space<vmem>>, vector<1x128x128xf32>
    %261 = vector.shape_cast %260 : vector<1x128x128xf32> to vector<128x128xf32>
    %cst_86 = arith.constant dense<0.000000e+00> : vector<24x128xf32>
    %262 = tpu.matmul %259, %261, %cst_86 {dimension_numbers = #tpu.dot_dimension_numbers<[1], [0], [0], [1], [0, 0, 1, 1], [], []>} : vector<24x128xf32>, vector<128x128xf32>, vector<24x128xf32> -> vector<24x128xf32>
    %c12 = arith.constant 12 : index
    %c0_87 = arith.constant 0 : index
    %263 = vector.load %arg3[%c12, %c0_87] : memref<24x128xf32, #tpu.memory_space<vmem>>, vector<1x128xf32>
    %264 = vector.broadcast %263 : vector<1x128xf32> to vector<24x128xf32>
    %265 = arith.addf %262, %264 : vector<24x128xf32>
    %c64_i32_88 = arith.constant 64 : i32
    %266 = tpu.dynamic_rotate %265 by %c64_i32_88 dim 1 : vector<24x128xf32>, i32 -> vector<24x128xf32>
    %267 = vector.broadcast %11 : vector<1x128xf32> to vector<24x128xf32>
    %268 = arith.mulf %265, %267 : vector<24x128xf32>
    %cst_89 = arith.constant dense<0.000000e+00> : vector<24x24xf32>
    %269 = tpu.matmul %268, %266, %cst_89 {dimension_numbers = #tpu.dot_dimension_numbers<[1], [1], [0], [0], [0, 0, 1, 0], [], []>} : vector<24x128xf32>, vector<24x128xf32>, vector<24x24xf32> -> vector<24x24xf32>
    %270 = arith.addf %269, %108 : vector<24x24xf32>
    %cst_90 = arith.constant dense<0xFF800000> : vector<24xf32>
    %271 = vector.multi_reduction <maximumf>, %270, %cst_90 [1] : vector<24x24xf32> to vector<24xf32>
    %272 = vector.shape_cast %271 : vector<24xf32> to vector<24x1xf32>
    %273 = vector.broadcast %272 : vector<24x1xf32> to vector<24x24xf32>
    %274 = arith.subf %270, %273 : vector<24x24xf32>
    %275 = math.exp %274 : vector<24x24xf32>
    %cst_91 = arith.constant dense<0.000000e+00> : vector<24xf32>
    %276 = vector.multi_reduction <add>, %275, %cst_91 [1] : vector<24x24xf32> to vector<24xf32>
    %277 = vector.shape_cast %276 : vector<24xf32> to vector<24x1xf32>
    %278 = tpu.reciprocal %277 {approx = true} : vector<24x1xf32> -> vector<24x1xf32>
    %279 = vector.broadcast %278 : vector<24x1xf32> to vector<24x24xf32>
    %280 = arith.mulf %275, %279 : vector<24x24xf32>
    %281 = vector.broadcast %25 : vector<1x128xf32> to vector<24x128xf32>
    %282 = arith.mulf %265, %281 : vector<24x128xf32>
    %cst_92 = arith.constant dense<0.000000e+00> : vector<24x128xf32>
    %283 = tpu.matmul %280, %282, %cst_92 {dimension_numbers = #tpu.dot_dimension_numbers<[1], [0], [0], [1], [0, 0, 1, 1], [], []>} : vector<24x24xf32>, vector<24x128xf32>, vector<24x128xf32> -> vector<24x128xf32>
    %284 = vector.broadcast %18 : vector<1x128xf32> to vector<24x128xf32>
    %285 = arith.mulf %265, %284 : vector<24x128xf32>
    %cst_93 = arith.constant dense<0.000000e+00> : vector<24x24xf32>
    %286 = tpu.matmul %285, %266, %cst_93 {dimension_numbers = #tpu.dot_dimension_numbers<[1], [1], [0], [0], [0, 0, 1, 0], [], []>} : vector<24x128xf32>, vector<24x128xf32>, vector<24x24xf32> -> vector<24x24xf32>
    %287 = arith.addf %286, %108 : vector<24x24xf32>
    %cst_94 = arith.constant dense<0xFF800000> : vector<24xf32>
    %288 = vector.multi_reduction <maximumf>, %287, %cst_94 [1] : vector<24x24xf32> to vector<24xf32>
    %289 = vector.shape_cast %288 : vector<24xf32> to vector<24x1xf32>
    %290 = vector.broadcast %289 : vector<24x1xf32> to vector<24x24xf32>
    %291 = arith.subf %287, %290 : vector<24x24xf32>
    %292 = math.exp %291 : vector<24x24xf32>
    %cst_95 = arith.constant dense<0.000000e+00> : vector<24xf32>
    %293 = vector.multi_reduction <add>, %292, %cst_95 [1] : vector<24x24xf32> to vector<24xf32>
    %294 = vector.shape_cast %293 : vector<24xf32> to vector<24x1xf32>
    %295 = tpu.reciprocal %294 {approx = true} : vector<24x1xf32> -> vector<24x1xf32>
    %296 = vector.broadcast %295 : vector<24x1xf32> to vector<24x24xf32>
    %297 = arith.mulf %292, %296 : vector<24x24xf32>
    %298 = vector.broadcast %32 : vector<1x128xf32> to vector<24x128xf32>
    %299 = arith.mulf %265, %298 : vector<24x128xf32>
    %cst_96 = arith.constant dense<0.000000e+00> : vector<24x128xf32>
    %300 = tpu.matmul %297, %299, %cst_96 {dimension_numbers = #tpu.dot_dimension_numbers<[1], [0], [0], [1], [0, 0, 1, 1], [], []>} : vector<24x24xf32>, vector<24x128xf32>, vector<24x128xf32> -> vector<24x128xf32>
    %301 = arith.addf %283, %300 : vector<24x128xf32>
    %c5_97 = arith.constant 5 : index
    %c0_98 = arith.constant 0 : index
    %c0_99 = arith.constant 0 : index
    %302 = vector.load %arg2[%c5_97, %c0_98, %c0_99] : memref<8x128x128xf32, #tpu.memory_space<vmem>>, vector<1x128x128xf32>
    %303 = vector.shape_cast %302 : vector<1x128x128xf32> to vector<128x128xf32>
    %cst_100 = arith.constant dense<0.000000e+00> : vector<24x128xf32>
    %304 = tpu.matmul %301, %303, %cst_100 {dimension_numbers = #tpu.dot_dimension_numbers<[1], [0], [0], [1], [0, 0, 1, 1], [], []>} : vector<24x128xf32>, vector<128x128xf32>, vector<24x128xf32> -> vector<24x128xf32>
    %c14 = arith.constant 14 : index
    %c0_101 = arith.constant 0 : index
    %305 = vector.load %arg3[%c14, %c0_101] : memref<24x128xf32, #tpu.memory_space<vmem>>, vector<1x128xf32>
    %c13 = arith.constant 13 : index
    %c0_102 = arith.constant 0 : index
    %306 = vector.load %arg3[%c13, %c0_102] : memref<24x128xf32, #tpu.memory_space<vmem>>, vector<1x128xf32>
    %307 = vector.broadcast %306 : vector<1x128xf32> to vector<24x128xf32>
    %308 = arith.addf %304, %307 : vector<24x128xf32>
    %309 = vector.broadcast %305 : vector<1x128xf32> to vector<24x128xf32>
    %310 = arith.mulf %309, %308 : vector<24x128xf32>
    %311 = arith.addf %235, %310 : vector<24x128xf32>
    %c15 = arith.constant 15 : index
    %c0_103 = arith.constant 0 : index
    %312 = vector.load %arg3[%c15, %c0_103] : memref<24x128xf32, #tpu.memory_space<vmem>>, vector<1x128xf32>
    %c16 = arith.constant 16 : index
    %c0_104 = arith.constant 0 : index
    %313 = vector.load %arg3[%c16, %c0_104] : memref<24x128xf32, #tpu.memory_space<vmem>>, vector<1x128xf32>
    %cst_105 = arith.constant dense<0.000000e+00> : vector<24xf32>
    %314 = vector.multi_reduction <add>, %311, %cst_105 [1] : vector<24x128xf32> to vector<24xf32>
    %315 = vector.shape_cast %314 : vector<24xf32> to vector<24x1xf32>
    %cst_106 = arith.constant 3.125000e-02 : f32
    %316 = vector.broadcast %cst_106 : f32 to vector<24x1xf32>
    %317 = arith.mulf %315, %316 : vector<24x1xf32>
    %318 = vector.broadcast %317 : vector<24x1xf32> to vector<24x128xf32>
    %319 = arith.subf %311, %318 : vector<24x128xf32>
    %320 = vector.broadcast %4 : vector<1x128xf32> to vector<24x128xf32>
    %321 = arith.mulf %319, %320 : vector<24x128xf32>
    %322 = arith.mulf %321, %321 : vector<24x128xf32>
    %cst_107 = arith.constant dense<0.000000e+00> : vector<24xf32>
    %323 = vector.multi_reduction <add>, %322, %cst_107 [1] : vector<24x128xf32> to vector<24xf32>
    %324 = vector.shape_cast %323 : vector<24xf32> to vector<24x1xf32>
    %cst_108 = arith.constant 3.125000e-02 : f32
    %325 = vector.broadcast %cst_108 : f32 to vector<24x1xf32>
    %326 = arith.mulf %324, %325 : vector<24x1xf32>
    %cst_109 = arith.constant 9.99999997E-7 : f32
    %327 = vector.broadcast %cst_109 : f32 to vector<24x1xf32>
    %328 = arith.addf %326, %327 : vector<24x1xf32>
    %329 = math.rsqrt %328 : vector<24x1xf32>
    %330 = vector.broadcast %329 : vector<24x1xf32> to vector<24x128xf32>
    %331 = arith.mulf %321, %330 : vector<24x128xf32>
    %332 = vector.broadcast %312 : vector<1x128xf32> to vector<24x128xf32>
    %333 = arith.mulf %331, %332 : vector<24x128xf32>
    %334 = vector.broadcast %313 : vector<1x128xf32> to vector<24x128xf32>
    %335 = arith.addf %333, %334 : vector<24x128xf32>
    %c6_110 = arith.constant 6 : index
    %c0_111 = arith.constant 0 : index
    %c0_112 = arith.constant 0 : index
    %336 = vector.load %arg2[%c6_110, %c0_111, %c0_112] : memref<8x128x128xf32, #tpu.memory_space<vmem>>, vector<1x128x128xf32>
    %337 = vector.shape_cast %336 : vector<1x128x128xf32> to vector<128x128xf32>
    %cst_113 = arith.constant dense<0.000000e+00> : vector<24x128xf32>
    %338 = tpu.matmul %335, %337, %cst_113 {dimension_numbers = #tpu.dot_dimension_numbers<[1], [0], [0], [1], [0, 0, 1, 1], [], []>} : vector<24x128xf32>, vector<128x128xf32>, vector<24x128xf32> -> vector<24x128xf32>
    %c17 = arith.constant 17 : index
    %c0_114 = arith.constant 0 : index
    %339 = vector.load %arg3[%c17, %c0_114] : memref<24x128xf32, #tpu.memory_space<vmem>>, vector<1x128xf32>
    %340 = vector.broadcast %339 : vector<1x128xf32> to vector<24x128xf32>
    %341 = arith.addf %338, %340 : vector<24x128xf32>
    %cst_115 = arith.constant 5.000000e-01 : f32
    %342 = vector.broadcast %cst_115 : f32 to vector<24x128xf32>
    %343 = arith.mulf %342, %341 : vector<24x128xf32>
    %cst_116 = arith.constant 0.707106769 : f32
    %344 = vector.broadcast %cst_116 : f32 to vector<24x128xf32>
    %345 = arith.mulf %341, %344 : vector<24x128xf32>
    %346 = math.erf %345 : vector<24x128xf32>
    %cst_117 = arith.constant 1.000000e+00 : f32
    %347 = vector.broadcast %cst_117 : f32 to vector<24x128xf32>
    %348 = arith.addf %347, %346 : vector<24x128xf32>
    %349 = arith.mulf %343, %348 : vector<24x128xf32>
    %c7_118 = arith.constant 7 : index
    %c0_119 = arith.constant 0 : index
    %c0_120 = arith.constant 0 : index
    %350 = vector.load %arg2[%c7_118, %c0_119, %c0_120] : memref<8x128x128xf32, #tpu.memory_space<vmem>>, vector<1x128x128xf32>
    %351 = vector.shape_cast %350 : vector<1x128x128xf32> to vector<128x128xf32>
    %cst_121 = arith.constant dense<0.000000e+00> : vector<24x128xf32>
    %352 = tpu.matmul %349, %351, %cst_121 {dimension_numbers = #tpu.dot_dimension_numbers<[1], [0], [0], [1], [0, 0, 1, 1], [], []>} : vector<24x128xf32>, vector<128x128xf32>, vector<24x128xf32> -> vector<24x128xf32>
    %c18 = arith.constant 18 : index
    %c0_122 = arith.constant 0 : index
    %353 = vector.load %arg3[%c18, %c0_122] : memref<24x128xf32, #tpu.memory_space<vmem>>, vector<1x128xf32>
    %354 = vector.broadcast %353 : vector<1x128xf32> to vector<24x128xf32>
    %355 = arith.addf %352, %354 : vector<24x128xf32>
    %c19 = arith.constant 19 : index
    %c0_123 = arith.constant 0 : index
    %356 = vector.load %arg3[%c19, %c0_123] : memref<24x128xf32, #tpu.memory_space<vmem>>, vector<1x128xf32>
    %357 = vector.broadcast %356 : vector<1x128xf32> to vector<24x128xf32>
    %358 = arith.mulf %357, %355 : vector<24x128xf32>
    %359 = arith.addf %311, %358 : vector<24x128xf32>
    %c0_124 = arith.constant 0 : index
    %c0_125 = arith.constant 0 : index
    %360 = vector.load %arg4[%c0_124, %c0_125] : memref<24x128xf32, #tpu.memory_space<vmem>>, vector<24x128xf32>
    tpu.vector_store %arg4[%c0_124, %c0_125], %359 {strides = array<i32>} : memref<24x128xf32, #tpu.memory_space<vmem>>, vector<24x128xf32>,
    %c20 = arith.constant 20 : index
    %c0_126 = arith.constant 0 : index
    %361 = vector.load %arg3[%c20, %c0_126] : memref<24x128xf32, #tpu.memory_space<vmem>>, vector<1x128xf32>
    %c21 = arith.constant 21 : index
    %c0_127 = arith.constant 0 : index
    %362 = vector.load %arg3[%c21, %c0_127] : memref<24x128xf32, #tpu.memory_space<vmem>>, vector<1x128xf32>
    %cst_128 = arith.constant dense<0.000000e+00> : vector<24xf32>
    %363 = vector.multi_reduction <add>, %359, %cst_128 [1] : vector<24x128xf32> to vector<24xf32>
    %364 = vector.shape_cast %363 : vector<24xf32> to vector<24x1xf32>
    %cst_129 = arith.constant 3.125000e-02 : f32
    %365 = vector.broadcast %cst_129 : f32 to vector<24x1xf32>
    %366 = arith.mulf %364, %365 : vector<24x1xf32>
    %367 = vector.broadcast %366 : vector<24x1xf32> to vector<24x128xf32>
    %368 = arith.subf %359, %367 : vector<24x128xf32>
    %369 = vector.broadcast %4 : vector<1x128xf32> to vector<24x128xf32>
    %370 = arith.mulf %368, %369 : vector<24x128xf32>
    %371 = arith.mulf %370, %370 : vector<24x128xf32>
    %cst_130 = arith.constant dense<0.000000e+00> : vector<24xf32>
    %372 = vector.multi_reduction <add>, %371, %cst_130 [1] : vector<24x128xf32> to vector<24xf32>
    %373 = vector.shape_cast %372 : vector<24xf32> to vector<24x1xf32>
    %cst_131 = arith.constant 3.125000e-02 : f32
    %374 = vector.broadcast %cst_131 : f32 to vector<24x1xf32>
    %375 = arith.mulf %373, %374 : vector<24x1xf32>
    %cst_132 = arith.constant 9.99999997E-7 : f32
    %376 = vector.broadcast %cst_132 : f32 to vector<24x1xf32>
    %377 = arith.addf %375, %376 : vector<24x1xf32>
    %378 = math.rsqrt %377 : vector<24x1xf32>
    %379 = vector.broadcast %378 : vector<24x1xf32> to vector<24x128xf32>
    %380 = arith.mulf %370, %379 : vector<24x128xf32>
    %381 = vector.broadcast %361 : vector<1x128xf32> to vector<24x128xf32>
    %382 = arith.mulf %380, %381 : vector<24x128xf32>
    %383 = vector.broadcast %362 : vector<1x128xf32> to vector<24x128xf32>
    %384 = arith.addf %382, %383 : vector<24x128xf32>
    %c0_133 = arith.constant 0 : index
    %c0_134 = arith.constant 0 : index
    %385 = vector.load %arg5[%c0_133, %c0_134] : memref<24x128xf32, #tpu.memory_space<vmem>>, vector<24x128xf32>
    tpu.vector_store %arg5[%c0_133, %c0_134], %384 {strides = array<i32>} : memref<24x128xf32, #tpu.memory_space<vmem>>, vector<24x128xf32>,
    return
  }
}

</mosaic_0001>

<llo_original>
// kernel: dinov2_forward.1
$region0: #{dinov2_forward.1}
  #allocation0 [shape = 'u32[]', space=smem, size = 0x4, offset = 0x4, fixed_abs, tag = 'smem constant byte address 0x4 - core index']
  #allocation1 [shape = 'u32[144,128]{1,0:T(1,128)}', space=vmem, size = 0x12000, scoped, tag = 'internal scratch']
  %s0 = inlined_call_operand.vmem [shape: f32[24,640], index: 0, kind: input, shape index: {}]
  %s1 = inlined_call_operand.vmem [shape: f32[640,128], index: 1, kind: input, shape index: {}]
  %s2 = inlined_call_operand.vmem [shape: f32[8,128,128], index: 2, kind: input, shape index: {}]
  %s3 = inlined_call_operand.vmem [shape: f32[24,128], index: 3, kind: input, shape index: {}]
  %s4 = inlined_call_operand.vmem [shape: f32[24,128], index: 4, kind: output, shape index: {0}]
  %s5 = inlined_call_operand.vmem [shape: f32[24,128], index: 5, kind: output, shape index: {1}]
  %6 = xla_tuple %s4, %s5
  %s7 = sld [smem:[#allocation0]]
  $region34: #{dinov2_forward.1} parent=0
    _
  %s9 = ssub.s32 1, %s7
  %s10 = scalar_select 0, %s9, %s7
  // Predicated region
  $region2: #{dinov2_forward.1} parent=0 // pred_check
    _
  $region3: #{dinov2_forward.1} parent=0 // pred_check_branch
    %12 = sbr.rel (0) target = $region5
  $region4: #{dinov2_forward.1} parent=0 // pred_region
    _
  $region5: #{dinov2_forward.1} parent=0 // pred_fallthru
    _
  // Predicated region
  $region6: #{dinov2_forward.1} parent=0 // pred_check
    _
  $region7: #{dinov2_forward.1} parent=0 // pred_check_branch
    %14 = sbr.rel (0) target = $region9
  $region8: #{dinov2_forward.1} parent=0 // pred_region
    _
  $region9: #{dinov2_forward.1} parent=0 // pred_fallthru
    _
  // Predicated region
  $region10: #{dinov2_forward.1} parent=0 // pred_check
    _
  $region11: #{dinov2_forward.1} parent=0 // pred_check_branch
    %16 = sbr.rel (0) target = $region13
  $region12: #{dinov2_forward.1} parent=0 // pred_region
    _
  $region13: #{dinov2_forward.1} parent=0 // pred_fallthru
    _
  // Predicated region
  $region14: #{dinov2_forward.1} parent=0 // pred_check
    _
  $region15: #{dinov2_forward.1} parent=0 // pred_check_branch
    %18 = sbr.rel (0) target = $region17
  $region16: #{dinov2_forward.1} parent=0 // pred_region
    _
  $region17: #{dinov2_forward.1} parent=0 // pred_fallthru
    _
  %v19 = vlaneseq
  %v20 = vand.u32 %v19, 127
  %vm21 = vcmp.lt.s32.totalorder %v20, 32
  %v22 = vsel %vm21, 1, 0
  %v23 = vcvt.s32.f32 %v22
  %vm24 = vcmp.ge.s32.totalorder %v20, 0
  %vm25 = vcmp.lt.s32.totalorder %v20, 16
  %vm26 = vmand %vm24, %vm25
  %v27 = vsel %vm26, 1, 0
  %v28 = vcvt.s32.f32 %v27
  %vm29 = vcmp.ge.s32.totalorder %v20, 16
  %vm30 = vmand %vm29, %vm21
  %v31 = vsel %vm30, 1, 0
  %v32 = vcvt.s32.f32 %v31
  %vm33 = vcmp.ge.s32.totalorder %v20, 32
  %vm34 = vcmp.lt.s32.totalorder %v20, 48
  %vm35 = vmand %vm33, %vm34
  %v36 = vsel %vm35, 1, 0
  %v37 = vcvt.s32.f32 %v36
  %vm38 = vcmp.ge.s32.totalorder %v20, 48
  %vm39 = vcmp.lt.s32.totalorder %v20, 64
  %vm40 = vmand %vm38, %vm39
  %v41 = vsel %vm40, 1, 0
  %v42 = vcvt.s32.f32 %v41
  %v43 = vlaneseq
  %v44 = vshrl.u32 %v43, 7
  %v45 = vadd.s32 %v44, 8
  %v46 = vadd.s32 %v44, 16
  %vm47 = vcmp.ge.s32.totalorder %v44, 0
  %vm48 = vcmp.ge.s32.totalorder %v45, 0
  %vm49 = vcmp.ge.s32.totalorder %v46, 0
  %vm50 = vcmp.lt.s32.totalorder %v44, 4
  %vm51 = vcmp.lt.s32.totalorder %v45, 4
  %vm52 = vcmp.lt.s32.totalorder %v46, 4
  %vm53 = vmand %vm47, %vm50
  %vm54 = vmand %vm48, %vm51
  %vm55 = vmand %vm49, %vm52
  %vm56 = vcmp.eq.s32.totalorder %v44, 16
  %vm57 = vcmp.eq.s32.totalorder %v45, 16
  %vm58 = vcmp.eq.s32.totalorder %v46, 16
  %vm59 = vmor %vm53, %vm56
  %vm60 = vmor %vm54, %vm57
  %vm61 = vmor %vm55, %vm58
  %vm62 = vcmp.lt.s32.totalorder %v20, 4
  %vm63 = vmand %vm24, %vm62
  %vm64 = vcmp.eq.s32.totalorder %v20, 16
  %vm65 = vmor %vm63, %vm64
  %vm66 = vmand %vm59, %vm65
  %vm67 = vmand %vm60, %vm65
  %vm68 = vmand %vm61, %vm65
  %vm69 = vcmp.ge.s32.totalorder %v44, 4
  %vm70 = vcmp.ge.s32.totalorder %v45, 4
  %vm71 = vcmp.ge.s32.totalorder %v46, 4
  %vm72 = vcmp.lt.s32.totalorder %v44, 8
  %vm73 = vcmp.lt.s32.totalorder %v45, 8
  %vm74 = vcmp.lt.s32.totalorder %v46, 8
  %vm75 = vmand %vm69, %vm72
  %vm76 = vmand %vm70, %vm73
  %vm77 = vmand %vm71, %vm74
  %vm78 = vcmp.eq.s32.totalorder %v44, 17
  %vm79 = vcmp.eq.s32.totalorder %v45, 17
  %vm80 = vcmp.eq.s32.totalorder %v46, 17
  %vm81 = vmor %vm75, %vm78
  %vm82 = vmor %vm76, %vm79
  %vm83 = vmor %vm77, %vm80
  %vm84 = vcmp.ge.s32.totalorder %v20, 4
  %vm85 = vcmp.lt.s32.totalorder %v20, 8
  %vm86 = vmand %vm84, %vm85
  %vm87 = vcmp.eq.s32.totalorder %v20, 17
  %vm88 = vmor %vm86, %vm87
  %vm89 = vmand %vm81, %vm88
  %vm90 = vmand %vm82, %vm88
  %vm91 = vmand %vm83, %vm88
  %vm92 = vmor %vm66, %vm89
  %vm93 = vmor %vm67, %vm90
  %vm94 = vmor %vm68, %vm91
  %vm95 = vcmp.ge.s32.totalorder %v44, 8
  %vm96 = vcmp.ge.s32.totalorder %v45, 8
  %vm97 = vcmp.ge.s32.totalorder %v46, 8
  %vm98 = vcmp.lt.s32.totalorder %v44, 12
  %vm99 = vcmp.lt.s32.totalorder %v45, 12
  %vm100 = vcmp.lt.s32.totalorder %v46, 12
  %vm101 = vmand %vm95, %vm98
  %vm102 = vmand %vm96, %vm99
  %vm103 = vmand %vm97, %vm100
  %vm104 = vcmp.eq.s32.totalorder %v44, 18
  %vm105 = vcmp.eq.s32.totalorder %v45, 18
  %vm106 = vcmp.eq.s32.totalorder %v46, 18
  %vm107 = vmor %vm101, %vm104
  %vm108 = vmor %vm102, %vm105
  %vm109 = vmor %vm103, %vm106
  %vm110 = vcmp.ge.s32.totalorder %v20, 8
  %vm111 = vcmp.lt.s32.totalorder %v20, 12
  %vm112 = vmand %vm110, %vm111
  %vm113 = vcmp.eq.s32.totalorder %v20, 18
  %vm114 = vmor %vm112, %vm113
  %vm115 = vmand %vm107, %vm114
  %vm116 = vmand %vm108, %vm114
  %vm117 = vmand %vm109, %vm114
  %vm118 = vmor %vm92, %vm115
  %vm119 = vmor %vm93, %vm116
  %vm120 = vmor %vm94, %vm117
  %vm121 = vcmp.ge.s32.totalorder %v44, 12
  %vm122 = vcmp.ge.s32.totalorder %v45, 12
  %vm123 = vcmp.ge.s32.totalorder %v46, 12
  %vm124 = vcmp.lt.s32.totalorder %v44, 16
  %vm125 = vcmp.lt.s32.totalorder %v45, 16
  %vm126 = vcmp.lt.s32.totalorder %v46, 16
  %vm127 = vmand %vm121, %vm124
  %vm128 = vmand %vm122, %vm125
  %vm129 = vmand %vm123, %vm126
  %vm130 = vcmp.eq.s32.totalorder %v44, 19
  %vm131 = vcmp.eq.s32.totalorder %v45, 19
  %vm132 = vcmp.eq.s32.totalorder %v46, 19
  %vm133 = vmor %vm127, %vm130
  %vm134 = vmor %vm128, %vm131
  %vm135 = vmor %vm129, %vm132
  %vm136 = vcmp.ge.s32.totalorder %v20, 12
  %vm137 = vmand %vm136, %vm25
  %vm138 = vcmp.eq.s32.totalorder %v20, 19
  %vm139 = vmor %vm137, %vm138
  %vm140 = vmand %vm133, %vm139
  %vm141 = vmand %vm134, %vm139
  %vm142 = vmand %vm135, %vm139
  %vm143 = vmor %vm118, %vm140
  %vm144 = vmor %vm119, %vm141
  %vm145 = vmor %vm120, %vm142
  %v146 = vsel %vm143, 0.0, -1e+09
  %v147 = vsel %vm144, 0.0, -1e+09
  %v148 = vsel %vm145, 0.0, -1e+09
  %v149 = vld [vmem:[%s0] sm:$0xff]
  %v150 = vld [vmem:[%s0 + $0x8] sm:$0xff]
  %v151 = vld [vmem:[%s0 + $0x10] sm:$0xff]
  %v152 = vld [vmem:[%s0 + $0x18] sm:$0xff]
  %v153 = vld [vmem:[%s0 + $0x20] sm:$0xff]
  %v154 = vld [vmem:[%s0 + $0x28] sm:$0xff]
  %v155 = vld [vmem:[%s0 + $0x30] sm:$0xff]
  %v156 = vld [vmem:[%s0 + $0x38] sm:$0xff]
  %v157 = vld [vmem:[%s0 + $0x40] sm:$0xff]
  %v158 = vld [vmem:[%s0 + $0x48] sm:$0xff]
  %v159 = vld [vmem:[%s0 + $0x50] sm:$0xff]
  %v160 = vld [vmem:[%s0 + $0x58] sm:$0xff]
  %v161 = vld [vmem:[%s0 + $0x60] sm:$0xff]
  %v162 = vld [vmem:[%s0 + $0x68] sm:$0xff]
  %v163 = vld [vmem:[%s0 + $0x70] sm:$0xff]
  %v164 = vld [vmem:[%s1] sm:$0xff]
  %v165 = vld [vmem:[%s1 + $0x8] sm:$0xff]
  %v166 = vld [vmem:[%s1 + $0x10] sm:$0xff]
  %v167 = vld [vmem:[%s1 + $0x18] sm:$0xff]
  %v168 = vld [vmem:[%s1 + $0x20] sm:$0xff]
  %v169 = vld [vmem:[%s1 + $0x28] sm:$0xff]
  %v170 = vld [vmem:[%s1 + $0x30] sm:$0xff]
  %v171 = vld [vmem:[%s1 + $0x38] sm:$0xff]
  %v172 = vld [vmem:[%s1 + $0x40] sm:$0xff]
  %v173 = vld [vmem:[%s1 + $0x48] sm:$0xff]
  %v174 = vld [vmem:[%s1 + $0x50] sm:$0xff]
  %v175 = vld [vmem:[%s1 + $0x58] sm:$0xff]
  %v176 = vld [vmem:[%s1 + $0x60] sm:$0xff]
  %v177 = vld [vmem:[%s1 + $0x68] sm:$0xff]
  %v178 = vld [vmem:[%s1 + $0x70] sm:$0xff]
  %v179 = vld [vmem:[%s1 + $0x78] sm:$0xff]
  %v180 = vld [vmem:[%s1 + $0x80] sm:$0xff]
  %v181 = vld [vmem:[%s1 + $0x88] sm:$0xff]
  %v182 = vld [vmem:[%s1 + $0x90] sm:$0xff]
  %v183 = vld [vmem:[%s1 + $0x98] sm:$0xff]
  %v184 = vld [vmem:[%s1 + $0xa0] sm:$0xff]
  %v185 = vld [vmem:[%s1 + $0xa8] sm:$0xff]
  %v186 = vld [vmem:[%s1 + $0xb0] sm:$0xff]
  %v187 = vld [vmem:[%s1 + $0xb8] sm:$0xff]
  %v188 = vld [vmem:[%s1 + $0xc0] sm:$0xff]
  %v189 = vld [vmem:[%s1 + $0xc8] sm:$0xff]
  %v190 = vld [vmem:[%s1 + $0xd0] sm:$0xff]
  %v191 = vld [vmem:[%s1 + $0xd8] sm:$0xff]
  %v192 = vld [vmem:[%s1 + $0xe0] sm:$0xff]
  %v193 = vld [vmem:[%s1 + $0xe8] sm:$0xff]
  %v194 = vld [vmem:[%s1 + $0xf0] sm:$0xff]
  %v195 = vld [vmem:[%s1 + $0xf8] sm:$0xff]
  %v196 = vld [vmem:[%s1 + $0x100] sm:$0xff]
  %v197 = vld [vmem:[%s1 + $0x108] sm:$0xff]
  %v198 = vld [vmem:[%s1 + $0x110] sm:$0xff]
  %v199 = vld [vmem:[%s1 + $0x118] sm:$0xff]
  %v200 = vld [vmem:[%s1 + $0x120] sm:$0xff]
  %v201 = vld [vmem:[%s1 + $0x128] sm:$0xff]
  %v202 = vld [vmem:[%s1 + $0x130] sm:$0xff]
  %v203 = vld [vmem:[%s1 + $0x138] sm:$0xff]
  %v204 = vld [vmem:[%s1 + $0x140] sm:$0xff]
  %v205 = vld [vmem:[%s1 + $0x148] sm:$0xff]
  %v206 = vld [vmem:[%s1 + $0x150] sm:$0xff]
  %v207 = vld [vmem:[%s1 + $0x158] sm:$0xff]
  %v208 = vld [vmem:[%s1 + $0x160] sm:$0xff]
  %v209 = vld [vmem:[%s1 + $0x168] sm:$0xff]
  %v210 = vld [vmem:[%s1 + $0x170] sm:$0xff]
  %v211 = vld [vmem:[%s1 + $0x178] sm:$0xff]
  %v212 = vld [vmem:[%s1 + $0x180] sm:$0xff]
  %v213 = vld [vmem:[%s1 + $0x188] sm:$0xff]
  %v214 = vld [vmem:[%s1 + $0x190] sm:$0xff]
  %v215 = vld [vmem:[%s1 + $0x198] sm:$0xff]
  %v216 = vld [vmem:[%s1 + $0x1a0] sm:$0xff]
  %v217 = vld [vmem:[%s1 + $0x1a8] sm:$0xff]
  %v218 = vld [vmem:[%s1 + $0x1b0] sm:$0xff]
  %v219 = vld [vmem:[%s1 + $0x1b8] sm:$0xff]
  %v220 = vld [vmem:[%s1 + $0x1c0] sm:$0xff]
  %v221 = vld [vmem:[%s1 + $0x1c8] sm:$0xff]
  %v222 = vld [vmem:[%s1 + $0x1d0] sm:$0xff]
  %v223 = vld [vmem:[%s1 + $0x1d8] sm:$0xff]
  %v224 = vld [vmem:[%s1 + $0x1e0] sm:$0xff]
  %v225 = vld [vmem:[%s1 + $0x1e8] sm:$0xff]
  %v226 = vld [vmem:[%s1 + $0x1f0] sm:$0xff]
  %v227 = vld [vmem:[%s1 + $0x1f8] sm:$0xff]
  %v228 = vld [vmem:[%s1 + $0x200] sm:$0xff]
  %v229 = vld [vmem:[%s1 + $0x208] sm:$0xff]
  %v230 = vld [vmem:[%s1 + $0x210] sm:$0xff]
  %v231 = vld [vmem:[%s1 + $0x218] sm:$0xff]
  %v232 = vld [vmem:[%s1 + $0x220] sm:$0xff]
  %v233 = vld [vmem:[%s1 + $0x228] sm:$0xff]
  %v234 = vld [vmem:[%s1 + $0x230] sm:$0xff]
  %v235 = vld [vmem:[%s1 + $0x238] sm:$0xff]
  %v236 = vld [vmem:[%s1 + $0x240] sm:$0xff]
  %v237 = vld [vmem:[%s1 + $0x248] sm:$0xff]
  %v238 = vld [vmem:[%s1 + $0x250] sm:$0xff]
  %v239 = vld [vmem:[%s1 + $0x258] sm:$0xff]
  %v240 = vld [vmem:[%s1 + $0x260] sm:$0xff]
  %v241 = vld [vmem:[%s1 + $0x268] sm:$0xff]
  %v242 = vld [vmem:[%s1 + $0x270] sm:$0xff]
  %v243 = vld [vmem:[%s1 + $0x278] sm:$0xff]
  %244 = vmatprep.subr.mxu0 0.0
  %245 = vmatpush1.msra.mxu0 %v179
  %246 = vmatprep.subr.mxu0 0.0
  %247 = vmatpush1.msra.mxu0 %v178
  %248 = vmatprep.subr.mxu0 0.0
  %249 = vmatpush1.msra.mxu0 %v177
  %250 = vmatprep.subr.mxu0 0.0
  %251 = vmatpush1.msra.mxu0 %v176
  %252 = vmatprep.subr.mxu0 0.0
  %253 = vmatpush1.msra.mxu0 %v175
  %254 = vmatprep.subr.mxu0 0.0
  %255 = vmatpush1.msra.mxu0 %v174
  %256 = vmatprep.subr.mxu0 0.0
  %257 = vmatpush1.msra.mxu0 %v173
  %258 = vmatprep.subr.mxu0 0.0
  %259 = vmatpush1.msra.mxu0 %v172
  %260 = vmatprep.subr.mxu0 0.0
  %261 = vmatpush1.msra.mxu0 %v171
  %262 = vmatprep.subr.mxu0 0.0
  %263 = vmatpush1.msra.mxu0 %v170
  %264 = vmatprep.subr.mxu0 0.0
  %265 = vmatpush1.msra.mxu0 %v169
  %266 = vmatprep.subr.mxu0 0.0
  %267 = vmatpush1.msra.mxu0 %v168
  %268 = vmatprep.subr.mxu0 0.0
  %269 = vmatpush1.msra.mxu0 %v167
  %270 = vmatprep.subr.mxu0 0.0
  %271 = vmatpush1.msra.mxu0 %v166
  %272 = vmatprep.subr.mxu0 0.0
  %273 = vmatpush1.msra.mxu0 %v165
  %274 = vmatprep.subr.mxu0 0.0
  %275 = vmatpush1.msra.mxu0 %v164
  %276 = vmatprep.subr.mxu0 0.0
  %277 = vmatpush2.msra.mxu0 %v195
  %278 = vmatprep.subr.mxu0 0.0
  %279 = vmatpush2.msra.mxu0 %v194
  %280 = vmatprep.subr.mxu0 0.0
  %281 = vmatpush2.msra.mxu0 %v193
  %282 = vmatprep.subr.mxu0 0.0
  %283 = vmatpush2.msra.mxu0 %v192
  %284 = vmatprep.subr.mxu0 0.0
  %285 = vmatpush2.msra.mxu0 %v191
  %286 = vmatprep.subr.mxu0 0.0
  %287 = vmatpush2.msra.mxu0 %v190
  %288 = vmatprep.subr.mxu0 0.0
  %289 = vmatpush2.msra.mxu0 %v189
  %290 = vmatprep.subr.mxu0 0.0
  %291 = vmatpush2.msra.mxu0 %v188
  %292 = vmatprep.subr.mxu0 0.0
  %293 = vmatpush2.msra.mxu0 %v187
  %294 = vmatprep.subr.mxu0 0.0
  %295 = vmatpush2.msra.mxu0 %v186
  %296 = vmatprep.subr.mxu0 0.0
  %297 = vmatpush2.msra.mxu0 %v185
  %298 = vmatprep.subr.mxu0 0.0
  %299 = vmatpush2.msra.mxu0 %v184
  %300 = vmatprep.subr.mxu0 0.0
  %301 = vmatpush2.msra.mxu0 %v183
  %302 = vmatprep.subr.mxu0 0.0
  %303 = vmatpush2.msra.mxu0 %v182
  %304 = vmatprep.subr.mxu0 0.0
  %305 = vmatpush2.msra.mxu0 %v181
  %306 = vmatprep.subr.mxu0 0.0
  %307 = vmatpush2.msra.mxu0 %v180
  %308 = vmatprep.mubr.f32.mxu0 %v150
  %309 = vmatmul.mubr.f32.gmra.mxu0 %v149
  %v310 = vpop.f32.mrf.mxu0
  %v311 = vadd.f32 0.0, %v310
  %v312 = vpop.f32.mrf.mxu0
  %313 = vmatprep.mubr.f32.mxu0 %v155
  %314 = vmatmul.mubr.f32.gmra.mxu0 %v154
  %v315 = vpop.f32.mrf.mxu0
  %v316 = vadd.f32 0.0, %v315
  %v317 = vpop.f32.mrf.mxu0
  %318 = vmatprep.mubr.f32.mxu0 %v160
  %319 = vmatmul.mubr.f32.gmra.mxu0 %v159
  %v320 = vpop.f32.mrf.mxu0
  %v321 = vadd.f32 0.0, %v320
  %v322 = vpop.f32.mrf.mxu0
  %323 = vdwg.mxu0
  %324 = vmatprep.subr.mxu0 0.0
  %325 = vmatpush1.msra.mxu0 %v211
  %326 = vmatprep.subr.mxu0 0.0
  %327 = vmatpush1.msra.mxu0 %v210
  %328 = vmatprep.subr.mxu0 0.0
  %329 = vmatpush1.msra.mxu0 %v209
  %330 = vmatprep.subr.mxu0 0.0
  %331 = vmatpush1.msra.mxu0 %v208
  %332 = vmatprep.subr.mxu0 0.0
  %333 = vmatpush1.msra.mxu0 %v207
  %334 = vmatprep.subr.mxu0 0.0
  %335 = vmatpush1.msra.mxu0 %v206
  %336 = vmatprep.subr.mxu0 0.0
  %337 = vmatpush1.msra.mxu0 %v205
  %338 = vmatprep.subr.mxu0 0.0
  %339 = vmatpush1.msra.mxu0 %v204
  %340 = vmatprep.subr.mxu0 0.0
  %341 = vmatpush1.msra.mxu0 %v203
  %342 = vmatprep.subr.mxu0 0.0
  %343 = vmatpush1.msra.mxu0 %v202
  %344 = vmatprep.subr.mxu0 0.0
  %345 = vmatpush1.msra.mxu0 %v201
  %346 = vmatprep.subr.mxu0 0.0
  %347 = vmatpush1.msra.mxu0 %v200
  %348 = vmatprep.subr.mxu0 0.0
  %349 = vmatpush1.msra.mxu0 %v199
  %350 = vmatprep.subr.mxu0 0.0
  %351 = vmatpush1.msra.mxu0 %v198
  %352 = vmatprep.subr.mxu0 0.0
  %353 = vmatpush1.msra.mxu0 %v197
  %354 = vmatprep.subr.mxu0 0.0
  %355 = vmatpush1.msra.mxu0 %v196
  %356 = vmatprep.subr.mxu0 0.0
  %357 = vmatpush2.msra.mxu0 %v227
  %358 = vmatprep.subr.mxu0 0.0
  %359 = vmatpush2.msra.mxu0 %v226
  %360 = vmatprep.subr.mxu0 0.0
  %361 = vmatpush2.msra.mxu0 %v225
  %362 = vmatprep.subr.mxu0 0.0
  %363 = vmatpush2.msra.mxu0 %v224
  %364 = vmatprep.subr.mxu0 0.0
  %365 = vmatpush2.msra.mxu0 %v223
  %366 = vmatprep.subr.mxu0 0.0
  %367 = vmatpush2.msra.mxu0 %v222
  %368 = vmatprep.subr.mxu0 0.0
  %369 = vmatpush2.msra.mxu0 %v221
  %370 = vmatprep.subr.mxu0 0.0
  %371 = vmatpush2.msra.mxu0 %v220
  %372 = vmatprep.subr.mxu0 0.0
  %373 = vmatpush2.msra.mxu0 %v219
  %374 = vmatprep.subr.mxu0 0.0
  %375 = vmatpush2.msra.mxu0 %v218
  %376 = vmatprep.subr.mxu0 0.0
  %377 = vmatpush2.msra.mxu0 %v217
  %378 = vmatprep.subr.mxu0 0.0
  %379 = vmatpush2.msra.mxu0 %v216
  %380 = vmatprep.subr.mxu0 0.0
  %381 = vmatpush2.msra.mxu0 %v215
  %382 = vmatprep.subr.mxu0 0.0
  %383 = vmatpush2.msra.mxu0 %v214
  %384 = vmatprep.subr.mxu0 0.0
  %385 = vmatpush2.msra.mxu0 %v213
  %386 = vmatprep.subr.mxu0 0.0
  %387 = vmatpush2.msra.mxu0 %v212
  %388 = vmatprep.mubr.f32.mxu0 %v152
  %389 = vmatmul.mubr.f32.gmra.mxu0 %v151
  %v390 = vpop.f32.mrf.mxu0
  %v391 = vadd.f32 %v311, %v390
  %v392 = vpop.f32.mrf.mxu0
  %393 = vmatprep.mubr.f32.mxu0 %v157
  %394 = vmatmul.mubr.f32.gmra.mxu0 %v156
  %v395 = vpop.f32.mrf.mxu0
  %v396 = vadd.f32 %v316, %v395
  %v397 = vpop.f32.mrf.mxu0
  %398 = vmatprep.mubr.f32.mxu0 %v162
  %399 = vmatmul.mubr.f32.gmra.mxu0 %v161
  %v400 = vpop.f32.mrf.mxu0
  %v401 = vadd.f32 %v321, %v400
  %v402 = vpop.f32.mrf.mxu0
  %403 = vdwg.mxu0
  %404 = vmatprep.subr.mxu0 0.0
  %405 = vmatpush1.msra.mxu0 %v243
  %406 = vmatprep.subr.mxu0 0.0
  %407 = vmatpush1.msra.mxu0 %v242
  %408 = vmatprep.subr.mxu0 0.0
  %409 = vmatpush1.msra.mxu0 %v241
  %410 = vmatprep.subr.mxu0 0.0
  %411 = vmatpush1.msra.mxu0 %v240
  %412 = vmatprep.subr.mxu0 0.0
  %413 = vmatpush1.msra.mxu0 %v239
  %414 = vmatprep.subr.mxu0 0.0
  %415 = vmatpush1.msra.mxu0 %v238
  %416 = vmatprep.subr.mxu0 0.0
  %417 = vmatpush1.msra.mxu0 %v237
  %418 = vmatprep.subr.mxu0 0.0
  %419 = vmatpush1.msra.mxu0 %v236
  %420 = vmatprep.subr.mxu0 0.0
  %421 = vmatpush1.msra.mxu0 %v235
  %422 = vmatprep.subr.mxu0 0.0
  %423 = vmatpush1.msra.mxu0 %v234
  %424 = vmatprep.subr.mxu0 0.0
  %425 = vmatpush1.msra.mxu0 %v233
  %426 = vmatprep.subr.mxu0 0.0
  %427 = vmatpush1.msra.mxu0 %v232
  %428 = vmatprep.subr.mxu0 0.0
  %429 = vmatpush1.msra.mxu0 %v231
  %430 = vmatprep.subr.mxu0 0.0
  %431 = vmatpush1.msra.mxu0 %v230
  %432 = vmatprep.subr.mxu0 0.0
  %433 = vmatpush1.msra.mxu0 %v229
  %434 = vmatprep.subr.mxu0 0.0
  %435 = vmatpush1.msra.mxu0 %v228
  %436 = vmatprep.subr.mxu0 0.0
  %437 = vmatpush2.msra.mxu0 0.0
  %438 = vmatprep.subr.mxu0 0.0
  %439 = vmatpush2.msra.mxu0 0.0
  %440 = vmatprep.subr.mxu0 0.0
  %441 = vmatpush2.msra.mxu0 0.0
  %442 = vmatprep.subr.mxu0 0.0
  %443 = vmatpush2.msra.mxu0 0.0
  %444 = vmatprep.subr.mxu0 0.0
  %445 = vmatpush2.msra.mxu0 0.0
  %446 = vmatprep.subr.mxu0 0.0
  %447 = vmatpush2.msra.mxu0 0.0
  %448 = vmatprep.subr.mxu0 0.0
  %449 = vmatpush2.msra.mxu0 0.0
  %450 = vmatprep.subr.mxu0 0.0
  %451 = vmatpush2.msra.mxu0 0.0
  %452 = vmatprep.subr.mxu0 0.0
  %453 = vmatpush2.msra.mxu0 0.0
  %454 = vmatprep.subr.mxu0 0.0
  %455 = vmatpush2.msra.mxu0 0.0
  %456 = vmatprep.subr.mxu0 0.0
  %457 = vmatpush2.msra.mxu0 0.0
  %458 = vmatprep.subr.mxu0 0.0
  %459 = vmatpush2.msra.mxu0 0.0
  %460 = vmatprep.subr.mxu0 0.0
  %461 = vmatpush2.msra.mxu0 0.0
  %462 = vmatprep.subr.mxu0 0.0
  %463 = vmatpush2.msra.mxu0 0.0
  %464 = vmatprep.subr.mxu0 0.0
  %465 = vmatpush2.msra.mxu0 0.0
  %466 = vmatprep.subr.mxu0 0.0
  %467 = vmatpush2.msra.mxu0 0.0
  %468 = vmatprep.mubr.f32.mxu0 0.0
  %469 = vmatmul.mubr.f32.gmra.mxu0 %v153
  %v470 = vpop.f32.mrf.mxu0
  %v471 = vadd.f32 %v391, %v470
  %v472 = vpop.f32.mrf.mxu0
  %473 = vmatprep.mubr.f32.mxu0 0.0
  %474 = vmatmul.mubr.f32.gmra.mxu0 %v158
  %v475 = vpop.f32.mrf.mxu0
  %v476 = vadd.f32 %v396, %v475
  %v477 = vpop.f32.mrf.mxu0
  %478 = vmatprep.mubr.f32.mxu0 0.0
  %479 = vmatmul.mubr.f32.gmra.mxu0 %v163
  %v480 = vpop.f32.mrf.mxu0
  %v481 = vadd.f32 %v401, %v480
  %v482 = vpop.f32.mrf.mxu0
  %483 = vdwg.mxu0
  %v484 = vld [vmem:[%s3] sm:$0x1]
  %v485 = vld [vmem:[%s3 + $0x1] sm:$0x1]
  %486 = vadd.xlane.f32.xlu0 %v471
  %v487 = vpop.xlane.xlu0 %486
  %488 = vadd.xlane.f32.xlu0 %v476
  %v489 = vpop.xlane.xlu0 %488
  %490 = vadd.xlane.f32.xlu0 %v481
  %v491 = vpop.xlane.xlu0 %490
  %v492 = vmul.f32 %v487, 0.03125
  %v493 = vmul.f32 %v489, 0.03125
  %v494 = vmul.f32 %v491, 0.03125
  %v495 = vsub.f32 %v471, %v492
  %v496 = vsub.f32 %v476, %v493
  %v497 = vsub.f32 %v481, %v494
  %v498 = vmul.f32 %v495, %v23
  %v499 = vmul.f32 %v496, %v23
  %v500 = vmul.f32 %v497, %v23
  %v501 = vmul.f32 %v498, %v498
  %v502 = vmul.f32 %v499, %v499
  %v503 = vmul.f32 %v500, %v500
  %504 = vadd.xlane.f32.xlu0 %v501
  %v505 = vpop.xlane.xlu0 %504
  %506 = vadd.xlane.f32.xlu0 %v502
  %v507 = vpop.xlane.xlu0 %506
  %508 = vadd.xlane.f32.xlu0 %v503
  %v509 = vpop.xlane.xlu0 %508
  %v510 = vmul.f32 %v505, 0.03125
  %v511 = vmul.f32 %v507, 0.03125
  %v512 = vmul.f32 %v509, 0.03125
  %v513 = vadd.f32 %v510, 1e-06
  %v514 = vadd.f32 %v511, 1e-06
  %v515 = vadd.f32 %v512, 1e-06
  %v516 = vrsqrt.pop %v513
  %v517 = vrsqrt.pop %v514
  %v518 = vrsqrt.pop %v515
  %v519 = vmul.f32 %v498, %v516
  %v520 = vmul.f32 %v499, %v517
  %v521 = vmul.f32 %v500, %v518
  %v522 = vlaneseq
  %v523 = vshrl.u32 %v522, 7
  %v524 = vsub.s32 0, %v523
  %v525 = vrot.slane %v484, %v524
  %v526 = vmul.f32 %v519, %v525
  %v527 = vmul.f32 %v520, %v525
  %v528 = vmul.f32 %v521, %v525
  %v529 = vlaneseq
  %v530 = vshrl.u32 %v529, 7
  %v531 = vsub.s32 0, %v530
  %v532 = vrot.slane %v485, %v531
  %v533 = vadd.f32 %v526, %v532
  %v534 = vadd.f32 %v527, %v532
  %v535 = vadd.f32 %v528, %v532
  %v536 = vld [vmem:[%s2] sm:$0xff]
  %v537 = vld [vmem:[%s2 + $0x8] sm:$0xff]
  %v538 = vld [vmem:[%s2 + $0x10] sm:$0xff]
  %v539 = vld [vmem:[%s2 + $0x18] sm:$0xff]
  %v540 = vld [vmem:[%s2 + $0x20] sm:$0xff]
  %v541 = vld [vmem:[%s2 + $0x28] sm:$0xff]
  %v542 = vld [vmem:[%s2 + $0x30] sm:$0xff]
  %v543 = vld [vmem:[%s2 + $0x38] sm:$0xff]
  %v544 = vld [vmem:[%s2 + $0x40] sm:$0xff]
  %v545 = vld [vmem:[%s2 + $0x48] sm:$0xff]
  %v546 = vld [vmem:[%s2 + $0x50] sm:$0xff]
  %v547 = vld [vmem:[%s2 + $0x58] sm:$0xff]
  %v548 = vld [vmem:[%s2 + $0x60] sm:$0xff]
  %v549 = vld [vmem:[%s2 + $0x68] sm:$0xff]
  %v550 = vld [vmem:[%s2 + $0x70] sm:$0xff]
  %v551 = vld [vmem:[%s2 + $0x78] sm:$0xff]
  %v552 = vld [vmem:[%s3 + $0x2] sm:$0x1]
  %v553 = vlaneseq
  %v554 = vshrl.u32 %v553, 7
  %v555 = vsub.s32 0, %v554
  %v556 = vrot.slane %v552, %v555
  %557 = vmatprep.subr.mxu0 0.0
  %558 = vmatpush1.msra.mxu0 %v551
  %559 = vmatprep.subr.mxu0 0.0
  %560 = vmatpush1.msra.mxu0 %v550
  %561 = vmatprep.subr.mxu0 0.0
  %562 = vmatpush1.msra.mxu0 %v549
  %563 = vmatprep.subr.mxu0 0.0
  %564 = vmatpush1.msra.mxu0 %v548
  %565 = vmatprep.subr.mxu0 0.0
  %566 = vmatpush1.msra.mxu0 %v547
  %567 = vmatprep.subr.mxu0 0.0
  %568 = vmatpush1.msra.mxu0 %v546
  %569 = vmatprep.subr.mxu0 0.0
  %570 = vmatpush1.msra.mxu0 %v545
  %571 = vmatprep.subr.mxu0 0.0
  %572 = vmatpush1.msra.mxu0 %v544
  %573 = vmatprep.subr.mxu0 0.0
  %574 = vmatpush1.msra.mxu0 %v543
  %575 = vmatprep.subr.mxu0 0.0
  %576 = vmatpush1.msra.mxu0 %v542
  %577 = vmatprep.subr.mxu0 0.0
  %578 = vmatpush1.msra.mxu0 %v541
  %579 = vmatprep.subr.mxu0 0.0
  %580 = vmatpush1.msra.mxu0 %v540
  %581 = vmatprep.subr.mxu0 0.0
  %582 = vmatpush1.msra.mxu0 %v539
  %583 = vmatprep.subr.mxu0 0.0
  %584 = vmatpush1.msra.mxu0 %v538
  %585 = vmatprep.subr.mxu0 0.0
  %586 = vmatpush1.msra.mxu0 %v537
  %587 = vmatprep.subr.mxu0 0.0
  %588 = vmatpush1.msra.mxu0 %v536
  %589 = vmatprep.subr.mxu0 0.0
  %590 = vmatpush2.msra.mxu0 0.0
  %591 = vmatprep.subr.mxu0 0.0
  %592 = vmatpush2.msra.mxu0 0.0
  %593 = vmatprep.subr.mxu0 0.0
  %594 = vmatpush2.msra.mxu0 0.0
  %595 = vmatprep.subr.mxu0 0.0
  %596 = vmatpush2.msra.mxu0 0.0
  %597 = vmatprep.subr.mxu0 0.0
  %598 = vmatpush2.msra.mxu0 0.0
  %599 = vmatprep.subr.mxu0 0.0
  %600 = vmatpush2.msra.mxu0 0.0
  %601 = vmatprep.subr.mxu0 0.0
  %602 = vmatpush2.msra.mxu0 0.0
  %603 = vmatprep.subr.mxu0 0.0
  %604 = vmatpush2.msra.mxu0 0.0
  %605 = vmatprep.subr.mxu0 0.0
  %606 = vmatpush2.msra.mxu0 0.0
  %607 = vmatprep.subr.mxu0 0.0
  %608 = vmatpush2.msra.mxu0 0.0
  %609 = vmatprep.subr.mxu0 0.0
  %610 = vmatpush2.msra.mxu0 0.0
  %611 = vmatprep.subr.mxu0 0.0
  %612 = vmatpush2.msra.mxu0 0.0
  %613 = vmatprep.subr.mxu0 0.0
  %614 = vmatpush2.msra.mxu0 0.0
  %615 = vmatprep.subr.mxu0 0.0
  %616 = vmatpush2.msra.mxu0 0.0
  %617 = vmatprep.subr.mxu0 0.0
  %618 = vmatpush2.msra.mxu0 0.0
  %619 = vmatprep.subr.mxu0 0.0
  %620 = vmatpush2.msra.mxu0 0.0
  %621 = vmatprep.mubr.f32.mxu0 0.0
  %622 = vmatmul.mubr.f32.gmra.mxu0 %v533
  %v623 = vpop.f32.mrf.mxu0
  %v624 = vadd.f32 %v556, %v623
  %v625 = vpop.f32.mrf.mxu0
  %626 = vmatprep.mubr.f32.mxu0 0.0
  %627 = vmatmul.mubr.f32.gmra.mxu0 %v534
  %v628 = vpop.f32.mrf.mxu0
  %v629 = vadd.f32 %v556, %v628
  %v630 = vpop.f32.mrf.mxu0
  %631 = vmatprep.mubr.f32.mxu0 0.0
  %632 = vmatmul.mubr.f32.gmra.mxu0 %v535
  %v633 = vpop.f32.mrf.mxu0
  %v634 = vadd.f32 %v556, %v633
  %v635 = vpop.f32.mrf.mxu0
  %636 = vdwg.mxu0
  %637 = vrot.lane.b32.xlu0 %v624, 64
  %v638 = vpop.permute.xlu0 %637
  %639 = vrot.lane.b32.xlu0 %v629, 64
  %v640 = vpop.permute.xlu0 %639
  %641 = vrot.lane.b32.xlu0 %v634, 64
  %v642 = vpop.permute.xlu0 %641
  %v643 = vmul.f32 %v624, %v28
  %v644 = vmul.f32 %v629, %v28
  %v645 = vmul.f32 %v634, %v28
  %646 = vmatprep.subr.mxu0 0.0
  %647 = vmatpush1.xpose.msra.mxu0 0.0
  %648 = vmatprep.subr.mxu0 0.0
  %649 = vmatpush1.xpose.msra.mxu0 0.0
  %650 = vmatprep.subr.mxu0 0.0
  %651 = vmatpush1.xpose.msra.mxu0 0.0
  %652 = vmatprep.subr.mxu0 0.0
  %653 = vmatpush1.xpose.msra.mxu0 0.0
  %654 = vmatprep.subr.mxu0 0.0
  %655 = vmatpush1.xpose.msra.mxu0 0.0
  %656 = vmatprep.subr.mxu0 0.0
  %657 = vmatpush1.xpose.msra.mxu0 0.0
  %658 = vmatprep.subr.mxu0 0.0
  %659 = vmatpush1.xpose.msra.mxu0 0.0
  %660 = vmatprep.subr.mxu0 0.0
  %661 = vmatpush1.xpose.msra.mxu0 0.0
  %662 = vmatprep.subr.mxu0 0.0
  %663 = vmatpush1.xpose.msra.mxu0 0.0
  %664 = vmatprep.subr.mxu0 0.0
  %665 = vmatpush1.xpose.msra.mxu0 0.0
  %666 = vmatprep.subr.mxu0 0.0
  %667 = vmatpush1.xpose.msra.mxu0 0.0
  %668 = vmatprep.subr.mxu0 0.0
  %669 = vmatpush1.xpose.msra.mxu0 0.0
  %670 = vmatprep.subr.mxu0 0.0
  %671 = vmatpush1.xpose.msra.mxu0 0.0
  %672 = vmatprep.subr.mxu0 0.0
  %673 = vmatpush1.xpose.msra.mxu0 %v642
  %674 = vmatprep.subr.mxu0 0.0
  %675 = vmatpush1.xpose.msra.mxu0 %v640
  %676 = vmatprep.subr.mxu0 0.0
  %677 = vmatpush1.xpose.msra.mxu0 %v638
  %678 = vmatprep.subr.mxu0 0.0
  %679 = vmatpush2.xpose.msra.mxu0 0.0
  %680 = vmatprep.subr.mxu0 0.0
  %681 = vmatpush2.xpose.msra.mxu0 0.0
  %682 = vmatprep.subr.mxu0 0.0
  %683 = vmatpush2.xpose.msra.mxu0 0.0
  %684 = vmatprep.subr.mxu0 0.0
  %685 = vmatpush2.xpose.msra.mxu0 0.0
  %686 = vmatprep.subr.mxu0 0.0
  %687 = vmatpush2.xpose.msra.mxu0 0.0
  %688 = vmatprep.subr.mxu0 0.0
  %689 = vmatpush2.xpose.msra.mxu0 0.0
  %690 = vmatprep.subr.mxu0 0.0
  %691 = vmatpush2.xpose.msra.mxu0 0.0
  %692 = vmatprep.subr.mxu0 0.0
  %693 = vmatpush2.xpose.msra.mxu0 0.0
  %694 = vmatprep.subr.mxu0 0.0
  %695 = vmatpush2.xpose.msra.mxu0 0.0
  %696 = vmatprep.subr.mxu0 0.0
  %697 = vmatpush2.xpose.msra.mxu0 0.0
  %698 = vmatprep.subr.mxu0 0.0
  %699 = vmatpush2.xpose.msra.mxu0 0.0
  %700 = vmatprep.subr.mxu0 0.0
  %701 = vmatpush2.xpose.msra.mxu0 0.0
  %702 = vmatprep.subr.mxu0 0.0
  %703 = vmatpush2.xpose.msra.mxu0 0.0
  %704 = vmatprep.subr.mxu0 0.0
  %705 = vmatpush2.xpose.msra.mxu0 0.0
  %706 = vmatprep.subr.mxu0 0.0
  %707 = vmatpush2.xpose.msra.mxu0 0.0
  %708 = vmatprep.subr.mxu0 0.0
  %709 = vmatpush2.xpose.msra.mxu0 0.0
  %710 = vmatprep.mubr.f32.mxu0 0.0
  %711 = vmatmul.mubr.f32.gmra.mxu0 %v643
  %v712 = vpop.f32.mrf.mxu0
  %v713 = vadd.f32 %v146, %v712
  %v714 = vpop.f32.mrf.mxu0
  %715 = vmatprep.mubr.f32.mxu0 0.0
  %716 = vmatmul.mubr.f32.gmra.mxu0 %v644
  %v717 = vpop.f32.mrf.mxu0
  %v718 = vadd.f32 %v147, %v717
  %v719 = vpop.f32.mrf.mxu0
  %720 = vmatprep.mubr.f32.mxu0 0.0
  %721 = vmatmul.mubr.f32.gmra.mxu0 %v645
  %v722 = vpop.f32.mrf.mxu0
  %v723 = vadd.f32 %v148, %v722
  %v724 = vpop.f32.mrf.mxu0
  %725 = vdwg.mxu0
  %vm726 = vcmask 195584
  %v727 = vsel %vm726, %v713, -inf
  %728 = vmax.xlane.f32.xlu0 %v727
  %v729 = vpop.xlane.xlu0 %728
  %v730 = vsel %vm726, %v718, -inf
  %731 = vmax.xlane.f32.xlu0 %v730
  %v732 = vpop.xlane.xlu0 %731
  %v733 = vsel %vm726, %v723, -inf
  %734 = vmax.xlane.f32.xlu0 %v733
  %v735 = vpop.xlane.xlu0 %734
  %v736 = vsub.f32 %v713, %v729
  %v737 = vsub.f32 %v718, %v732
  %v738 = vsub.f32 %v723, %v735
  %v739 = vmul.f32 %v736, 1.442695
  %v740 = vpow.pop %v739
  %v741 = vmul.f32 %v737, 1.442695
  %v742 = vpow.pop %v741
  %v743 = vmul.f32 %v738, 1.442695
  %v744 = vpow.pop %v743
  %v745 = vsel %vm726, %v740, 0.0
  %746 = vadd.xlane.f32.xlu0 %v745
  %v747 = vpop.xlane.xlu0 %746
  %v748 = vsel %vm726, %v742, 0.0
  %749 = vadd.xlane.f32.xlu0 %v748
  %v750 = vpop.xlane.xlu0 %749
  %v751 = vsel %vm726, %v744, 0.0
  %752 = vadd.xlane.f32.xlu0 %v751
  %v753 = vpop.xlane.xlu0 %752
  %v754 = vrcp.pop %v747
  %v755 = vrcp.pop %v750
  %v756 = vrcp.pop %v753
  %v757 = vmul.f32 %v740, %v754
  %v758 = vmul.f32 %v742, %v755
  %v759 = vmul.f32 %v744, %v756
  %v760 = vmul.f32 %v624, %v37
  %v761 = vmul.f32 %v629, %v37
  %v762 = vmul.f32 %v634, %v37
  %v763 = vmul.f32 %v624, %v32
  %v764 = vmul.f32 %v629, %v32
  %v765 = vmul.f32 %v634, %v32
  %766 = vmatprep.subr.mxu0 0.0
  %767 = vmatpush1.xpose.msra.mxu0 0.0
  %768 = vmatprep.subr.mxu0 0.0
  %769 = vmatpush1.xpose.msra.mxu0 0.0
  %770 = vmatprep.subr.mxu0 0.0
  %771 = vmatpush1.xpose.msra.mxu0 0.0
  %772 = vmatprep.subr.mxu0 0.0
  %773 = vmatpush1.xpose.msra.mxu0 0.0
  %774 = vmatprep.subr.mxu0 0.0
  %775 = vmatpush1.xpose.msra.mxu0 0.0
  %776 = vmatprep.subr.mxu0 0.0
  %777 = vmatpush1.xpose.msra.mxu0 0.0
  %778 = vmatprep.subr.mxu0 0.0
  %779 = vmatpush1.xpose.msra.mxu0 0.0
  %780 = vmatprep.subr.mxu0 0.0
  %781 = vmatpush1.xpose.msra.mxu0 0.0
  %782 = vmatprep.subr.mxu0 0.0
  %783 = vmatpush1.xpose.msra.mxu0 0.0
  %784 = vmatprep.subr.mxu0 0.0
  %785 = vmatpush1.xpose.msra.mxu0 0.0
  %786 = vmatprep.subr.mxu0 0.0
  %787 = vmatpush1.xpose.msra.mxu0 0.0
  %788 = vmatprep.subr.mxu0 0.0
  %789 = vmatpush1.xpose.msra.mxu0 0.0
  %790 = vmatprep.subr.mxu0 0.0
  %791 = vmatpush1.xpose.msra.mxu0 0.0
  %792 = vmatprep.subr.mxu0 0.0
  %793 = vmatpush1.xpose.msra.mxu0 %v642
  %794 = vmatprep.subr.mxu0 0.0
  %795 = vmatpush1.xpose.msra.mxu0 %v640
  %796 = vmatprep.subr.mxu0 0.0
  %797 = vmatpush1.xpose.msra.mxu0 %v638
  %798 = vmatprep.subr.mxu0 0.0
  %799 = vmatpush2.xpose.msra.mxu0 0.0
  %800 = vmatprep.subr.mxu0 0.0
  %801 = vmatpush2.xpose.msra.mxu0 0.0
  %802 = vmatprep.subr.mxu0 0.0
  %803 = vmatpush2.xpose.msra.mxu0 0.0
  %804 = vmatprep.subr.mxu0 0.0
  %805 = vmatpush2.xpose.msra.mxu0 0.0
  %806 = vmatprep.subr.mxu0 0.0
  %807 = vmatpush2.xpose.msra.mxu0 0.0
  %808 = vmatprep.subr.mxu0 0.0
  %809 = vmatpush2.xpose.msra.mxu0 0.0
  %810 = vmatprep.subr.mxu0 0.0
  %811 = vmatpush2.xpose.msra.mxu0 0.0
  %812 = vmatprep.subr.mxu0 0.0
  %813 = vmatpush2.xpose.msra.mxu0 0.0
  %814 = vmatprep.subr.mxu0 0.0
  %815 = vmatpush2.xpose.msra.mxu0 0.0
  %816 = vmatprep.subr.mxu0 0.0
  %817 = vmatpush2.xpose.msra.mxu0 0.0
  %818 = vmatprep.subr.mxu0 0.0
  %819 = vmatpush2.xpose.msra.mxu0 0.0
  %820 = vmatprep.subr.mxu0 0.0
  %821 = vmatpush2.xpose.msra.mxu0 0.0
  %822 = vmatprep.subr.mxu0 0.0
  %823 = vmatpush2.xpose.msra.mxu0 0.0
  %824 = vmatprep.subr.mxu0 0.0
  %825 = vmatpush2.xpose.msra.mxu0 0.0
  %826 = vmatprep.subr.mxu0 0.0
  %827 = vmatpush2.xpose.msra.mxu0 0.0
  %828 = vmatprep.subr.mxu0 0.0
  %829 = vmatpush2.xpose.msra.mxu0 0.0
  %830 = vmatprep.mubr.f32.mxu0 0.0
  %831 = vmatmul.mubr.f32.gmra.mxu0 %v763
  %v832 = vpop.f32.mrf.mxu0
  %v833 = vadd.f32 %v146, %v832
  %v834 = vpop.f32.mrf.mxu0
  %835 = vmatprep.mubr.f32.mxu0 0.0
  %836 = vmatmul.mubr.f32.gmra.mxu0 %v764
  %v837 = vpop.f32.mrf.mxu0
  %v838 = vadd.f32 %v147, %v837
  %v839 = vpop.f32.mrf.mxu0
  %840 = vmatprep.mubr.f32.mxu0 0.0
  %841 = vmatmul.mubr.f32.gmra.mxu0 %v765
  %v842 = vpop.f32.mrf.mxu0
  %v843 = vadd.f32 %v148, %v842
  %v844 = vpop.f32.mrf.mxu0
  %845 = vdwg.mxu0
  %v846 = vsel %vm726, %v833, -inf
  %847 = vmax.xlane.f32.xlu0 %v846
  %v848 = vpop.xlane.xlu0 %847
  %v849 = vsel %vm726, %v838, -inf
  %850 = vmax.xlane.f32.xlu0 %v849
  %v851 = vpop.xlane.xlu0 %850
  %v852 = vsel %vm726, %v843, -inf
  %853 = vmax.xlane.f32.xlu0 %v852
  %v854 = vpop.xlane.xlu0 %853
  %v855 = vsub.f32 %v833, %v848
  %v856 = vsub.f32 %v838, %v851
  %v857 = vsub.f32 %v843, %v854
  %v858 = vmul.f32 %v855, 1.442695
  %v859 = vpow.pop %v858
  %v860 = vmul.f32 %v856, 1.442695
  %v861 = vpow.pop %v860
  %v862 = vmul.f32 %v857, 1.442695
  %v863 = vpow.pop %v862
  %v864 = vsel %vm726, %v859, 0.0
  %865 = vadd.xlane.f32.xlu0 %v864
  %v866 = vpop.xlane.xlu0 %865
  %v867 = vsel %vm726, %v861, 0.0
  %868 = vadd.xlane.f32.xlu0 %v867
  %v869 = vpop.xlane.xlu0 %868
  %v870 = vsel %vm726, %v863, 0.0
  %871 = vadd.xlane.f32.xlu0 %v870
  %v872 = vpop.xlane.xlu0 %871
  %v873 = vrcp.pop %v866
  %v874 = vrcp.pop %v869
  %v875 = vrcp.pop %v872
  %v876 = vmul.f32 %v859, %v873
  %v877 = vmul.f32 %v861, %v874
  %v878 = vmul.f32 %v863, %v875
  %v879 = vmul.f32 %v624, %v42
  %v880 = vmul.f32 %v629, %v42
  %v881 = vmul.f32 %v634, %v42
  %v883 = vsel %vm726, %v876, 0
  %v886 = vsel %vm726, %v877, 0
  %v889 = vsel %vm726, %v878, 0
  %891 = vmatprep.subr.mxu0 0.0
  %892 = vmatpush1.msra.mxu0 0.0
  %893 = vmatprep.subr.mxu0 0.0
  %894 = vmatpush1.msra.mxu0 0.0
  %895 = vmatprep.subr.mxu0 0.0
  %896 = vmatpush1.msra.mxu0 0.0
  %897 = vmatprep.subr.mxu0 0.0
  %898 = vmatpush1.msra.mxu0 0.0
  %899 = vmatprep.subr.mxu0 0.0
  %900 = vmatpush1.msra.mxu0 0.0
  %901 = vmatprep.subr.mxu0 0.0
  %902 = vmatpush1.msra.mxu0 0.0
  %903 = vmatprep.subr.mxu0 0.0
  %904 = vmatpush1.msra.mxu0 0.0
  %905 = vmatprep.subr.mxu0 0.0
  %906 = vmatpush1.msra.mxu0 0.0
  %907 = vmatprep.subr.mxu0 0.0
  %908 = vmatpush1.msra.mxu0 0.0
  %909 = vmatprep.subr.mxu0 0.0
  %910 = vmatpush1.msra.mxu0 0.0
  %911 = vmatprep.subr.mxu0 0.0
  %912 = vmatpush1.msra.mxu0 0.0
  %913 = vmatprep.subr.mxu0 0.0
  %914 = vmatpush1.msra.mxu0 0.0
  %915 = vmatprep.subr.mxu0 0.0
  %916 = vmatpush1.msra.mxu0 0.0
  %917 = vmatprep.subr.mxu0 0.0
  %918 = vmatpush1.msra.mxu0 %v881
  %919 = vmatprep.subr.mxu0 0.0
  %920 = vmatpush1.msra.mxu0 %v880
  %921 = vmatprep.subr.mxu0 0.0
  %922 = vmatpush1.msra.mxu0 %v879
  %923 = vmatprep.subr.mxu0 0.0
  %924 = vmatpush2.msra.mxu0 0.0
  %925 = vmatprep.subr.mxu0 0.0
  %926 = vmatpush2.msra.mxu0 0.0
  %927 = vmatprep.subr.mxu0 0.0
  %928 = vmatpush2.msra.mxu0 0.0
  %929 = vmatprep.subr.mxu0 0.0
  %930 = vmatpush2.msra.mxu0 0.0
  %931 = vmatprep.subr.mxu0 0.0
  %932 = vmatpush2.msra.mxu0 0.0
  %933 = vmatprep.subr.mxu0 0.0
  %934 = vmatpush2.msra.mxu0 0.0
  %935 = vmatprep.subr.mxu0 0.0
  %936 = vmatpush2.msra.mxu0 0.0
  %937 = vmatprep.subr.mxu0 0.0
  %938 = vmatpush2.msra.mxu0 0.0
  %939 = vmatprep.subr.mxu0 0.0
  %940 = vmatpush2.msra.mxu0 0.0
  %941 = vmatprep.subr.mxu0 0.0
  %942 = vmatpush2.msra.mxu0 0.0
  %943 = vmatprep.subr.mxu0 0.0
  %944 = vmatpush2.msra.mxu0 0.0
  %945 = vmatprep.subr.mxu0 0.0
  %946 = vmatpush2.msra.mxu0 0.0
  %947 = vmatprep.subr.mxu0 0.0
  %948 = vmatpush2.msra.mxu0 0.0
  %949 = vmatprep.subr.mxu0 0.0
  %950 = vmatpush2.msra.mxu0 0.0
  %951 = vmatprep.subr.mxu0 0.0
  %952 = vmatpush2.msra.mxu0 0.0
  %953 = vmatprep.subr.mxu0 0.0
  %954 = vmatpush2.msra.mxu0 0.0
  %955 = vmatprep.mubr.f32.mxu0 0.0
  %956 = vmatmul.mubr.f32.gmra.mxu0 %v883
  %v957 = vpop.f32.mrf.mxu0
  %v958 = vadd.f32 0.0, %v957
  %v959 = vpop.f32.mrf.mxu0
  %960 = vmatprep.mubr.f32.mxu0 0.0
  %961 = vmatmul.mubr.f32.gmra.mxu0 %v886
  %v962 = vpop.f32.mrf.mxu0
  %v963 = vadd.f32 0.0, %v962
  %v964 = vpop.f32.mrf.mxu0
  %965 = vmatprep.mubr.f32.mxu0 0.0
  %966 = vmatmul.mubr.f32.gmra.mxu0 %v889
  %v967 = vpop.f32.mrf.mxu0
  %v968 = vadd.f32 0.0, %v967
  %v969 = vpop.f32.mrf.mxu0
  %970 = vdwg.mxu0
  %v972 = vsel %vm726, %v757, 0
  %v975 = vsel %vm726, %v758, 0
  %v978 = vsel %vm726, %v759, 0
  %980 = vmatprep.subr.mxu0 0.0
  %981 = vmatpush1.msra.mxu0 0.0
  %982 = vmatprep.subr.mxu0 0.0
  %983 = vmatpush1.msra.mxu0 0.0
  %984 = vmatprep.subr.mxu0 0.0
  %985 = vmatpush1.msra.mxu0 0.0
  %986 = vmatprep.subr.mxu0 0.0
  %987 = vmatpush1.msra.mxu0 0.0
  %988 = vmatprep.subr.mxu0 0.0
  %989 = vmatpush1.msra.mxu0 0.0
  %990 = vmatprep.subr.mxu0 0.0
  %991 = vmatpush1.msra.mxu0 0.0
  %992 = vmatprep.subr.mxu0 0.0
  %993 = vmatpush1.msra.mxu0 0.0
  %994 = vmatprep.subr.mxu0 0.0
  %995 = vmatpush1.msra.mxu0 0.0
  %996 = vmatprep.subr.mxu0 0.0
  %997 = vmatpush1.msra.mxu0 0.0
  %998 = vmatprep.subr.mxu0 0.0
  %999 = vmatpush1.msra.mxu0 0.0
  %1000 = vmatprep.subr.mxu0 0.0
  %1001 = vmatpush1.msra.mxu0 0.0
  %1002 = vmatprep.subr.mxu0 0.0
  %1003 = vmatpush1.msra.mxu0 0.0
  %1004 = vmatprep.subr.mxu0 0.0
  %1005 = vmatpush1.msra.mxu0 0.0
  %1006 = vmatprep.subr.mxu0 0.0
  %1007 = vmatpush1.msra.mxu0 %v762
  %1008 = vmatprep.subr.mxu0 0.0
  %1009 = vmatpush1.msra.mxu0 %v761
  %1010 = vmatprep.subr.mxu0 0.0
  %1011 = vmatpush1.msra.mxu0 %v760
  %1012 = vmatprep.subr.mxu0 0.0
  %1013 = vmatpush2.msra.mxu0 0.0
  %1014 = vmatprep.subr.mxu0 0.0
  %1015 = vmatpush2.msra.mxu0 0.0
  %1016 = vmatprep.subr.mxu0 0.0
  %1017 = vmatpush2.msra.mxu0 0.0
  %1018 = vmatprep.subr.mxu0 0.0
  %1019 = vmatpush2.msra.mxu0 0.0
  %1020 = vmatprep.subr.mxu0 0.0
  %1021 = vmatpush2.msra.mxu0 0.0
  %1022 = vmatprep.subr.mxu0 0.0
  %1023 = vmatpush2.msra.mxu0 0.0
  %1024 = vmatprep.subr.mxu0 0.0
  %1025 = vmatpush2.msra.mxu0 0.0
  %1026 = vmatprep.subr.mxu0 0.0
  %1027 = vmatpush2.msra.mxu0 0.0
  %1028 = vmatprep.subr.mxu0 0.0
  %1029 = vmatpush2.msra.mxu0 0.0
  %1030 = vmatprep.subr.mxu0 0.0
  %1031 = vmatpush2.msra.mxu0 0.0
  %1032 = vmatprep.subr.mxu0 0.0
  %1033 = vmatpush2.msra.mxu0 0.0
  %1034 = vmatprep.subr.mxu0 0.0
  %1035 = vmatpush2.msra.mxu0 0.0
  %1036 = vmatprep.subr.mxu0 0.0
  %1037 = vmatpush2.msra.mxu0 0.0
  %1038 = vmatprep.subr.mxu0 0.0
  %1039 = vmatpush2.msra.mxu0 0.0
  %1040 = vmatprep.subr.mxu0 0.0
  %1041 = vmatpush2.msra.mxu0 0.0
  %1042 = vmatprep.subr.mxu0 0.0
  %1043 = vmatpush2.msra.mxu0 0.0
  %1044 = vmatprep.mubr.f32.mxu0 0.0
  %1045 = vmatmul.mubr.f32.gmra.mxu0 %v972
  %v1046 = vpop.f32.mrf.mxu0
  %v1047 = vadd.f32 %v958, %v1046
  %v1048 = vpop.f32.mrf.mxu0
  %1049 = vmatprep.mubr.f32.mxu0 0.0
  %1050 = vmatmul.mubr.f32.gmra.mxu0 %v975
  %v1051 = vpop.f32.mrf.mxu0
  %v1052 = vadd.f32 %v963, %v1051
  %v1053 = vpop.f32.mrf.mxu0
  %1054 = vmatprep.mubr.f32.mxu0 0.0
  %1055 = vmatmul.mubr.f32.gmra.mxu0 %v978
  %v1056 = vpop.f32.mrf.mxu0
  %v1057 = vadd.f32 %v968, %v1056
  %v1058 = vpop.f32.mrf.mxu0
  %1059 = vdwg.mxu0
  %s1060 = scalar_lea.vmem %s2, 128
  %v1061 = vld [vmem:[%s1060] sm:$0xff]
  %v1062 = vld [vmem:[%s1060 + $0x8] sm:$0xff]
  %v1063 = vld [vmem:[%s1060 + $0x10] sm:$0xff]
  %v1064 = vld [vmem:[%s1060 + $0x18] sm:$0xff]
  %v1065 = vld [vmem:[%s1060 + $0x20] sm:$0xff]
  %v1066 = vld [vmem:[%s1060 + $0x28] sm:$0xff]
  %v1067 = vld [vmem:[%s1060 + $0x30] sm:$0xff]
  %v1068 = vld [vmem:[%s1060 + $0x38] sm:$0xff]
  %v1069 = vld [vmem:[%s1060 + $0x40] sm:$0xff]
  %v1070 = vld [vmem:[%s1060 + $0x48] sm:$0xff]
  %v1071 = vld [vmem:[%s1060 + $0x50] sm:$0xff]
  %v1072 = vld [vmem:[%s1060 + $0x58] sm:$0xff]
  %v1073 = vld [vmem:[%s1060 + $0x60] sm:$0xff]
  %v1074 = vld [vmem:[%s1060 + $0x68] sm:$0xff]
  %v1075 = vld [vmem:[%s1060 + $0x70] sm:$0xff]
  %v1076 = vld [vmem:[%s1060 + $0x78] sm:$0xff]
  %v1077 = vld [vmem:[%s3 + $0x4] sm:$0x1]
  %v1078 = vld [vmem:[%s3 + $0x3] sm:$0x1]
  %v1079 = vlaneseq
  %v1080 = vshrl.u32 %v1079, 7
  %v1081 = vsub.s32 0, %v1080
  %v1082 = vrot.slane %v1078, %v1081
  %1083 = vmatprep.subr.mxu0 0.0
  %1084 = vmatpush1.msra.mxu0 %v1076
  %1085 = vmatprep.subr.mxu0 0.0
  %1086 = vmatpush1.msra.mxu0 %v1075
  %1087 = vmatprep.subr.mxu0 0.0
  %1088 = vmatpush1.msra.mxu0 %v1074
  %1089 = vmatprep.subr.mxu0 0.0
  %1090 = vmatpush1.msra.mxu0 %v1073
  %1091 = vmatprep.subr.mxu0 0.0
  %1092 = vmatpush1.msra.mxu0 %v1072
  %1093 = vmatprep.subr.mxu0 0.0
  %1094 = vmatpush1.msra.mxu0 %v1071
  %1095 = vmatprep.subr.mxu0 0.0
  %1096 = vmatpush1.msra.mxu0 %v1070
  %1097 = vmatprep.subr.mxu0 0.0
  %1098 = vmatpush1.msra.mxu0 %v1069
  %1099 = vmatprep.subr.mxu0 0.0
  %1100 = vmatpush1.msra.mxu0 %v1068
  %1101 = vmatprep.subr.mxu0 0.0
  %1102 = vmatpush1.msra.mxu0 %v1067
  %1103 = vmatprep.subr.mxu0 0.0
  %1104 = vmatpush1.msra.mxu0 %v1066
  %1105 = vmatprep.subr.mxu0 0.0
  %1106 = vmatpush1.msra.mxu0 %v1065
  %1107 = vmatprep.subr.mxu0 0.0
  %1108 = vmatpush1.msra.mxu0 %v1064
  %1109 = vmatprep.subr.mxu0 0.0
  %1110 = vmatpush1.msra.mxu0 %v1063
  %1111 = vmatprep.subr.mxu0 0.0
  %1112 = vmatpush1.msra.mxu0 %v1062
  %1113 = vmatprep.subr.mxu0 0.0
  %1114 = vmatpush1.msra.mxu0 %v1061
  %1115 = vmatprep.subr.mxu0 0.0
  %1116 = vmatpush2.msra.mxu0 0.0
  %1117 = vmatprep.subr.mxu0 0.0
  %1118 = vmatpush2.msra.mxu0 0.0
  %1119 = vmatprep.subr.mxu0 0.0
  %1120 = vmatpush2.msra.mxu0 0.0
  %1121 = vmatprep.subr.mxu0 0.0
  %1122 = vmatpush2.msra.mxu0 0.0
  %1123 = vmatprep.subr.mxu0 0.0
  %1124 = vmatpush2.msra.mxu0 0.0
  %1125 = vmatprep.subr.mxu0 0.0
  %1126 = vmatpush2.msra.mxu0 0.0
  %1127 = vmatprep.subr.mxu0 0.0
  %1128 = vmatpush2.msra.mxu0 0.0
  %1129 = vmatprep.subr.mxu0 0.0
  %1130 = vmatpush2.msra.mxu0 0.0
  %1131 = vmatprep.subr.mxu0 0.0
  %1132 = vmatpush2.msra.mxu0 0.0
  %1133 = vmatprep.subr.mxu0 0.0
  %1134 = vmatpush2.msra.mxu0 0.0
  %1135 = vmatprep.subr.mxu0 0.0
  %1136 = vmatpush2.msra.mxu0 0.0
  %1137 = vmatprep.subr.mxu0 0.0
  %1138 = vmatpush2.msra.mxu0 0.0
  %1139 = vmatprep.subr.mxu0 0.0
  %1140 = vmatpush2.msra.mxu0 0.0
  %1141 = vmatprep.subr.mxu0 0.0
  %1142 = vmatpush2.msra.mxu0 0.0
  %1143 = vmatprep.subr.mxu0 0.0
  %1144 = vmatpush2.msra.mxu0 0.0
  %1145 = vmatprep.subr.mxu0 0.0
  %1146 = vmatpush2.msra.mxu0 0.0
  %1147 = vmatprep.mubr.f32.mxu0 0.0
  %1148 = vmatmul.mubr.f32.gmra.mxu0 %v1047
  %v1149 = vpop.f32.mrf.mxu0
  %v1150 = vadd.f32 %v1082, %v1149
  %v1151 = vpop.f32.mrf.mxu0
  %1152 = vmatprep.mubr.f32.mxu0 0.0
  %1153 = vmatmul.mubr.f32.gmra.mxu0 %v1052
  %v1154 = vpop.f32.mrf.mxu0
  %v1155 = vadd.f32 %v1082, %v1154
  %v1156 = vpop.f32.mrf.mxu0
  %1157 = vmatprep.mubr.f32.mxu0 0.0
  %1158 = vmatmul.mubr.f32.gmra.mxu0 %v1057
  %v1159 = vpop.f32.mrf.mxu0
  %v1160 = vadd.f32 %v1082, %v1159
  %v1161 = vpop.f32.mrf.mxu0
  %1162 = vdwg.mxu0
  %v1163 = vlaneseq
  %v1164 = vshrl.u32 %v1163, 7
  %v1165 = vsub.s32 0, %v1164
  %v1166 = vrot.slane %v1077, %v1165
  %v1167 = vmul.f32 %v1166, %v1150
  %v1168 = vmul.f32 %v1166, %v1155
  %v1169 = vmul.f32 %v1166, %v1160
  %v1170 = vadd.f32 %v471, %v1167
  %v1171 = vadd.f32 %v476, %v1168
  %v1172 = vadd.f32 %v481, %v1169
  %v1173 = vld [vmem:[%s3 + $0x5] sm:$0x1]
  %v1174 = vld [vmem:[%s3 + $0x6] sm:$0x1]
  %1175 = vadd.xlane.f32.xlu0 %v1170
  %v1176 = vpop.xlane.xlu0 %1175
  %1177 = vadd.xlane.f32.xlu0 %v1171
  %v1178 = vpop.xlane.xlu0 %1177
  %1179 = vadd.xlane.f32.xlu0 %v1172
  %v1180 = vpop.xlane.xlu0 %1179
  %v1181 = vmul.f32 %v1176, 0.03125
  %v1182 = vmul.f32 %v1178, 0.03125
  %v1183 = vmul.f32 %v1180, 0.03125
  %v1184 = vsub.f32 %v1170, %v1181
  %v1185 = vsub.f32 %v1171, %v1182
  %v1186 = vsub.f32 %v1172, %v1183
  %v1187 = vmul.f32 %v1184, %v23
  %v1188 = vmul.f32 %v1185, %v23
  %v1189 = vmul.f32 %v1186, %v23
  %v1190 = vmul.f32 %v1187, %v1187
  %v1191 = vmul.f32 %v1188, %v1188
  %v1192 = vmul.f32 %v1189, %v1189
  %1193 = vadd.xlane.f32.xlu0 %v1190
  %v1194 = vpop.xlane.xlu0 %1193
  %1195 = vadd.xlane.f32.xlu0 %v1191
  %v1196 = vpop.xlane.xlu0 %1195
  %1197 = vadd.xlane.f32.xlu0 %v1192
  %v1198 = vpop.xlane.xlu0 %1197
  %v1199 = vmul.f32 %v1194, 0.03125
  %v1200 = vmul.f32 %v1196, 0.03125
  %v1201 = vmul.f32 %v1198, 0.03125
  %v1202 = vadd.f32 %v1199, 1e-06
  %v1203 = vadd.f32 %v1200, 1e-06
  %v1204 = vadd.f32 %v1201, 1e-06
  %v1205 = vrsqrt.pop %v1202
  %v1206 = vrsqrt.pop %v1203
  %v1207 = vrsqrt.pop %v1204
  %v1208 = vmul.f32 %v1187, %v1205
  %v1209 = vmul.f32 %v1188, %v1206
  %v1210 = vmul.f32 %v1189, %v1207
  %v1211 = vlaneseq
  %v1212 = vshrl.u32 %v1211, 7
  %v1213 = vsub.s32 0, %v1212
  %v1214 = vrot.slane %v1173, %v1213
  %v1215 = vmul.f32 %v1208, %v1214
  %v1216 = vmul.f32 %v1209, %v1214
  %v1217 = vmul.f32 %v1210, %v1214
  %v1218 = vlaneseq
  %v1219 = vshrl.u32 %v1218, 7
  %v1220 = vsub.s32 0, %v1219
  %v1221 = vrot.slane %v1174, %v1220
  %v1222 = vadd.f32 %v1215, %v1221
  %v1223 = vadd.f32 %v1216, %v1221
  %v1224 = vadd.f32 %v1217, %v1221
  %s1225 = scalar_lea.vmem %s2, 256
  %v1226 = vld [vmem:[%s1225] sm:$0xff]
  %v1227 = vld [vmem:[%s1225 + $0x8] sm:$0xff]
  %v1228 = vld [vmem:[%s1225 + $0x10] sm:$0xff]
  %v1229 = vld [vmem:[%s1225 + $0x18] sm:$0xff]
  %v1230 = vld [vmem:[%s1225 + $0x20] sm:$0xff]
  %v1231 = vld [vmem:[%s1225 + $0x28] sm:$0xff]
  %v1232 = vld [vmem:[%s1225 + $0x30] sm:$0xff]
  %v1233 = vld [vmem:[%s1225 + $0x38] sm:$0xff]
  %v1234 = vld [vmem:[%s1225 + $0x40] sm:$0xff]
  %v1235 = vld [vmem:[%s1225 + $0x48] sm:$0xff]
  %v1236 = vld [vmem:[%s1225 + $0x50] sm:$0xff]
  %v1237 = vld [vmem:[%s1225 + $0x58] sm:$0xff]
  %v1238 = vld [vmem:[%s1225 + $0x60] sm:$0xff]
  %v1239 = vld [vmem:[%s1225 + $0x68] sm:$0xff]
  %v1240 = vld [vmem:[%s1225 + $0x70] sm:$0xff]
  %v1241 = vld [vmem:[%s1225 + $0x78] sm:$0xff]
  %v1242 = vld [vmem:[%s3 + $0x7] sm:$0x1]
  %v1243 = vlaneseq
  %v1244 = vshrl.u32 %v1243, 7
  %v1245 = vsub.s32 0, %v1244
  %v1246 = vrot.slane %v1242, %v1245
  %1247 = vmatprep.subr.mxu0 0.0
  %1248 = vmatpush1.msra.mxu0 %v1241
  %1249 = vmatprep.subr.mxu0 0.0
  %1250 = vmatpush1.msra.mxu0 %v1240
  %1251 = vmatprep.subr.mxu0 0.0
  %1252 = vmatpush1.msra.mxu0 %v1239
  %1253 = vmatprep.subr.mxu0 0.0
  %1254 = vmatpush1.msra.mxu0 %v1238
  %1255 = vmatprep.subr.mxu0 0.0
  %1256 = vmatpush1.msra.mxu0 %v1237
  %1257 = vmatprep.subr.mxu0 0.0
  %1258 = vmatpush1.msra.mxu0 %v1236
  %1259 = vmatprep.subr.mxu0 0.0
  %1260 = vmatpush1.msra.mxu0 %v1235
  %1261 = vmatprep.subr.mxu0 0.0
  %1262 = vmatpush1.msra.mxu0 %v1234
  %1263 = vmatprep.subr.mxu0 0.0
  %1264 = vmatpush1.msra.mxu0 %v1233
  %1265 = vmatprep.subr.mxu0 0.0
  %1266 = vmatpush1.msra.mxu0 %v1232
  %1267 = vmatprep.subr.mxu0 0.0
  %1268 = vmatpush1.msra.mxu0 %v1231
  %1269 = vmatprep.subr.mxu0 0.0
  %1270 = vmatpush1.msra.mxu0 %v1230
  %1271 = vmatprep.subr.mxu0 0.0
  %1272 = vmatpush1.msra.mxu0 %v1229
  %1273 = vmatprep.subr.mxu0 0.0
  %1274 = vmatpush1.msra.mxu0 %v1228
  %1275 = vmatprep.subr.mxu0 0.0
  %1276 = vmatpush1.msra.mxu0 %v1227
  %1277 = vmatprep.subr.mxu0 0.0
  %1278 = vmatpush1.msra.mxu0 %v1226
  %1279 = vmatprep.subr.mxu0 0.0
  %1280 = vmatpush2.msra.mxu0 0.0
  %1281 = vmatprep.subr.mxu0 0.0
  %1282 = vmatpush2.msra.mxu0 0.0
  %1283 = vmatprep.subr.mxu0 0.0
  %1284 = vmatpush2.msra.mxu0 0.0
  %1285 = vmatprep.subr.mxu0 0.0
  %1286 = vmatpush2.msra.mxu0 0.0
  %1287 = vmatprep.subr.mxu0 0.0
  %1288 = vmatpush2.msra.mxu0 0.0
  %1289 = vmatprep.subr.mxu0 0.0
  %1290 = vmatpush2.msra.mxu0 0.0
  %1291 = vmatprep.subr.mxu0 0.0
  %1292 = vmatpush2.msra.mxu0 0.0
  %1293 = vmatprep.subr.mxu0 0.0
  %1294 = vmatpush2.msra.mxu0 0.0
  %1295 = vmatprep.subr.mxu0 0.0
  %1296 = vmatpush2.msra.mxu0 0.0
  %1297 = vmatprep.subr.mxu0 0.0
  %1298 = vmatpush2.msra.mxu0 0.0
  %1299 = vmatprep.subr.mxu0 0.0
  %1300 = vmatpush2.msra.mxu0 0.0
  %1301 = vmatprep.subr.mxu0 0.0
  %1302 = vmatpush2.msra.mxu0 0.0
  %1303 = vmatprep.subr.mxu0 0.0
  %1304 = vmatpush2.msra.mxu0 0.0
  %1305 = vmatprep.subr.mxu0 0.0
  %1306 = vmatpush2.msra.mxu0 0.0
  %1307 = vmatprep.subr.mxu0 0.0
  %1308 = vmatpush2.msra.mxu0 0.0
  %1309 = vmatprep.subr.mxu0 0.0
  %1310 = vmatpush2.msra.mxu0 0.0
  %1311 = vmatprep.mubr.f32.mxu0 0.0
  %1312 = vmatmul.mubr.f32.gmra.mxu0 %v1222
  %v1313 = vpop.f32.mrf.mxu0
  %v1314 = vadd.f32 %v1246, %v1313
  %v1315 = vpop.f32.mrf.mxu0
  %1316 = vmatprep.mubr.f32.mxu0 0.0
  %1317 = vmatmul.mubr.f32.gmra.mxu0 %v1223
  %v1318 = vpop.f32.mrf.mxu0
  %v1319 = vadd.f32 %v1246, %v1318
  %v1320 = vpop.f32.mrf.mxu0
  %1321 = vmatprep.mubr.f32.mxu0 0.0
  %1322 = vmatmul.mubr.f32.gmra.mxu0 %v1224
  %v1323 = vpop.f32.mrf.mxu0
  %v1324 = vadd.f32 %v1246, %v1323
  %v1325 = vpop.f32.mrf.mxu0
  %1326 = vdwg.mxu0
  %v1327 = vmul.f32 %v1314, 0.5
  %v1328 = vmul.f32 %v1319, 0.5
  %v1329 = vmul.f32 %v1324, 0.5
  %v1330 = vmul.f32 %v1314, 0.70710677
  %v1331 = vmul.f32 %v1319, 0.70710677
  %v1332 = vmul.f32 %v1324, 0.70710677
  %v1333 = verf.f32.pop %v1330
  %v1334 = verf.f32.pop %v1331
  %v1335 = verf.f32.pop %v1332
  %v1336 = vadd.f32 %v1333, 1.0
  %v1337 = vadd.f32 %v1334, 1.0
  %v1338 = vadd.f32 %v1335, 1.0
  %v1339 = vmul.f32 %v1327, %v1336
  %v1340 = vmul.f32 %v1328, %v1337
  %v1341 = vmul.f32 %v1329, %v1338
  %s1342 = scalar_lea.vmem %s2, 384
  %v1343 = vld [vmem:[%s1342] sm:$0xff]
  %v1344 = vld [vmem:[%s1342 + $0x8] sm:$0xff]
  %v1345 = vld [vmem:[%s1342 + $0x10] sm:$0xff]
  %v1346 = vld [vmem:[%s1342 + $0x18] sm:$0xff]
  %v1347 = vld [vmem:[%s1342 + $0x20] sm:$0xff]
  %v1348 = vld [vmem:[%s1342 + $0x28] sm:$0xff]
  %v1349 = vld [vmem:[%s1342 + $0x30] sm:$0xff]
  %v1350 = vld [vmem:[%s1342 + $0x38] sm:$0xff]
  %v1351 = vld [vmem:[%s1342 + $0x40] sm:$0xff]
  %v1352 = vld [vmem:[%s1342 + $0x48] sm:$0xff]
  %v1353 = vld [vmem:[%s1342 + $0x50] sm:$0xff]
  %v1354 = vld [vmem:[%s1342 + $0x58] sm:$0xff]
  %v1355 = vld [vmem:[%s1342 + $0x60] sm:$0xff]
  %v1356 = vld [vmem:[%s1342 + $0x68] sm:$0xff]
  %v1357 = vld [vmem:[%s1342 + $0x70] sm:$0xff]
  %v1358 = vld [vmem:[%s1342 + $0x78] sm:$0xff]
  %v1359 = vld [vmem:[%s3 + $0x8] sm:$0x1]
  %v1360 = vlaneseq
  %v1361 = vshrl.u32 %v1360, 7
  %v1362 = vsub.s32 0, %v1361
  %v1363 = vrot.slane %v1359, %v1362
  %1364 = vmatprep.subr.mxu0 0.0
  %1365 = vmatpush1.msra.mxu0 %v1358
  %1366 = vmatprep.subr.mxu0 0.0
  %1367 = vmatpush1.msra.mxu0 %v1357
  %1368 = vmatprep.subr.mxu0 0.0
  %1369 = vmatpush1.msra.mxu0 %v1356
  %1370 = vmatprep.subr.mxu0 0.0
  %1371 = vmatpush1.msra.mxu0 %v1355
  %1372 = vmatprep.subr.mxu0 0.0
  %1373 = vmatpush1.msra.mxu0 %v1354
  %1374 = vmatprep.subr.mxu0 0.0
  %1375 = vmatpush1.msra.mxu0 %v1353
  %1376 = vmatprep.subr.mxu0 0.0
  %1377 = vmatpush1.msra.mxu0 %v1352
  %1378 = vmatprep.subr.mxu0 0.0
  %1379 = vmatpush1.msra.mxu0 %v1351
  %1380 = vmatprep.subr.mxu0 0.0
  %1381 = vmatpush1.msra.mxu0 %v1350
  %1382 = vmatprep.subr.mxu0 0.0
  %1383 = vmatpush1.msra.mxu0 %v1349
  %1384 = vmatprep.subr.mxu0 0.0
  %1385 = vmatpush1.msra.mxu0 %v1348
  %1386 = vmatprep.subr.mxu0 0.0
  %1387 = vmatpush1.msra.mxu0 %v1347
  %1388 = vmatprep.subr.mxu0 0.0
  %1389 = vmatpush1.msra.mxu0 %v1346
  %1390 = vmatprep.subr.mxu0 0.0
  %1391 = vmatpush1.msra.mxu0 %v1345
  %1392 = vmatprep.subr.mxu0 0.0
  %1393 = vmatpush1.msra.mxu0 %v1344
  %1394 = vmatprep.subr.mxu0 0.0
  %1395 = vmatpush1.msra.mxu0 %v1343
  %1396 = vmatprep.subr.mxu0 0.0
  %1397 = vmatpush2.msra.mxu0 0.0
  %1398 = vmatprep.subr.mxu0 0.0
  %1399 = vmatpush2.msra.mxu0 0.0
  %1400 = vmatprep.subr.mxu0 0.0
  %1401 = vmatpush2.msra.mxu0 0.0
  %1402 = vmatprep.subr.mxu0 0.0
  %1403 = vmatpush2.msra.mxu0 0.0
  %1404 = vmatprep.subr.mxu0 0.0
  %1405 = vmatpush2.msra.mxu0 0.0
  %1406 = vmatprep.subr.mxu0 0.0
  %1407 = vmatpush2.msra.mxu0 0.0
  %1408 = vmatprep.subr.mxu0 0.0
  %1409 = vmatpush2.msra.mxu0 0.0
  %1410 = vmatprep.subr.mxu0 0.0
  %1411 = vmatpush2.msra.mxu0 0.0
  %1412 = vmatprep.subr.mxu0 0.0
  %1413 = vmatpush2.msra.mxu0 0.0
  %1414 = vmatprep.subr.mxu0 0.0
  %1415 = vmatpush2.msra.mxu0 0.0
  %1416 = vmatprep.subr.mxu0 0.0
  %1417 = vmatpush2.msra.mxu0 0.0
  %1418 = vmatprep.subr.mxu0 0.0
  %1419 = vmatpush2.msra.mxu0 0.0
  %1420 = vmatprep.subr.mxu0 0.0
  %1421 = vmatpush2.msra.mxu0 0.0
  %1422 = vmatprep.subr.mxu0 0.0
  %1423 = vmatpush2.msra.mxu0 0.0
  %1424 = vmatprep.subr.mxu0 0.0
  %1425 = vmatpush2.msra.mxu0 0.0
  %1426 = vmatprep.subr.mxu0 0.0
  %1427 = vmatpush2.msra.mxu0 0.0
  %1428 = vmatprep.mubr.f32.mxu0 0.0
  %1429 = vmatmul.mubr.f32.gmra.mxu0 %v1339
  %v1430 = vpop.f32.mrf.mxu0
  %v1431 = vadd.f32 %v1363, %v1430
  %v1432 = vpop.f32.mrf.mxu0
  %1433 = vmatprep.mubr.f32.mxu0 0.0
  %1434 = vmatmul.mubr.f32.gmra.mxu0 %v1340
  %v1435 = vpop.f32.mrf.mxu0
  %v1436 = vadd.f32 %v1363, %v1435
  %v1437 = vpop.f32.mrf.mxu0
  %1438 = vmatprep.mubr.f32.mxu0 0.0
  %1439 = vmatmul.mubr.f32.gmra.mxu0 %v1341
  %v1440 = vpop.f32.mrf.mxu0
  %v1441 = vadd.f32 %v1363, %v1440
  %v1442 = vpop.f32.mrf.mxu0
  %1443 = vdwg.mxu0
  %v1444 = vld [vmem:[%s3 + $0x9] sm:$0x1]
  %v1445 = vlaneseq
  %v1446 = vshrl.u32 %v1445, 7
  %v1447 = vsub.s32 0, %v1446
  %v1448 = vrot.slane %v1444, %v1447
  %v1449 = vmul.f32 %v1448, %v1431
  %v1450 = vmul.f32 %v1448, %v1436
  %v1451 = vmul.f32 %v1448, %v1441
  %v1452 = vadd.f32 %v1170, %v1449
  %v1453 = vadd.f32 %v1171, %v1450
  %v1454 = vadd.f32 %v1172, %v1451
  %v1455 = vld [vmem:[%s3 + $0xa] sm:$0x1]
  %v1456 = vld [vmem:[%s3 + $0xb] sm:$0x1]
  %1457 = vadd.xlane.f32.xlu0 %v1452
  %v1458 = vpop.xlane.xlu0 %1457
  %1459 = vadd.xlane.f32.xlu0 %v1453
  %v1460 = vpop.xlane.xlu0 %1459
  %1461 = vadd.xlane.f32.xlu0 %v1454
  %v1462 = vpop.xlane.xlu0 %1461
  %v1463 = vmul.f32 %v1458, 0.03125
  %v1464 = vmul.f32 %v1460, 0.03125
  %v1465 = vmul.f32 %v1462, 0.03125
  %v1466 = vsub.f32 %v1452, %v1463
  %v1467 = vsub.f32 %v1453, %v1464
  %v1468 = vsub.f32 %v1454, %v1465
  %v1469 = vmul.f32 %v1466, %v23
  %v1470 = vmul.f32 %v1467, %v23
  %v1471 = vmul.f32 %v1468, %v23
  %v1472 = vmul.f32 %v1469, %v1469
  %v1473 = vmul.f32 %v1470, %v1470
  %v1474 = vmul.f32 %v1471, %v1471
  %1475 = vadd.xlane.f32.xlu0 %v1472
  %v1476 = vpop.xlane.xlu0 %1475
  %1477 = vadd.xlane.f32.xlu0 %v1473
  %v1478 = vpop.xlane.xlu0 %1477
  %1479 = vadd.xlane.f32.xlu0 %v1474
  %v1480 = vpop.xlane.xlu0 %1479
  %v1481 = vmul.f32 %v1476, 0.03125
  %v1482 = vmul.f32 %v1478, 0.03125
  %v1483 = vmul.f32 %v1480, 0.03125
  %v1484 = vadd.f32 %v1481, 1e-06
  %v1485 = vadd.f32 %v1482, 1e-06
  %v1486 = vadd.f32 %v1483, 1e-06
  %v1487 = vrsqrt.pop %v1484
  %v1488 = vrsqrt.pop %v1485
  %v1489 = vrsqrt.pop %v1486
  %v1490 = vmul.f32 %v1469, %v1487
  %v1491 = vmul.f32 %v1470, %v1488
  %v1492 = vmul.f32 %v1471, %v1489
  %v1493 = vlaneseq
  %v1494 = vshrl.u32 %v1493, 7
  %v1495 = vsub.s32 0, %v1494
  %v1496 = vrot.slane %v1455, %v1495
  %v1497 = vmul.f32 %v1490, %v1496
  %v1498 = vmul.f32 %v1491, %v1496
  %v1499 = vmul.f32 %v1492, %v1496
  %v1500 = vlaneseq
  %v1501 = vshrl.u32 %v1500, 7
  %v1502 = vsub.s32 0, %v1501
  %v1503 = vrot.slane %v1456, %v1502
  %v1504 = vadd.f32 %v1497, %v1503
  %v1505 = vadd.f32 %v1498, %v1503
  %v1506 = vadd.f32 %v1499, %v1503
  %s1507 = scalar_lea.vmem %s2, 512
  %v1508 = vld [vmem:[%s1507] sm:$0xff]
  %v1509 = vld [vmem:[%s1507 + $0x8] sm:$0xff]
  %v1510 = vld [vmem:[%s1507 + $0x10] sm:$0xff]
  %v1511 = vld [vmem:[%s1507 + $0x18] sm:$0xff]
  %v1512 = vld [vmem:[%s1507 + $0x20] sm:$0xff]
  %v1513 = vld [vmem:[%s1507 + $0x28] sm:$0xff]
  %v1514 = vld [vmem:[%s1507 + $0x30] sm:$0xff]
  %v1515 = vld [vmem:[%s1507 + $0x38] sm:$0xff]
  %v1516 = vld [vmem:[%s1507 + $0x40] sm:$0xff]
  %v1517 = vld [vmem:[%s1507 + $0x48] sm:$0xff]
  %v1518 = vld [vmem:[%s1507 + $0x50] sm:$0xff]
  %v1519 = vld [vmem:[%s1507 + $0x58] sm:$0xff]
  %v1520 = vld [vmem:[%s1507 + $0x60] sm:$0xff]
  %v1521 = vld [vmem:[%s1507 + $0x68] sm:$0xff]
  %v1522 = vld [vmem:[%s1507 + $0x70] sm:$0xff]
  %v1523 = vld [vmem:[%s1507 + $0x78] sm:$0xff]
  %v1524 = vld [vmem:[%s3 + $0xc] sm:$0x1]
  %v1525 = vlaneseq
  %v1526 = vshrl.u32 %v1525, 7
  %v1527 = vsub.s32 0, %v1526
  %v1528 = vrot.slane %v1524, %v1527
  %1529 = vmatprep.subr.mxu0 0.0
  %1530 = vmatpush1.msra.mxu0 %v1523
  %1531 = vmatprep.subr.mxu0 0.0
  %1532 = vmatpush1.msra.mxu0 %v1522
  %1533 = vmatprep.subr.mxu0 0.0
  %1534 = vmatpush1.msra.mxu0 %v1521
  %1535 = vmatprep.subr.mxu0 0.0
  %1536 = vmatpush1.msra.mxu0 %v1520
  %1537 = vmatprep.subr.mxu0 0.0
  %1538 = vmatpush1.msra.mxu0 %v1519
  %1539 = vmatprep.subr.mxu0 0.0
  %1540 = vmatpush1.msra.mxu0 %v1518
  %1541 = vmatprep.subr.mxu0 0.0
  %1542 = vmatpush1.msra.mxu0 %v1517
  %1543 = vmatprep.subr.mxu0 0.0
  %1544 = vmatpush1.msra.mxu0 %v1516
  %1545 = vmatprep.subr.mxu0 0.0
  %1546 = vmatpush1.msra.mxu0 %v1515
  %1547 = vmatprep.subr.mxu0 0.0
  %1548 = vmatpush1.msra.mxu0 %v1514
  %1549 = vmatprep.subr.mxu0 0.0
  %1550 = vmatpush1.msra.mxu0 %v1513
  %1551 = vmatprep.subr.mxu0 0.0
  %1552 = vmatpush1.msra.mxu0 %v1512
  %1553 = vmatprep.subr.mxu0 0.0
  %1554 = vmatpush1.msra.mxu0 %v1511
  %1555 = vmatprep.subr.mxu0 0.0
  %1556 = vmatpush1.msra.mxu0 %v1510
  %1557 = vmatprep.subr.mxu0 0.0
  %1558 = vmatpush1.msra.mxu0 %v1509
  %1559 = vmatprep.subr.mxu0 0.0
  %1560 = vmatpush1.msra.mxu0 %v1508
  %1561 = vmatprep.subr.mxu0 0.0
  %1562 = vmatpush2.msra.mxu0 0.0
  %1563 = vmatprep.subr.mxu0 0.0
  %1564 = vmatpush2.msra.mxu0 0.0
  %1565 = vmatprep.subr.mxu0 0.0
  %1566 = vmatpush2.msra.mxu0 0.0
  %1567 = vmatprep.subr.mxu0 0.0
  %1568 = vmatpush2.msra.mxu0 0.0
  %1569 = vmatprep.subr.mxu0 0.0
  %1570 = vmatpush2.msra.mxu0 0.0
  %1571 = vmatprep.subr.mxu0 0.0
  %1572 = vmatpush2.msra.mxu0 0.0
  %1573 = vmatprep.subr.mxu0 0.0
  %1574 = vmatpush2.msra.mxu0 0.0
  %1575 = vmatprep.subr.mxu0 0.0
  %1576 = vmatpush2.msra.mxu0 0.0
  %1577 = vmatprep.subr.mxu0 0.0
  %1578 = vmatpush2.msra.mxu0 0.0
  %1579 = vmatprep.subr.mxu0 0.0
  %1580 = vmatpush2.msra.mxu0 0.0
  %1581 = vmatprep.subr.mxu0 0.0
  %1582 = vmatpush2.msra.mxu0 0.0
  %1583 = vmatprep.subr.mxu0 0.0
  %1584 = vmatpush2.msra.mxu0 0.0
  %1585 = vmatprep.subr.mxu0 0.0
  %1586 = vmatpush2.msra.mxu0 0.0
  %1587 = vmatprep.subr.mxu0 0.0
  %1588 = vmatpush2.msra.mxu0 0.0
  %1589 = vmatprep.subr.mxu0 0.0
  %1590 = vmatpush2.msra.mxu0 0.0
  %1591 = vmatprep.subr.mxu0 0.0
  %1592 = vmatpush2.msra.mxu0 0.0
  %1593 = vmatprep.mubr.f32.mxu0 0.0
  %1594 = vmatmul.mubr.f32.gmra.mxu0 %v1504
  %v1595 = vpop.f32.mrf.mxu0
  %v1596 = vadd.f32 %v1528, %v1595
  %v1597 = vpop.f32.mrf.mxu0
  %1598 = vmatprep.mubr.f32.mxu0 0.0
  %1599 = vmatmul.mubr.f32.gmra.mxu0 %v1505
  %v1600 = vpop.f32.mrf.mxu0
  %v1601 = vadd.f32 %v1528, %v1600
  %v1602 = vpop.f32.mrf.mxu0
  %1603 = vmatprep.mubr.f32.mxu0 0.0
  %1604 = vmatmul.mubr.f32.gmra.mxu0 %v1506
  %v1605 = vpop.f32.mrf.mxu0
  %v1606 = vadd.f32 %v1528, %v1605
  %v1607 = vpop.f32.mrf.mxu0
  %1608 = vdwg.mxu0
  %1609 = vrot.lane.b32.xlu0 %v1596, 64
  %v1610 = vpop.permute.xlu0 %1609
  %1611 = vrot.lane.b32.xlu0 %v1601, 64
  %v1612 = vpop.permute.xlu0 %1611
  %1613 = vrot.lane.b32.xlu0 %v1606, 64
  %v1614 = vpop.permute.xlu0 %1613
  %v1615 = vmul.f32 %v1596, %v28
  %v1616 = vmul.f32 %v1601, %v28
  %v1617 = vmul.f32 %v1606, %v28
  %1618 = vmatprep.subr.mxu0 0.0
  %1619 = vmatpush1.xpose.msra.mxu0 0.0
  %1620 = vmatprep.subr.mxu0 0.0
  %1621 = vmatpush1.xpose.msra.mxu0 0.0
  %1622 = vmatprep.subr.mxu0 0.0
  %1623 = vmatpush1.xpose.msra.mxu0 0.0
  %1624 = vmatprep.subr.mxu0 0.0
  %1625 = vmatpush1.xpose.msra.mxu0 0.0
  %1626 = vmatprep.subr.mxu0 0.0
  %1627 = vmatpush1.xpose.msra.mxu0 0.0
  %1628 = vmatprep.subr.mxu0 0.0
  %1629 = vmatpush1.xpose.msra.mxu0 0.0
  %1630 = vmatprep.subr.mxu0 0.0
  %1631 = vmatpush1.xpose.msra.mxu0 0.0
  %1632 = vmatprep.subr.mxu0 0.0
  %1633 = vmatpush1.xpose.msra.mxu0 0.0
  %1634 = vmatprep.subr.mxu0 0.0
  %1635 = vmatpush1.xpose.msra.mxu0 0.0
  %1636 = vmatprep.subr.mxu0 0.0
  %1637 = vmatpush1.xpose.msra.mxu0 0.0
  %1638 = vmatprep.subr.mxu0 0.0
  %1639 = vmatpush1.xpose.msra.mxu0 0.0
  %1640 = vmatprep.subr.mxu0 0.0
  %1641 = vmatpush1.xpose.msra.mxu0 0.0
  %1642 = vmatprep.subr.mxu0 0.0
  %1643 = vmatpush1.xpose.msra.mxu0 0.0
  %1644 = vmatprep.subr.mxu0 0.0
  %1645 = vmatpush1.xpose.msra.mxu0 %v1614
  %1646 = vmatprep.subr.mxu0 0.0
  %1647 = vmatpush1.xpose.msra.mxu0 %v1612
  %1648 = vmatprep.subr.mxu0 0.0
  %1649 = vmatpush1.xpose.msra.mxu0 %v1610
  %1650 = vmatprep.subr.mxu0 0.0
  %1651 = vmatpush2.xpose.msra.mxu0 0.0
  %1652 = vmatprep.subr.mxu0 0.0
  %1653 = vmatpush2.xpose.msra.mxu0 0.0
  %1654 = vmatprep.subr.mxu0 0.0
  %1655 = vmatpush2.xpose.msra.mxu0 0.0
  %1656 = vmatprep.subr.mxu0 0.0
  %1657 = vmatpush2.xpose.msra.mxu0 0.0
  %1658 = vmatprep.subr.mxu0 0.0
  %1659 = vmatpush2.xpose.msra.mxu0 0.0
  %1660 = vmatprep.subr.mxu0 0.0
  %1661 = vmatpush2.xpose.msra.mxu0 0.0
  %1662 = vmatprep.subr.mxu0 0.0
  %1663 = vmatpush2.xpose.msra.mxu0 0.0
  %1664 = vmatprep.subr.mxu0 0.0
  %1665 = vmatpush2.xpose.msra.mxu0 0.0
  %1666 = vmatprep.subr.mxu0 0.0
  %1667 = vmatpush2.xpose.msra.mxu0 0.0
  %1668 = vmatprep.subr.mxu0 0.0
  %1669 = vmatpush2.xpose.msra.mxu0 0.0
  %1670 = vmatprep.subr.mxu0 0.0
  %1671 = vmatpush2.xpose.msra.mxu0 0.0
  %1672 = vmatprep.subr.mxu0 0.0
  %1673 = vmatpush2.xpose.msra.mxu0 0.0
  %1674 = vmatprep.subr.mxu0 0.0
  %1675 = vmatpush2.xpose.msra.mxu0 0.0
  %1676 = vmatprep.subr.mxu0 0.0
  %1677 = vmatpush2.xpose.msra.mxu0 0.0
  %1678 = vmatprep.subr.mxu0 0.0
  %1679 = vmatpush2.xpose.msra.mxu0 0.0
  %1680 = vmatprep.subr.mxu0 0.0
  %1681 = vmatpush2.xpose.msra.mxu0 0.0
  %1682 = vmatprep.mubr.f32.mxu0 0.0
  %1683 = vmatmul.mubr.f32.gmra.mxu0 %v1615
  %v1684 = vpop.f32.mrf.mxu0
  %v1685 = vadd.f32 %v146, %v1684
  %v1686 = vpop.f32.mrf.mxu0
  %1687 = vmatprep.mubr.f32.mxu0 0.0
  %1688 = vmatmul.mubr.f32.gmra.mxu0 %v1616
  %v1689 = vpop.f32.mrf.mxu0
  %v1690 = vadd.f32 %v147, %v1689
  %v1691 = vpop.f32.mrf.mxu0
  %1692 = vmatprep.mubr.f32.mxu0 0.0
  %1693 = vmatmul.mubr.f32.gmra.mxu0 %v1617
  %v1694 = vpop.f32.mrf.mxu0
  %v1695 = vadd.f32 %v148, %v1694
  %v1696 = vpop.f32.mrf.mxu0
  %1697 = vdwg.mxu0
  %v1698 = vsel %vm726, %v1685, -inf
  %1699 = vmax.xlane.f32.xlu0 %v1698
  %v1700 = vpop.xlane.xlu0 %1699
  %v1701 = vsel %vm726, %v1690, -inf
  %1702 = vmax.xlane.f32.xlu0 %v1701
  %v1703 = vpop.xlane.xlu0 %1702
  %v1704 = vsel %vm726, %v1695, -inf
  %1705 = vmax.xlane.f32.xlu0 %v1704
  %v1706 = vpop.xlane.xlu0 %1705
  %v1707 = vsub.f32 %v1685, %v1700
  %v1708 = vsub.f32 %v1690, %v1703
  %v1709 = vsub.f32 %v1695, %v1706
  %v1710 = vmul.f32 %v1707, 1.442695
  %v1711 = vpow.pop %v1710
  %v1712 = vmul.f32 %v1708, 1.442695
  %v1713 = vpow.pop %v1712
  %v1714 = vmul.f32 %v1709, 1.442695
  %v1715 = vpow.pop %v1714
  %v1716 = vsel %vm726, %v1711, 0.0
  %1717 = vadd.xlane.f32.xlu0 %v1716
  %v1718 = vpop.xlane.xlu0 %1717
  %v1719 = vsel %vm726, %v1713, 0.0
  %1720 = vadd.xlane.f32.xlu0 %v1719
  %v1721 = vpop.xlane.xlu0 %1720
  %v1722 = vsel %vm726, %v1715, 0.0
  %1723 = vadd.xlane.f32.xlu0 %v1722
  %v1724 = vpop.xlane.xlu0 %1723
  %v1725 = vrcp.pop %v1718
  %v1726 = vrcp.pop %v1721
  %v1727 = vrcp.pop %v1724
  %v1728 = vmul.f32 %v1711, %v1725
  %v1729 = vmul.f32 %v1713, %v1726
  %v1730 = vmul.f32 %v1715, %v1727
  %v1731 = vmul.f32 %v1596, %v37
  %v1732 = vmul.f32 %v1601, %v37
  %v1733 = vmul.f32 %v1606, %v37
  %v1734 = vmul.f32 %v1596, %v32
  %v1735 = vmul.f32 %v1601, %v32
  %v1736 = vmul.f32 %v1606, %v32
  %1737 = vmatprep.subr.mxu0 0.0
  %1738 = vmatpush1.xpose.msra.mxu0 0.0
  %1739 = vmatprep.subr.mxu0 0.0
  %1740 = vmatpush1.xpose.msra.mxu0 0.0
  %1741 = vmatprep.subr.mxu0 0.0
  %1742 = vmatpush1.xpose.msra.mxu0 0.0
  %1743 = vmatprep.subr.mxu0 0.0
  %1744 = vmatpush1.xpose.msra.mxu0 0.0
  %1745 = vmatprep.subr.mxu0 0.0
  %1746 = vmatpush1.xpose.msra.mxu0 0.0
  %1747 = vmatprep.subr.mxu0 0.0
  %1748 = vmatpush1.xpose.msra.mxu0 0.0
  %1749 = vmatprep.subr.mxu0 0.0
  %1750 = vmatpush1.xpose.msra.mxu0 0.0
  %1751 = vmatprep.subr.mxu0 0.0
  %1752 = vmatpush1.xpose.msra.mxu0 0.0
  %1753 = vmatprep.subr.mxu0 0.0
  %1754 = vmatpush1.xpose.msra.mxu0 0.0
  %1755 = vmatprep.subr.mxu0 0.0
  %1756 = vmatpush1.xpose.msra.mxu0 0.0
  %1757 = vmatprep.subr.mxu0 0.0
  %1758 = vmatpush1.xpose.msra.mxu0 0.0
  %1759 = vmatprep.subr.mxu0 0.0
  %1760 = vmatpush1.xpose.msra.mxu0 0.0
  %1761 = vmatprep.subr.mxu0 0.0
  %1762 = vmatpush1.xpose.msra.mxu0 0.0
  %1763 = vmatprep.subr.mxu0 0.0
  %1764 = vmatpush1.xpose.msra.mxu0 %v1614
  %1765 = vmatprep.subr.mxu0 0.0
  %1766 = vmatpush1.xpose.msra.mxu0 %v1612
  %1767 = vmatprep.subr.mxu0 0.0
  %1768 = vmatpush1.xpose.msra.mxu0 %v1610
  %1769 = vmatprep.subr.mxu0 0.0
  %1770 = vmatpush2.xpose.msra.mxu0 0.0
  %1771 = vmatprep.subr.mxu0 0.0
  %1772 = vmatpush2.xpose.msra.mxu0 0.0
  %1773 = vmatprep.subr.mxu0 0.0
  %1774 = vmatpush2.xpose.msra.mxu0 0.0
  %1775 = vmatprep.subr.mxu0 0.0
  %1776 = vmatpush2.xpose.msra.mxu0 0.0
  %1777 = vmatprep.subr.mxu0 0.0
  %1778 = vmatpush2.xpose.msra.mxu0 0.0
  %1779 = vmatprep.subr.mxu0 0.0
  %1780 = vmatpush2.xpose.msra.mxu0 0.0
  %1781 = vmatprep.subr.mxu0 0.0
  %1782 = vmatpush2.xpose.msra.mxu0 0.0
  %1783 = vmatprep.subr.mxu0 0.0
  %1784 = vmatpush2.xpose.msra.mxu0 0.0
  %1785 = vmatprep.subr.mxu0 0.0
  %1786 = vmatpush2.xpose.msra.mxu0 0.0
  %1787 = vmatprep.subr.mxu0 0.0
  %1788 = vmatpush2.xpose.msra.mxu0 0.0
  %1789 = vmatprep.subr.mxu0 0.0
  %1790 = vmatpush2.xpose.msra.mxu0 0.0
  %1791 = vmatprep.subr.mxu0 0.0
  %1792 = vmatpush2.xpose.msra.mxu0 0.0
  %1793 = vmatprep.subr.mxu0 0.0
  %1794 = vmatpush2.xpose.msra.mxu0 0.0
  %1795 = vmatprep.subr.mxu0 0.0
  %1796 = vmatpush2.xpose.msra.mxu0 0.0
  %1797 = vmatprep.subr.mxu0 0.0
  %1798 = vmatpush2.xpose.msra.mxu0 0.0
  %1799 = vmatprep.subr.mxu0 0.0
  %1800 = vmatpush2.xpose.msra.mxu0 0.0
  %1801 = vmatprep.mubr.f32.mxu0 0.0
  %1802 = vmatmul.mubr.f32.gmra.mxu0 %v1734
  %v1803 = vpop.f32.mrf.mxu0
  %v1804 = vadd.f32 %v146, %v1803
  %v1805 = vpop.f32.mrf.mxu0
  %1806 = vmatprep.mubr.f32.mxu0 0.0
  %1807 = vmatmul.mubr.f32.gmra.mxu0 %v1735
  %v1808 = vpop.f32.mrf.mxu0
  %v1809 = vadd.f32 %v147, %v1808
  %v1810 = vpop.f32.mrf.mxu0
  %1811 = vmatprep.mubr.f32.mxu0 0.0
  %1812 = vmatmul.mubr.f32.gmra.mxu0 %v1736
  %v1813 = vpop.f32.mrf.mxu0
  %v1814 = vadd.f32 %v148, %v1813
  %v1815 = vpop.f32.mrf.mxu0
  %1816 = vdwg.mxu0
  %v1817 = vsel %vm726, %v1804, -inf
  %1818 = vmax.xlane.f32.xlu0 %v1817
  %v1819 = vpop.xlane.xlu0 %1818
  %v1820 = vsel %vm726, %v1809, -inf
  %1821 = vmax.xlane.f32.xlu0 %v1820
  %v1822 = vpop.xlane.xlu0 %1821
  %v1823 = vsel %vm726, %v1814, -inf
  %1824 = vmax.xlane.f32.xlu0 %v1823
  %v1825 = vpop.xlane.xlu0 %1824
  %v1826 = vsub.f32 %v1804, %v1819
  %v1827 = vsub.f32 %v1809, %v1822
  %v1828 = vsub.f32 %v1814, %v1825
  %v1829 = vmul.f32 %v1826, 1.442695
  %v1830 = vpow.pop %v1829
  %v1831 = vmul.f32 %v1827, 1.442695
  %v1832 = vpow.pop %v1831
  %v1833 = vmul.f32 %v1828, 1.442695
  %v1834 = vpow.pop %v1833
  %v1835 = vsel %vm726, %v1830, 0.0
  %1836 = vadd.xlane.f32.xlu0 %v1835
  %v1837 = vpop.xlane.xlu0 %1836
  %v1838 = vsel %vm726, %v1832, 0.0
  %1839 = vadd.xlane.f32.xlu0 %v1838
  %v1840 = vpop.xlane.xlu0 %1839
  %v1841 = vsel %vm726, %v1834, 0.0
  %1842 = vadd.xlane.f32.xlu0 %v1841
  %v1843 = vpop.xlane.xlu0 %1842
  %v1844 = vrcp.pop %v1837
  %v1845 = vrcp.pop %v1840
  %v1846 = vrcp.pop %v1843
  %v1847 = vmul.f32 %v1830, %v1844
  %v1848 = vmul.f32 %v1832, %v1845
  %v1849 = vmul.f32 %v1834, %v1846
  %v1850 = vmul.f32 %v1596, %v42
  %v1851 = vmul.f32 %v1601, %v42
  %v1852 = vmul.f32 %v1606, %v42
  %v1854 = vsel %vm726, %v1847, 0
  %v1857 = vsel %vm726, %v1848, 0
  %v1860 = vsel %vm726, %v1849, 0
  %1862 = vmatprep.subr.mxu0 0.0
  %1863 = vmatpush1.msra.mxu0 0.0
  %1864 = vmatprep.subr.mxu0 0.0
  %1865 = vmatpush1.msra.mxu0 0.0
  %1866 = vmatprep.subr.mxu0 0.0
  %1867 = vmatpush1.msra.mxu0 0.0
  %1868 = vmatprep.subr.mxu0 0.0
  %1869 = vmatpush1.msra.mxu0 0.0
  %1870 = vmatprep.subr.mxu0 0.0
  %1871 = vmatpush1.msra.mxu0 0.0
  %1872 = vmatprep.subr.mxu0 0.0
  %1873 = vmatpush1.msra.mxu0 0.0
  %1874 = vmatprep.subr.mxu0 0.0
  %1875 = vmatpush1.msra.mxu0 0.0
  %1876 = vmatprep.subr.mxu0 0.0
  %1877 = vmatpush1.msra.mxu0 0.0
  %1878 = vmatprep.subr.mxu0 0.0
  %1879 = vmatpush1.msra.mxu0 0.0
  %1880 = vmatprep.subr.mxu0 0.0
  %1881 = vmatpush1.msra.mxu0 0.0
  %1882 = vmatprep.subr.mxu0 0.0
  %1883 = vmatpush1.msra.mxu0 0.0
  %1884 = vmatprep.subr.mxu0 0.0
  %1885 = vmatpush1.msra.mxu0 0.0
  %1886 = vmatprep.subr.mxu0 0.0
  %1887 = vmatpush1.msra.mxu0 0.0
  %1888 = vmatprep.subr.mxu0 0.0
  %1889 = vmatpush1.msra.mxu0 %v1852
  %1890 = vmatprep.subr.mxu0 0.0
  %1891 = vmatpush1.msra.mxu0 %v1851
  %1892 = vmatprep.subr.mxu0 0.0
  %1893 = vmatpush1.msra.mxu0 %v1850
  %1894 = vmatprep.subr.mxu0 0.0
  %1895 = vmatpush2.msra.mxu0 0.0
  %1896 = vmatprep.subr.mxu0 0.0
  %1897 = vmatpush2.msra.mxu0 0.0
  %1898 = vmatprep.subr.mxu0 0.0
  %1899 = vmatpush2.msra.mxu0 0.0
  %1900 = vmatprep.subr.mxu0 0.0
  %1901 = vmatpush2.msra.mxu0 0.0
  %1902 = vmatprep.subr.mxu0 0.0
  %1903 = vmatpush2.msra.mxu0 0.0
  %1904 = vmatprep.subr.mxu0 0.0
  %1905 = vmatpush2.msra.mxu0 0.0
  %1906 = vmatprep.subr.mxu0 0.0
  %1907 = vmatpush2.msra.mxu0 0.0
  %1908 = vmatprep.subr.mxu0 0.0
  %1909 = vmatpush2.msra.mxu0 0.0
  %1910 = vmatprep.subr.mxu0 0.0
  %1911 = vmatpush2.msra.mxu0 0.0
  %1912 = vmatprep.subr.mxu0 0.0
  %1913 = vmatpush2.msra.mxu0 0.0
  %1914 = vmatprep.subr.mxu0 0.0
  %1915 = vmatpush2.msra.mxu0 0.0
  %1916 = vmatprep.subr.mxu0 0.0
  %1917 = vmatpush2.msra.mxu0 0.0
  %1918 = vmatprep.subr.mxu0 0.0
  %1919 = vmatpush2.msra.mxu0 0.0
  %1920 = vmatprep.subr.mxu0 0.0
  %1921 = vmatpush2.msra.mxu0 0.0
  %1922 = vmatprep.subr.mxu0 0.0
  %1923 = vmatpush2.msra.mxu0 0.0
  %1924 = vmatprep.subr.mxu0 0.0
  %1925 = vmatpush2.msra.mxu0 0.0
  %1926 = vmatprep.mubr.f32.mxu0 0.0
  %1927 = vmatmul.mubr.f32.gmra.mxu0 %v1854
  %v1928 = vpop.f32.mrf.mxu0
  %v1929 = vadd.f32 0.0, %v1928
  %v1930 = vpop.f32.mrf.mxu0
  %1931 = vmatprep.mubr.f32.mxu0 0.0
  %1932 = vmatmul.mubr.f32.gmra.mxu0 %v1857
  %v1933 = vpop.f32.mrf.mxu0
  %v1934 = vadd.f32 0.0, %v1933
  %v1935 = vpop.f32.mrf.mxu0
  %1936 = vmatprep.mubr.f32.mxu0 0.0
  %1937 = vmatmul.mubr.f32.gmra.mxu0 %v1860
  %v1938 = vpop.f32.mrf.mxu0
  %v1939 = vadd.f32 0.0, %v1938
  %v1940 = vpop.f32.mrf.mxu0
  %1941 = vdwg.mxu0
  %v1943 = vsel %vm726, %v1728, 0
  %v1946 = vsel %vm726, %v1729, 0
  %v1949 = vsel %vm726, %v1730, 0
  %1951 = vmatprep.subr.mxu0 0.0
  %1952 = vmatpush1.msra.mxu0 0.0
  %1953 = vmatprep.subr.mxu0 0.0
  %1954 = vmatpush1.msra.mxu0 0.0
  %1955 = vmatprep.subr.mxu0 0.0
  %1956 = vmatpush1.msra.mxu0 0.0
  %1957 = vmatprep.subr.mxu0 0.0
  %1958 = vmatpush1.msra.mxu0 0.0
  %1959 = vmatprep.subr.mxu0 0.0
  %1960 = vmatpush1.msra.mxu0 0.0
  %1961 = vmatprep.subr.mxu0 0.0
  %1962 = vmatpush1.msra.mxu0 0.0
  %1963 = vmatprep.subr.mxu0 0.0
  %1964 = vmatpush1.msra.mxu0 0.0
  %1965 = vmatprep.subr.mxu0 0.0
  %1966 = vmatpush1.msra.mxu0 0.0
  %1967 = vmatprep.subr.mxu0 0.0
  %1968 = vmatpush1.msra.mxu0 0.0
  %1969 = vmatprep.subr.mxu0 0.0
  %1970 = vmatpush1.msra.mxu0 0.0
  %1971 = vmatprep.subr.mxu0 0.0
  %1972 = vmatpush1.msra.mxu0 0.0
  %1973 = vmatprep.subr.mxu0 0.0
  %1974 = vmatpush1.msra.mxu0 0.0
  %1975 = vmatprep.subr.mxu0 0.0
  %1976 = vmatpush1.msra.mxu0 0.0
  %1977 = vmatprep.subr.mxu0 0.0
  %1978 = vmatpush1.msra.mxu0 %v1733
  %1979 = vmatprep.subr.mxu0 0.0
  %1980 = vmatpush1.msra.mxu0 %v1732
  %1981 = vmatprep.subr.mxu0 0.0
  %1982 = vmatpush1.msra.mxu0 %v1731
  %1983 = vmatprep.subr.mxu0 0.0
  %1984 = vmatpush2.msra.mxu0 0.0
  %1985 = vmatprep.subr.mxu0 0.0
  %1986 = vmatpush2.msra.mxu0 0.0
  %1987 = vmatprep.subr.mxu0 0.0
  %1988 = vmatpush2.msra.mxu0 0.0
  %1989 = vmatprep.subr.mxu0 0.0
  %1990 = vmatpush2.msra.mxu0 0.0
  %1991 = vmatprep.subr.mxu0 0.0
  %1992 = vmatpush2.msra.mxu0 0.0
  %1993 = vmatprep.subr.mxu0 0.0
  %1994 = vmatpush2.msra.mxu0 0.0
  %1995 = vmatprep.subr.mxu0 0.0
  %1996 = vmatpush2.msra.mxu0 0.0
  %1997 = vmatprep.subr.mxu0 0.0
  %1998 = vmatpush2.msra.mxu0 0.0
  %1999 = vmatprep.subr.mxu0 0.0
  %2000 = vmatpush2.msra.mxu0 0.0
  %2001 = vmatprep.subr.mxu0 0.0
  %2002 = vmatpush2.msra.mxu0 0.0
  %2003 = vmatprep.subr.mxu0 0.0
  %2004 = vmatpush2.msra.mxu0 0.0
  %2005 = vmatprep.subr.mxu0 0.0
  %2006 = vmatpush2.msra.mxu0 0.0
  %2007 = vmatprep.subr.mxu0 0.0
  %2008 = vmatpush2.msra.mxu0 0.0
  %2009 = vmatprep.subr.mxu0 0.0
  %2010 = vmatpush2.msra.mxu0 0.0
  %2011 = vmatprep.subr.mxu0 0.0
  %2012 = vmatpush2.msra.mxu0 0.0
  %2013 = vmatprep.subr.mxu0 0.0
  %2014 = vmatpush2.msra.mxu0 0.0
  %2015 = vmatprep.mubr.f32.mxu0 0.0
  %2016 = vmatmul.mubr.f32.gmra.mxu0 %v1943
  %v2017 = vpop.f32.mrf.mxu0
  %v2018 = vadd.f32 %v1929, %v2017
  %v2019 = vpop.f32.mrf.mxu0
  %2020 = vmatprep.mubr.f32.mxu0 0.0
  %2021 = vmatmul.mubr.f32.gmra.mxu0 %v1946
  %v2022 = vpop.f32.mrf.mxu0
  %v2023 = vadd.f32 %v1934, %v2022
  %v2024 = vpop.f32.mrf.mxu0
  %2025 = vmatprep.mubr.f32.mxu0 0.0
  %2026 = vmatmul.mubr.f32.gmra.mxu0 %v1949
  %v2027 = vpop.f32.mrf.mxu0
  %v2028 = vadd.f32 %v1939, %v2027
  %v2029 = vpop.f32.mrf.mxu0
  %2030 = vdwg.mxu0
  %s2031 = scalar_lea.vmem %s2, 640
  %v2032 = vld [vmem:[%s2031] sm:$0xff]
  %v2033 = vld [vmem:[%s2031 + $0x8] sm:$0xff]
  %v2034 = vld [vmem:[%s2031 + $0x10] sm:$0xff]
  %v2035 = vld [vmem:[%s2031 + $0x18] sm:$0xff]
  %v2036 = vld [vmem:[%s2031 + $0x20] sm:$0xff]
  %v2037 = vld [vmem:[%s2031 + $0x28] sm:$0xff]
  %v2038 = vld [vmem:[%s2031 + $0x30] sm:$0xff]
  %v2039 = vld [vmem:[%s2031 + $0x38] sm:$0xff]
  %v2040 = vld [vmem:[%s2031 + $0x40] sm:$0xff]
  %v2041 = vld [vmem:[%s2031 + $0x48] sm:$0xff]
  %v2042 = vld [vmem:[%s2031 + $0x50] sm:$0xff]
  %v2043 = vld [vmem:[%s2031 + $0x58] sm:$0xff]
  %v2044 = vld [vmem:[%s2031 + $0x60] sm:$0xff]
  %v2045 = vld [vmem:[%s2031 + $0x68] sm:$0xff]
  %v2046 = vld [vmem:[%s2031 + $0x70] sm:$0xff]
  %v2047 = vld [vmem:[%s2031 + $0x78] sm:$0xff]
  %v2048 = vld [vmem:[%s3 + $0xe] sm:$0x1]
  %v2049 = vld [vmem:[%s3 + $0xd] sm:$0x1]
  %v2050 = vlaneseq
  %v2051 = vshrl.u32 %v2050, 7
  %v2052 = vsub.s32 0, %v2051
  %v2053 = vrot.slane %v2049, %v2052
  %2054 = vmatprep.subr.mxu0 0.0
  %2055 = vmatpush1.msra.mxu0 %v2047
  %2056 = vmatprep.subr.mxu0 0.0
  %2057 = vmatpush1.msra.mxu0 %v2046
  %2058 = vmatprep.subr.mxu0 0.0
  %2059 = vmatpush1.msra.mxu0 %v2045
  %2060 = vmatprep.subr.mxu0 0.0
  %2061 = vmatpush1.msra.mxu0 %v2044
  %2062 = vmatprep.subr.mxu0 0.0
  %2063 = vmatpush1.msra.mxu0 %v2043
  %2064 = vmatprep.subr.mxu0 0.0
  %2065 = vmatpush1.msra.mxu0 %v2042
  %2066 = vmatprep.subr.mxu0 0.0
  %2067 = vmatpush1.msra.mxu0 %v2041
  %2068 = vmatprep.subr.mxu0 0.0
  %2069 = vmatpush1.msra.mxu0 %v2040
  %2070 = vmatprep.subr.mxu0 0.0
  %2071 = vmatpush1.msra.mxu0 %v2039
  %2072 = vmatprep.subr.mxu0 0.0
  %2073 = vmatpush1.msra.mxu0 %v2038
  %2074 = vmatprep.subr.mxu0 0.0
  %2075 = vmatpush1.msra.mxu0 %v2037
  %2076 = vmatprep.subr.mxu0 0.0
  %2077 = vmatpush1.msra.mxu0 %v2036
  %2078 = vmatprep.subr.mxu0 0.0
  %2079 = vmatpush1.msra.mxu0 %v2035
  %2080 = vmatprep.subr.mxu0 0.0
  %2081 = vmatpush1.msra.mxu0 %v2034
  %2082 = vmatprep.subr.mxu0 0.0
  %2083 = vmatpush1.msra.mxu0 %v2033
  %2084 = vmatprep.subr.mxu0 0.0
  %2085 = vmatpush1.msra.mxu0 %v2032
  %2086 = vmatprep.subr.mxu0 0.0
  %2087 = vmatpush2.msra.mxu0 0.0
  %2088 = vmatprep.subr.mxu0 0.0
  %2089 = vmatpush2.msra.mxu0 0.0
  %2090 = vmatprep.subr.mxu0 0.0
  %2091 = vmatpush2.msra.mxu0 0.0
  %2092 = vmatprep.subr.mxu0 0.0
  %2093 = vmatpush2.msra.mxu0 0.0
  %2094 = vmatprep.subr.mxu0 0.0
  %2095 = vmatpush2.msra.mxu0 0.0
  %2096 = vmatprep.subr.mxu0 0.0
  %2097 = vmatpush2.msra.mxu0 0.0
  %2098 = vmatprep.subr.mxu0 0.0
  %2099 = vmatpush2.msra.mxu0 0.0
  %2100 = vmatprep.subr.mxu0 0.0
  %2101 = vmatpush2.msra.mxu0 0.0
  %2102 = vmatprep.subr.mxu0 0.0
  %2103 = vmatpush2.msra.mxu0 0.0
  %2104 = vmatprep.subr.mxu0 0.0
  %2105 = vmatpush2.msra.mxu0 0.0
  %2106 = vmatprep.subr.mxu0 0.0
  %2107 = vmatpush2.msra.mxu0 0.0
  %2108 = vmatprep.subr.mxu0 0.0
  %2109 = vmatpush2.msra.mxu0 0.0
  %2110 = vmatprep.subr.mxu0 0.0
  %2111 = vmatpush2.msra.mxu0 0.0
  %2112 = vmatprep.subr.mxu0 0.0
  %2113 = vmatpush2.msra.mxu0 0.0
  %2114 = vmatprep.subr.mxu0 0.0
  %2115 = vmatpush2.msra.mxu0 0.0
  %2116 = vmatprep.subr.mxu0 0.0
  %2117 = vmatpush2.msra.mxu0 0.0
  %2118 = vmatprep.mubr.f32.mxu0 0.0
  %2119 = vmatmul.mubr.f32.gmra.mxu0 %v2018
  %v2120 = vpop.f32.mrf.mxu0
  %v2121 = vadd.f32 %v2053, %v2120
  %v2122 = vpop.f32.mrf.mxu0
  %2123 = vmatprep.mubr.f32.mxu0 0.0
  %2124 = vmatmul.mubr.f32.gmra.mxu0 %v2023
  %v2125 = vpop.f32.mrf.mxu0
  %v2126 = vadd.f32 %v2053, %v2125
  %v2127 = vpop.f32.mrf.mxu0
  %2128 = vmatprep.mubr.f32.mxu0 0.0
  %2129 = vmatmul.mubr.f32.gmra.mxu0 %v2028
  %v2130 = vpop.f32.mrf.mxu0
  %v2131 = vadd.f32 %v2053, %v2130
  %v2132 = vpop.f32.mrf.mxu0
  %2133 = vdwg.mxu0
  %v2134 = vlaneseq
  %v2135 = vshrl.u32 %v2134, 7
  %v2136 = vsub.s32 0, %v2135
  %v2137 = vrot.slane %v2048, %v2136
  %v2138 = vmul.f32 %v2137, %v2121
  %v2139 = vmul.f32 %v2137, %v2126
  %v2140 = vmul.f32 %v2137, %v2131
  %v2141 = vadd.f32 %v1452, %v2138
  %v2142 = vadd.f32 %v1453, %v2139
  %v2143 = vadd.f32 %v1454, %v2140
  %v2144 = vld [vmem:[%s3 + $0xf] sm:$0x1]
  %v2145 = vld [vmem:[%s3 + $0x10] sm:$0x1]
  %2146 = vadd.xlane.f32.xlu0 %v2141
  %v2147 = vpop.xlane.xlu0 %2146
  %2148 = vadd.xlane.f32.xlu0 %v2142
  %v2149 = vpop.xlane.xlu0 %2148
  %2150 = vadd.xlane.f32.xlu0 %v2143
  %v2151 = vpop.xlane.xlu0 %2150
  %v2152 = vmul.f32 %v2147, 0.03125
  %v2153 = vmul.f32 %v2149, 0.03125
  %v2154 = vmul.f32 %v2151, 0.03125
  %v2155 = vsub.f32 %v2141, %v2152
  %v2156 = vsub.f32 %v2142, %v2153
  %v2157 = vsub.f32 %v2143, %v2154
  %v2158 = vmul.f32 %v2155, %v23
  %v2159 = vmul.f32 %v2156, %v23
  %v2160 = vmul.f32 %v2157, %v23
  %v2161 = vmul.f32 %v2158, %v2158
  %v2162 = vmul.f32 %v2159, %v2159
  %v2163 = vmul.f32 %v2160, %v2160
  %2164 = vadd.xlane.f32.xlu0 %v2161
  %v2165 = vpop.xlane.xlu0 %2164
  %2166 = vadd.xlane.f32.xlu0 %v2162
  %v2167 = vpop.xlane.xlu0 %2166
  %2168 = vadd.xlane.f32.xlu0 %v2163
  %v2169 = vpop.xlane.xlu0 %2168
  %v2170 = vmul.f32 %v2165, 0.03125
  %v2171 = vmul.f32 %v2167, 0.03125
  %v2172 = vmul.f32 %v2169, 0.03125
  %v2173 = vadd.f32 %v2170, 1e-06
  %v2174 = vadd.f32 %v2171, 1e-06
  %v2175 = vadd.f32 %v2172, 1e-06
  %v2176 = vrsqrt.pop %v2173
  %v2177 = vrsqrt.pop %v2174
  %v2178 = vrsqrt.pop %v2175
  %v2179 = vmul.f32 %v2158, %v2176
  %v2180 = vmul.f32 %v2159, %v2177
  %v2181 = vmul.f32 %v2160, %v2178
  %v2182 = vlaneseq
  %v2183 = vshrl.u32 %v2182, 7
  %v2184 = vsub.s32 0, %v2183
  %v2185 = vrot.slane %v2144, %v2184
  %v2186 = vmul.f32 %v2179, %v2185
  %v2187 = vmul.f32 %v2180, %v2185
  %v2188 = vmul.f32 %v2181, %v2185
  %v2189 = vlaneseq
  %v2190 = vshrl.u32 %v2189, 7
  %v2191 = vsub.s32 0, %v2190
  %v2192 = vrot.slane %v2145, %v2191
  %v2193 = vadd.f32 %v2186, %v2192
  %v2194 = vadd.f32 %v2187, %v2192
  %v2195 = vadd.f32 %v2188, %v2192
  %s2196 = scalar_lea.vmem %s2, 768
  %v2197 = vld [vmem:[%s2196] sm:$0xff]
  %v2198 = vld [vmem:[%s2196 + $0x8] sm:$0xff]
  %v2199 = vld [vmem:[%s2196 + $0x10] sm:$0xff]
  %v2200 = vld [vmem:[%s2196 + $0x18] sm:$0xff]
  %v2201 = vld [vmem:[%s2196 + $0x20] sm:$0xff]
  %v2202 = vld [vmem:[%s2196 + $0x28] sm:$0xff]
  %v2203 = vld [vmem:[%s2196 + $0x30] sm:$0xff]
  %v2204 = vld [vmem:[%s2196 + $0x38] sm:$0xff]
  %v2205 = vld [vmem:[%s2196 + $0x40] sm:$0xff]
  %v2206 = vld [vmem:[%s2196 + $0x48] sm:$0xff]
  %v2207 = vld [vmem:[%s2196 + $0x50] sm:$0xff]
  %v2208 = vld [vmem:[%s2196 + $0x58] sm:$0xff]
  %v2209 = vld [vmem:[%s2196 + $0x60] sm:$0xff]
  %v2210 = vld [vmem:[%s2196 + $0x68] sm:$0xff]
  %v2211 = vld [vmem:[%s2196 + $0x70] sm:$0xff]
  %v2212 = vld [vmem:[%s2196 + $0x78] sm:$0xff]
  %v2213 = vld [vmem:[%s3 + $0x11] sm:$0x1]
  %v2214 = vlaneseq
  %v2215 = vshrl.u32 %v2214, 7
  %v2216 = vsub.s32 0, %v2215
  %v2217 = vrot.slane %v2213, %v2216
  %2218 = vmatprep.subr.mxu0 0.0
  %2219 = vmatpush1.msra.mxu0 %v2212
  %2220 = vmatprep.subr.mxu0 0.0
  %2221 = vmatpush1.msra.mxu0 %v2211
  %2222 = vmatprep.subr.mxu0 0.0
  %2223 = vmatpush1.msra.mxu0 %v2210
  %2224 = vmatprep.subr.mxu0 0.0
  %2225 = vmatpush1.msra.mxu0 %v2209
  %2226 = vmatprep.subr.mxu0 0.0
  %2227 = vmatpush1.msra.mxu0 %v2208
  %2228 = vmatprep.subr.mxu0 0.0
  %2229 = vmatpush1.msra.mxu0 %v2207
  %2230 = vmatprep.subr.mxu0 0.0
  %2231 = vmatpush1.msra.mxu0 %v2206
  %2232 = vmatprep.subr.mxu0 0.0
  %2233 = vmatpush1.msra.mxu0 %v2205
  %2234 = vmatprep.subr.mxu0 0.0
  %2235 = vmatpush1.msra.mxu0 %v2204
  %2236 = vmatprep.subr.mxu0 0.0
  %2237 = vmatpush1.msra.mxu0 %v2203
  %2238 = vmatprep.subr.mxu0 0.0
  %2239 = vmatpush1.msra.mxu0 %v2202
  %2240 = vmatprep.subr.mxu0 0.0
  %2241 = vmatpush1.msra.mxu0 %v2201
  %2242 = vmatprep.subr.mxu0 0.0
  %2243 = vmatpush1.msra.mxu0 %v2200
  %2244 = vmatprep.subr.mxu0 0.0
  %2245 = vmatpush1.msra.mxu0 %v2199
  %2246 = vmatprep.subr.mxu0 0.0
  %2247 = vmatpush1.msra.mxu0 %v2198
  %2248 = vmatprep.subr.mxu0 0.0
  %2249 = vmatpush1.msra.mxu0 %v2197
  %2250 = vmatprep.subr.mxu0 0.0
  %2251 = vmatpush2.msra.mxu0 0.0
  %2252 = vmatprep.subr.mxu0 0.0
  %2253 = vmatpush2.msra.mxu0 0.0
  %2254 = vmatprep.subr.mxu0 0.0
  %2255 = vmatpush2.msra.mxu0 0.0
  %2256 = vmatprep.subr.mxu0 0.0
  %2257 = vmatpush2.msra.mxu0 0.0
  %2258 = vmatprep.subr.mxu0 0.0
  %2259 = vmatpush2.msra.mxu0 0.0
  %2260 = vmatprep.subr.mxu0 0.0
  %2261 = vmatpush2.msra.mxu0 0.0
  %2262 = vmatprep.subr.mxu0 0.0
  %2263 = vmatpush2.msra.mxu0 0.0
  %2264 = vmatprep.subr.mxu0 0.0
  %2265 = vmatpush2.msra.mxu0 0.0
  %2266 = vmatprep.subr.mxu0 0.0
  %2267 = vmatpush2.msra.mxu0 0.0
  %2268 = vmatprep.subr.mxu0 0.0
  %2269 = vmatpush2.msra.mxu0 0.0
  %2270 = vmatprep.subr.mxu0 0.0
  %2271 = vmatpush2.msra.mxu0 0.0
  %2272 = vmatprep.subr.mxu0 0.0
  %2273 = vmatpush2.msra.mxu0 0.0
  %2274 = vmatprep.subr.mxu0 0.0
  %2275 = vmatpush2.msra.mxu0 0.0
  %2276 = vmatprep.subr.mxu0 0.0
  %2277 = vmatpush2.msra.mxu0 0.0
  %2278 = vmatprep.subr.mxu0 0.0
  %2279 = vmatpush2.msra.mxu0 0.0
  %2280 = vmatprep.subr.mxu0 0.0
  %2281 = vmatpush2.msra.mxu0 0.0
  %2282 = vmatprep.mubr.f32.mxu0 0.0
  %2283 = vmatmul.mubr.f32.gmra.mxu0 %v2193
  %v2284 = vpop.f32.mrf.mxu0
  %v2285 = vadd.f32 %v2217, %v2284
  %v2286 = vpop.f32.mrf.mxu0
  %2287 = vmatprep.mubr.f32.mxu0 0.0
  %2288 = vmatmul.mubr.f32.gmra.mxu0 %v2194
  %v2289 = vpop.f32.mrf.mxu0
  %v2290 = vadd.f32 %v2217, %v2289
  %v2291 = vpop.f32.mrf.mxu0
  %2292 = vmatprep.mubr.f32.mxu0 0.0
  %2293 = vmatmul.mubr.f32.gmra.mxu0 %v2195
  %v2294 = vpop.f32.mrf.mxu0
  %v2295 = vadd.f32 %v2217, %v2294
  %v2296 = vpop.f32.mrf.mxu0
  %2297 = vdwg.mxu0
  %v2298 = vmul.f32 %v2285, 0.5
  %v2299 = vmul.f32 %v2290, 0.5
  %v2300 = vmul.f32 %v2295, 0.5
  %v2301 = vmul.f32 %v2285, 0.70710677
  %v2302 = vmul.f32 %v2290, 0.70710677
  %v2303 = vmul.f32 %v2295, 0.70710677
  %v2304 = verf.f32.pop %v2301
  %v2305 = verf.f32.pop %v2302
  %v2306 = verf.f32.pop %v2303
  %v2307 = vadd.f32 %v2304, 1.0
  %v2308 = vadd.f32 %v2305, 1.0
  %v2309 = vadd.f32 %v2306, 1.0
  %v2310 = vmul.f32 %v2298, %v2307
  %v2311 = vmul.f32 %v2299, %v2308
  %v2312 = vmul.f32 %v2300, %v2309
  %s2313 = scalar_lea.vmem %s2, 896
  %v2314 = vld [vmem:[%s2313] sm:$0xff]
  %v2315 = vld [vmem:[%s2313 + $0x8] sm:$0xff]
  %v2316 = vld [vmem:[%s2313 + $0x10] sm:$0xff]
  %v2317 = vld [vmem:[%s2313 + $0x18] sm:$0xff]
  %v2318 = vld [vmem:[%s2313 + $0x20] sm:$0xff]
  %v2319 = vld [vmem:[%s2313 + $0x28] sm:$0xff]
  %v2320 = vld [vmem:[%s2313 + $0x30] sm:$0xff]
  %v2321 = vld [vmem:[%s2313 + $0x38] sm:$0xff]
  %v2322 = vld [vmem:[%s2313 + $0x40] sm:$0xff]
  %v2323 = vld [vmem:[%s2313 + $0x48] sm:$0xff]
  %v2324 = vld [vmem:[%s2313 + $0x50] sm:$0xff]
  %v2325 = vld [vmem:[%s2313 + $0x58] sm:$0xff]
  %v2326 = vld [vmem:[%s2313 + $0x60] sm:$0xff]
  %v2327 = vld [vmem:[%s2313 + $0x68] sm:$0xff]
  %v2328 = vld [vmem:[%s2313 + $0x70] sm:$0xff]
  %v2329 = vld [vmem:[%s2313 + $0x78] sm:$0xff]
  %v2330 = vld [vmem:[%s3 + $0x12] sm:$0x1]
  %v2331 = vlaneseq
  %v2332 = vshrl.u32 %v2331, 7
  %v2333 = vsub.s32 0, %v2332
  %v2334 = vrot.slane %v2330, %v2333
  %2335 = vmatprep.subr.mxu0 0.0
  %2336 = vmatpush1.msra.mxu0 %v2329
  %2337 = vmatprep.subr.mxu0 0.0
  %2338 = vmatpush1.msra.mxu0 %v2328
  %2339 = vmatprep.subr.mxu0 0.0
  %2340 = vmatpush1.msra.mxu0 %v2327
  %2341 = vmatprep.subr.mxu0 0.0
  %2342 = vmatpush1.msra.mxu0 %v2326
  %2343 = vmatprep.subr.mxu0 0.0
  %2344 = vmatpush1.msra.mxu0 %v2325
  %2345 = vmatprep.subr.mxu0 0.0
  %2346 = vmatpush1.msra.mxu0 %v2324
  %2347 = vmatprep.subr.mxu0 0.0
  %2348 = vmatpush1.msra.mxu0 %v2323
  %2349 = vmatprep.subr.mxu0 0.0
  %2350 = vmatpush1.msra.mxu0 %v2322
  %2351 = vmatprep.subr.mxu0 0.0
  %2352 = vmatpush1.msra.mxu0 %v2321
  %2353 = vmatprep.subr.mxu0 0.0
  %2354 = vmatpush1.msra.mxu0 %v2320
  %2355 = vmatprep.subr.mxu0 0.0
  %2356 = vmatpush1.msra.mxu0 %v2319
  %2357 = vmatprep.subr.mxu0 0.0
  %2358 = vmatpush1.msra.mxu0 %v2318
  %2359 = vmatprep.subr.mxu0 0.0
  %2360 = vmatpush1.msra.mxu0 %v2317
  %2361 = vmatprep.subr.mxu0 0.0
  %2362 = vmatpush1.msra.mxu0 %v2316
  %2363 = vmatprep.subr.mxu0 0.0
  %2364 = vmatpush1.msra.mxu0 %v2315
  %2365 = vmatprep.subr.mxu0 0.0
  %2366 = vmatpush1.msra.mxu0 %v2314
  %2367 = vmatprep.subr.mxu0 0.0
  %2368 = vmatpush2.msra.mxu0 0.0
  %2369 = vmatprep.subr.mxu0 0.0
  %2370 = vmatpush2.msra.mxu0 0.0
  %2371 = vmatprep.subr.mxu0 0.0
  %2372 = vmatpush2.msra.mxu0 0.0
  %2373 = vmatprep.subr.mxu0 0.0
  %2374 = vmatpush2.msra.mxu0 0.0
  %2375 = vmatprep.subr.mxu0 0.0
  %2376 = vmatpush2.msra.mxu0 0.0
  %2377 = vmatprep.subr.mxu0 0.0
  %2378 = vmatpush2.msra.mxu0 0.0
  %2379 = vmatprep.subr.mxu0 0.0
  %2380 = vmatpush2.msra.mxu0 0.0
  %2381 = vmatprep.subr.mxu0 0.0
  %2382 = vmatpush2.msra.mxu0 0.0
  %2383 = vmatprep.subr.mxu0 0.0
  %2384 = vmatpush2.msra.mxu0 0.0
  %2385 = vmatprep.subr.mxu0 0.0
  %2386 = vmatpush2.msra.mxu0 0.0
  %2387 = vmatprep.subr.mxu0 0.0
  %2388 = vmatpush2.msra.mxu0 0.0
  %2389 = vmatprep.subr.mxu0 0.0
  %2390 = vmatpush2.msra.mxu0 0.0
  %2391 = vmatprep.subr.mxu0 0.0
  %2392 = vmatpush2.msra.mxu0 0.0
  %2393 = vmatprep.subr.mxu0 0.0
  %2394 = vmatpush2.msra.mxu0 0.0
  %2395 = vmatprep.subr.mxu0 0.0
  %2396 = vmatpush2.msra.mxu0 0.0
  %2397 = vmatprep.subr.mxu0 0.0
  %2398 = vmatpush2.msra.mxu0 0.0
  %2399 = vmatprep.mubr.f32.mxu0 0.0
  %2400 = vmatmul.mubr.f32.gmra.mxu0 %v2310
  %v2401 = vpop.f32.mrf.mxu0
  %v2402 = vadd.f32 %v2334, %v2401
  %v2403 = vpop.f32.mrf.mxu0
  %2404 = vmatprep.mubr.f32.mxu0 0.0
  %2405 = vmatmul.mubr.f32.gmra.mxu0 %v2311
  %v2406 = vpop.f32.mrf.mxu0
  %v2407 = vadd.f32 %v2334, %v2406
  %v2408 = vpop.f32.mrf.mxu0
  %2409 = vmatprep.mubr.f32.mxu0 0.0
  %2410 = vmatmul.mubr.f32.gmra.mxu0 %v2312
  %v2411 = vpop.f32.mrf.mxu0
  %v2412 = vadd.f32 %v2334, %v2411
  %v2413 = vpop.f32.mrf.mxu0
  %2414 = vdwg.mxu0
  %v2415 = vld [vmem:[%s3 + $0x13] sm:$0x1]
  %v2416 = vlaneseq
  %v2417 = vshrl.u32 %v2416, 7
  %v2418 = vsub.s32 0, %v2417
  %v2419 = vrot.slane %v2415, %v2418
  %v2420 = vmul.f32 %v2419, %v2402
  %v2421 = vmul.f32 %v2419, %v2407
  %v2422 = vmul.f32 %v2419, %v2412
  %v2423 = vadd.f32 %v2141, %v2420
  %v2424 = vadd.f32 %v2142, %v2421
  %v2425 = vadd.f32 %v2143, %v2422
  %2426 = vst [vmem:[%s4] sm:$0xff] %v2423
  %2427 = vst [vmem:[%s4 + $0x8] sm:$0xff] %v2424
  %2428 = vst [vmem:[%s4 + $0x10] sm:$0xff] %v2425
  %v2429 = vld [vmem:[%s3 + $0x14] sm:$0x1]
  %v2430 = vld [vmem:[%s3 + $0x15] sm:$0x1]
  %2431 = vadd.xlane.f32.xlu0 %v2423
  %v2432 = vpop.xlane.xlu0 %2431
  %2433 = vadd.xlane.f32.xlu0 %v2424
  %v2434 = vpop.xlane.xlu0 %2433
  %2435 = vadd.xlane.f32.xlu0 %v2425
  %v2436 = vpop.xlane.xlu0 %2435
  %v2437 = vmul.f32 %v2432, 0.03125
  %v2438 = vmul.f32 %v2434, 0.03125
  %v2439 = vmul.f32 %v2436, 0.03125
  %v2440 = vsub.f32 %v2423, %v2437
  %v2441 = vsub.f32 %v2424, %v2438
  %v2442 = vsub.f32 %v2425, %v2439
  %v2443 = vmul.f32 %v2440, %v23
  %v2444 = vmul.f32 %v2441, %v23
  %v2445 = vmul.f32 %v2442, %v23
  %v2446 = vmul.f32 %v2443, %v2443
  %v2447 = vmul.f32 %v2444, %v2444
  %v2448 = vmul.f32 %v2445, %v2445
  %2449 = vadd.xlane.f32.xlu0 %v2446
  %v2450 = vpop.xlane.xlu0 %2449
  %2451 = vadd.xlane.f32.xlu0 %v2447
  %v2452 = vpop.xlane.xlu0 %2451
  %2453 = vadd.xlane.f32.xlu0 %v2448
  %v2454 = vpop.xlane.xlu0 %2453
  %v2455 = vmul.f32 %v2450, 0.03125
  %v2456 = vmul.f32 %v2452, 0.03125
  %v2457 = vmul.f32 %v2454, 0.03125
  %v2458 = vadd.f32 %v2455, 1e-06
  %v2459 = vadd.f32 %v2456, 1e-06
  %v2460 = vadd.f32 %v2457, 1e-06
  %v2461 = vrsqrt.pop %v2458
  %v2462 = vrsqrt.pop %v2459
  %v2463 = vrsqrt.pop %v2460
  %v2464 = vmul.f32 %v2443, %v2461
  %v2465 = vmul.f32 %v2444, %v2462
  %v2466 = vmul.f32 %v2445, %v2463
  %v2467 = vlaneseq
  %v2468 = vshrl.u32 %v2467, 7
  %v2469 = vsub.s32 0, %v2468
  %v2470 = vrot.slane %v2429, %v2469
  %v2471 = vmul.f32 %v2464, %v2470
  %v2472 = vmul.f32 %v2465, %v2470
  %v2473 = vmul.f32 %v2466, %v2470
  %v2474 = vlaneseq
  %v2475 = vshrl.u32 %v2474, 7
  %v2476 = vsub.s32 0, %v2475
  %v2477 = vrot.slane %v2430, %v2476
  %v2478 = vadd.f32 %v2471, %v2477
  %v2479 = vadd.f32 %v2472, %v2477
  %v2480 = vadd.f32 %v2473, %v2477
  %2481 = vst [vmem:[%s5] sm:$0xff] %v2478
  %2482 = vst [vmem:[%s5 + $0x8] sm:$0xff] %v2479
  %2483 = vst [vmem:[%s5 + $0x10] sm:$0xff] %v2480
  // Predicated region
  $region18: #{dinov2_forward.1} parent=0 // pred_check
    _
  $region19: #{dinov2_forward.1} parent=0 // pred_check_branch
    %2485 = sbr.rel (0) target = $region21
  $region20: #{dinov2_forward.1} parent=0 // pred_region
    _
  $region21: #{dinov2_forward.1} parent=0 // pred_fallthru
    _
  // Predicated region
  $region22: #{dinov2_forward.1} parent=0 // pred_check
    _
  $region23: #{dinov2_forward.1} parent=0 // pred_check_branch
    %2487 = sbr.rel (0) target = $region25
  $region24: #{dinov2_forward.1} parent=0 // pred_region
    _
  $region25: #{dinov2_forward.1} parent=0 // pred_fallthru
    _
  // Predicated region
  $region26: #{dinov2_forward.1} parent=0 // pred_check
    _
  $region27: #{dinov2_forward.1} parent=0 // pred_check_branch
    %2489 = sbr.rel (0) target = $region29
  $region28: #{dinov2_forward.1} parent=0 // pred_region
    _
  $region29: #{dinov2_forward.1} parent=0 // pred_fallthru
    _
  // Predicated region
  $region30: #{dinov2_forward.1} parent=0 // pred_check
    _
  $region31: #{dinov2_forward.1} parent=0 // pred_check_branch
    %2491 = sbr.rel (0) target = $region33
  $region32: #{dinov2_forward.1} parent=0 // pred_region
    _
  $region33: #{dinov2_forward.1} parent=0 // pred_fallthru
    _

</llo_original>
